<compile_context>
chip_gen: v7x
topology: tpu7x:2x2x1
jax: 0.10.0
libtpu: 0.0.40
codegen_flags: <defaults>
</compile_context>

<pallas_src>
import jax
import jax.numpy as jnp
from jax import lax
from jax.experimental import pallas as pl
from jax.experimental.pallas import tpu as pltpu  # noqa: F401  (kept for TPU-specific tuning hooks)

NEG_SLOPE = 0.2


def _lrelu(y):
    # == LeakyReLU(0.2) for finite inputs; cheaper than where(cmp, y, 0.2*y).
    return jnp.maximum(y, NEG_SLOPE * y)


def _conv1d_lrelu_vmem(x_val, w_ref, b_ref, stride):
    """Valid Conv1d + LeakyReLU on VMEM-resident data.

    x_val : (C_in, T_in) f32 value
    w_ref : (K, C_out, C_in) VMEM ref (tap-major layout)
    b_ref : (C_out, 1) VMEM ref
    stride: static python int
    """
    K = w_ref.shape[0]
    T_in = x_val.shape[-1]
    T_full = T_in - K + 1                       # stride-1 output length
    acc = jnp.dot(w_ref[0], x_val[:, 0:T_full],
                  preferred_element_type=jnp.float32)
    for k in range(1, K):
        acc = acc + jnp.dot(w_ref[k], x_val[:, k:k + T_full],
                            preferred_element_type=jnp.float32)
    if stride > 1:
        # Downsample columns via a 0/1 selection matmul (exact: picks col j*s).
        T_out = (T_in - K) // stride + 1
        rows = lax.broadcasted_iota(jnp.int32, (T_full, T_out), 0)
        cols = lax.broadcasted_iota(jnp.int32, (T_full, T_out), 1)
        sel = (rows == cols * stride).astype(jnp.float32)
        acc = jnp.dot(acc, sel, preferred_element_type=jnp.float32)
    return _lrelu(acc + b_ref[...])


def _make_jcu_kernel(B, strides_u, strides_c):
    n_u = len(strides_u)   # 5 unconditional convs
    n_c = len(strides_c)   # 2 conditional convs

    def kernel(*refs):
        p = 0
        x_ref = refs[p]; p += 1          # (B, C0, T)
        embt_ref = refs[p]; p += 1       # (E, B)  (embedding transposed)
        uw, ub = [], []
        for _ in range(n_u):
            uw.append(refs[p]); ub.append(refs[p + 1]); p += 2
        fcw_ref = refs[p]; fcb_ref = refs[p + 1]; p += 2
        cw, cb = [], []
        for _ in range(n_c):
            cw.append(refs[p]); cb.append(refs[p + 1]); p += 2
        uncond_o = refs[p]; cond_o = refs[p + 1]; p += 2
        fmap_refs = refs[p:p + n_u + n_c]   # 7 feature maps

        # FC + LeakyReLU for all batch elements in one MXU dot: (E_out, B).
        cond_all = _lrelu(
            jnp.dot(fcw_ref[...], embt_ref[...],
                    preferred_element_type=jnp.float32) + fcb_ref[...])

        for b in range(B):                # tiny static batch -> unrolled
            h = x_ref[b]                  # (C0, T) value, VMEM resident
            fm = []
            # unconditional convs 0..2 (conv + inplace LeakyReLU fused)
            for li in range(3):
                h = _conv1d_lrelu_vmem(h, uw[li], ub[li], strides_u[li])
                fm.append(h)
            x3 = h
            T3 = x3.shape[-1]
            E = cond_all.shape[0]
            # conditional branch: broadcast fc output along time and
            # concatenate on the TIME axis (dim=2 in the PyTorch reference).
            ccol = cond_all[:, b:b + 1]                       # (E, 1)
            c = jnp.concatenate(
                [x3, jnp.broadcast_to(ccol, (E, T3))], axis=1)  # (E, 2*T3)
            for li in range(n_c):
                c = _conv1d_lrelu_vmem(c, cw[li], cb[li], strides_c[li])
                fm.append(c)
            # unconditional convs 3..4 continue from x3
            u = x3
            for li in range(3, n_u):
                u = _conv1d_lrelu_vmem(u, uw[li], ub[li], strides_u[li])
                fm.append(u)

            # write this batch element's outputs (final convs have C_out == 1,
            # so the channel squeeze is done by dropping the size-1 row dim)
            uncond_o[pl.ds(b, 1), :] = u          # (1, T_u)
            cond_o[pl.ds(b, 1), :] = c            # (1, T_c)
            for fr, val in zip(fmap_refs, fm):
                fr[b] = val

    return kernel


# ----------------------------------------------------------------------------
# Host-side wrapper: flattens params, infers static output shapes, one call.
# ----------------------------------------------------------------------------
def jcu_forward(params, x, embedding):
    B, C0, T = x.shape
    strides_u = tuple(int(s) for s in params["strides_uncond"])
    strides_c = tuple(int(s) for s in params["strides_cond"])
    assert params["uncond"][-1][0].shape[0] == 1, "last uncond conv must have C_out==1"
    assert params["cond"][-1][0].shape[0] == 1, "last cond conv must have C_out==1"

    # ---- flatten parameters into kernel inputs ----
    inputs = [x.astype(jnp.float32), embedding.T.astype(jnp.float32)]

    def add_conv(w, b):
        # (C_out, C_in, K) -> tap-major (K, C_out, C_in); bias as (C_out, 1)
        inputs.append(jnp.transpose(w, (2, 0, 1)).astype(jnp.float32))
        inputs.append(b.reshape(-1, 1).astype(jnp.float32))

    for w, b in params["uncond"]:
        add_conv(w, b)
    fc_w, fc_b = params["fc"]
    inputs.append(fc_w.astype(jnp.float32))
    inputs.append(fc_b.reshape(-1, 1).astype(jnp.float32))
    for w, b in params["cond"]:
        add_conv(w, b)

    # ---- static shape inference (replays the module's dataflow) ----
    def conv_len(t, k, s):
        return (t - k) // s + 1

    uncond_ct = []
    t = T
    for (w, _), s in zip(params["uncond"], strides_u):
        c_out, _, k = w.shape
        t = conv_len(t, k, s)
        uncond_ct.append((c_out, t))
    T3 = uncond_ct[2][1]
    cond_ct = []
    tc = 2 * T3
    for (w, _), s in zip(params["cond"], strides_c):
        c_out, _, k = w.shape
        tc = conv_len(tc, k, s)
        cond_ct.append((c_out, tc))

    fmap_shapes = ([(B,) + uncond_ct[i] for i in range(3)]
                   + [(B,) + ct for ct in cond_ct]
                   + [(B,) + uncond_ct[i] for i in range(3, len(uncond_ct))])
    out_dims = [(B, uncond_ct[-1][1]), (B, cond_ct[-1][1])] + fmap_shapes
    out_shape = tuple(jax.ShapeDtypeStruct(s, jnp.float32) for s in out_dims)

    kernel = _make_jcu_kernel(B, strides_u, strides_c)
    # No grid: one invocation, all operands/results are whole-array VMEM blocks.
    outs = pl.pallas_call(kernel, out_shape=out_shape)(*inputs)
    return outs[0], outs[1], list(outs[2:])


# ----------------------------------------------------------------------------
# Pure-JAX reference (for correctness checking only)
# ----------------------------------------------------------------------------
def _conv1d_ref(x, w, b, stride):
    y = lax.conv_general_dilated(
        x, w, window_strides=(stride,), padding="VALID",
        dimension_numbers=("NCH", "OIH", "NCH"))
    return y + b.reshape(1, -1, 1)


def jcu_forward_ref(params, x, embedding):
    fmaps = []
    h = x
    for li in range(3):
        w, b = params["uncond"][li]
        h = _lrelu(_conv1d_ref(h, w, b, params["strides_uncond"][li]))
        fmaps.append(h)
    fc_w, fc_b = params["fc"]
    cond = _lrelu(embedding @ fc_w.T + fc_b)
    cond = jnp.tile(cond[:, :, None], (1, 1, h.shape[-1]))
    cond = jnp.concatenate([h, cond], axis=2)
    for li in range(len(params["cond"])):
        w, b = params["cond"][li]
        cond = _lrelu(_conv1d_ref(cond, w, b, params["strides_cond"][li]))
        fmaps.append(cond)
    u = h
    for li in range(3, len(params["uncond"])):
        w, b = params["uncond"][li]
        u = _lrelu(_conv1d_ref(u, w, b, params["strides_uncond"][li]))
        fmaps.append(u)
    return jnp.squeeze(u, 1), jnp.squeeze(cond, 1), fmaps


# ----------------------------------------------------------------------------
# Parameter init (deterministic, synthetic) with weight-norm parameterization
# (weight_norm is a reparameterization; effective weights are folded here).
# ----------------------------------------------------------------------------
def init_weightnorm_conv(key, c_out, c_in, k):
    k1, k2, k3 = jax.random.split(key, 3)
    v = jax.random.normal(k1, (c_out, c_in, k), dtype=jnp.float32) * 0.1
    g = jax.random.uniform(k2, (c_out,), minval=0.5, maxval=1.5, dtype=jnp.float32)
    norm = jnp.sqrt(jnp.sum(v * v, axis=(1, 2), keepdims=True)) + 1e-12
    w = g.reshape(-1, 1, 1) * v / norm
    b = jax.random.normal(k3, (c_out,), dtype=jnp.float32) * 0.01
    return w, b


def init_linear(key, e_out, e_in):
    k1, k2 = jax.random.split(key)
    w = jax.random.normal(k1, (e_out, e_in), dtype=jnp.float32) * 0.1
    b = jax.random.normal(k2, (e_out,), dtype=jnp.float32) * 0.01
    return w, b


def build_params(key, n_mel, emb_size, kernels, strides):
    params = {"uncond": [], "cond": [], "strides_uncond": [], "strides_cond": []}
    in_ch = n_mel
    keys = jax.random.split(key, 16)
    ki = 0
    for d, kern, stride in zip([8, 4, 1, 4, emb_size], kernels, strides):
        out_ch = int(emb_size / d)
        w, b = init_weightnorm_conv(keys[ki], out_ch, in_ch, kern)
        ki += 1
        params["uncond"].append((w, b))
        params["strides_uncond"].append(stride)
        in_ch = out_ch
    params["fc"] = init_linear(keys[ki], emb_size, emb_size)
    ki += 1
    in_ch = emb_size
    for d, kern, stride in zip([4, emb_size], kernels[3:], strides[3:]):
        out_ch = int(emb_size / d)
        w, b = init_weightnorm_conv(keys[ki], out_ch, in_ch, kern)
        ki += 1
        params["cond"].append((w, b))
        params["strides_cond"].append(stride)
        in_ch = out_ch
    return params


# ----------------------------------------------------------------------------
if __name__ == "__main__":
    n_mel_channels = 8
    emb_size_dis = 32
    kernels_d = [3, 3, 3, 3, 3]
    strides_d = [1, 2, 1, 1, 1]
    B, T = 2, 32

    key = jax.random.PRNGKey(0)
    k_p, k_x, k_e = jax.random.split(key, 3)
    params = build_params(k_p, n_mel_channels, emb_size_dis, kernels_d, strides_d)

    x = jax.random.normal(k_x, (B, n_mel_channels, T), dtype=jnp.float32)
    embedding = jax.random.normal(k_e, (B, emb_size_dis), dtype=jnp.float32)

    uncond_out, cond_out, fmaps = jcu_forward(params, x, embedding)
    jax.block_until_ready((uncond_out, cond_out, fmaps))

    # correctness check against a pure-JAX reference of the PyTorch module
    ref_u, ref_c, ref_f = jcu_forward_ref(params, x, embedding)
    assert uncond_out.shape == ref_u.shape and cond_out.shape == ref_c.shape
    assert len(fmaps) == 7 and len(ref_f) == 7
    assert bool(jnp.allclose(uncond_out, ref_u, atol=1e-3, rtol=1e-2))
    assert bool(jnp.allclose(cond_out, ref_c, atol=1e-3, rtol=1e-2))
    for got, want in zip(fmaps, ref_f):
        assert got.shape == want.shape
        assert bool(jnp.allclose(got, want, atol=1e-3, rtol=1e-2))

    print("KERNEL_OK")
</pallas_src>

<mosaic_0001>
module attributes {stable_mosaic.version = 11 : i64} {
  func.func @kernel(%arg0: memref<2x8x32xf32, #tpu.memory_space<vmem>>, %arg1: memref<32x2xf32, #tpu.memory_space<vmem>>, %arg2: memref<3x4x8xf32, #tpu.memory_space<vmem>>, %arg3: memref<4x1xf32, #tpu.memory_space<vmem>>, %arg4: memref<3x8x4xf32, #tpu.memory_space<vmem>>, %arg5: memref<8x1xf32, #tpu.memory_space<vmem>>, %arg6: memref<3x32x8xf32, #tpu.memory_space<vmem>>, %arg7: memref<32x1xf32, #tpu.memory_space<vmem>>, %arg8: memref<3x8x32xf32, #tpu.memory_space<vmem>>, %arg9: memref<8x1xf32, #tpu.memory_space<vmem>>, %arg10: memref<3x1x8xf32, #tpu.memory_space<vmem>>, %arg11: memref<1x1xf32, #tpu.memory_space<vmem>>, %arg12: memref<32x32xf32, #tpu.memory_space<vmem>>, %arg13: memref<32x1xf32, #tpu.memory_space<vmem>>, %arg14: memref<3x8x32xf32, #tpu.memory_space<vmem>>, %arg15: memref<8x1xf32, #tpu.memory_space<vmem>>, %arg16: memref<3x1x8xf32, #tpu.memory_space<vmem>>, %arg17: memref<1x1xf32, #tpu.memory_space<vmem>>, %arg18: memref<2x8xf32, #tpu.memory_space<vmem>>, %arg19: memref<2x20xf32, #tpu.memory_space<vmem>>, %arg20: memref<2x4x30xf32, #tpu.memory_space<vmem>>, %arg21: memref<2x8x14xf32, #tpu.memory_space<vmem>>, %arg22: memref<2x32x12xf32, #tpu.memory_space<vmem>>, %arg23: memref<2x8x22xf32, #tpu.memory_space<vmem>>, %arg24: memref<2x1x20xf32, #tpu.memory_space<vmem>>, %arg25: memref<2x8x10xf32, #tpu.memory_space<vmem>>, %arg26: memref<2x1x8xf32, #tpu.memory_space<vmem>>) attributes {dimension_semantics = [], scalar_prefetch = 0 : i64, scratch_operands = 0 : i64, tpu.core_type = #tpu.core_type<tc>} {
    %c0 = arith.constant 0 : index
    %c0_0 = arith.constant 0 : index
    %0 = vector.load %arg12[%c0, %c0_0] : memref<32x32xf32, #tpu.memory_space<vmem>>, vector<32x32xf32>
    %c0_1 = arith.constant 0 : index
    %c0_2 = arith.constant 0 : index
    %1 = vector.load %arg1[%c0_1, %c0_2] : memref<32x2xf32, #tpu.memory_space<vmem>>, vector<32x2xf32>
    %cst = arith.constant dense<0.000000e+00> : vector<32x2xf32>
    %2 = tpu.matmul %0, %1, %cst {dimension_numbers = #tpu.dot_dimension_numbers<[1], [0], [0], [1], [0, 0, 1, 1], [], []>} : vector<32x32xf32>, vector<32x2xf32>, vector<32x2xf32> -> vector<32x2xf32>
    %c0_3 = arith.constant 0 : index
    %c0_4 = arith.constant 0 : index
    %3 = vector.load %arg13[%c0_3, %c0_4] : memref<32x1xf32, #tpu.memory_space<vmem>>, vector<32x1xf32>
    %4 = vector.broadcast %3 : vector<32x1xf32> to vector<32x2xf32>
    %5 = arith.addf %2, %4 : vector<32x2xf32>
    %cst_5 = arith.constant 2.000000e-01 : f32
    %6 = vector.broadcast %cst_5 : f32 to vector<32x2xf32>
    %7 = arith.mulf %6, %5 : vector<32x2xf32>
    %8 = arith.maximumf %5, %7 : vector<32x2xf32>
    %c0_6 = arith.constant 0 : index
    %c0_7 = arith.constant 0 : index
    %c0_8 = arith.constant 0 : index
    %9 = vector.load %arg0[%c0_6, %c0_7, %c0_8] : memref<2x8x32xf32, #tpu.memory_space<vmem>>, vector<1x8x32xf32>
    %10 = vector.shape_cast %9 : vector<1x8x32xf32> to vector<8x32xf32>
    %c0_9 = arith.constant 0 : index
    %c0_10 = arith.constant 0 : index
    %c0_11 = arith.constant 0 : index
    %11 = vector.load %arg2[%c0_9, %c0_10, %c0_11] : memref<3x4x8xf32, #tpu.memory_space<vmem>>, vector<1x4x8xf32>
    %12 = vector.shape_cast %11 : vector<1x4x8xf32> to vector<4x8xf32>
    %13 = vector.extract_strided_slice %10 {offsets = [0, 0], sizes = [8, 30], strides = [1, 1]} : vector<8x32xf32> to vector<8x30xf32>
    %cst_12 = arith.constant dense<0.000000e+00> : vector<4x30xf32>
    %14 = tpu.matmul %12, %13, %cst_12 {dimension_numbers = #tpu.dot_dimension_numbers<[1], [0], [0], [1], [0, 0, 1, 1], [], []>} : vector<4x8xf32>, vector<8x30xf32>, vector<4x30xf32> -> vector<4x30xf32>
    %c1 = arith.constant 1 : index
    %c0_13 = arith.constant 0 : index
    %c0_14 = arith.constant 0 : index
    %15 = vector.load %arg2[%c1, %c0_13, %c0_14] : memref<3x4x8xf32, #tpu.memory_space<vmem>>, vector<1x4x8xf32>
    %16 = vector.shape_cast %15 : vector<1x4x8xf32> to vector<4x8xf32>
    %17 = vector.extract_strided_slice %10 {offsets = [0, 1], sizes = [8, 30], strides = [1, 1]} : vector<8x32xf32> to vector<8x30xf32>
    %cst_15 = arith.constant dense<0.000000e+00> : vector<4x30xf32>
    %18 = tpu.matmul %16, %17, %cst_15 {dimension_numbers = #tpu.dot_dimension_numbers<[1], [0], [0], [1], [0, 0, 1, 1], [], []>} : vector<4x8xf32>, vector<8x30xf32>, vector<4x30xf32> -> vector<4x30xf32>
    %19 = arith.addf %14, %18 : vector<4x30xf32>
    %c2 = arith.constant 2 : index
    %c0_16 = arith.constant 0 : index
    %c0_17 = arith.constant 0 : index
    %20 = vector.load %arg2[%c2, %c0_16, %c0_17] : memref<3x4x8xf32, #tpu.memory_space<vmem>>, vector<1x4x8xf32>
    %21 = vector.shape_cast %20 : vector<1x4x8xf32> to vector<4x8xf32>
    %22 = vector.extract_strided_slice %10 {offsets = [0, 2], sizes = [8, 30], strides = [1, 1]} : vector<8x32xf32> to vector<8x30xf32>
    %cst_18 = arith.constant dense<0.000000e+00> : vector<4x30xf32>
    %23 = tpu.matmul %21, %22, %cst_18 {dimension_numbers = #tpu.dot_dimension_numbers<[1], [0], [0], [1], [0, 0, 1, 1], [], []>} : vector<4x8xf32>, vector<8x30xf32>, vector<4x30xf32> -> vector<4x30xf32>
    %24 = arith.addf %19, %23 : vector<4x30xf32>
    %c0_19 = arith.constant 0 : index
    %c0_20 = arith.constant 0 : index
    %25 = vector.load %arg3[%c0_19, %c0_20] : memref<4x1xf32, #tpu.memory_space<vmem>>, vector<4x1xf32>
    %26 = vector.broadcast %25 : vector<4x1xf32> to vector<4x30xf32>
    %27 = arith.addf %24, %26 : vector<4x30xf32>
    %cst_21 = arith.constant 2.000000e-01 : f32
    %28 = vector.broadcast %cst_21 : f32 to vector<4x30xf32>
    %29 = arith.mulf %28, %27 : vector<4x30xf32>
    %30 = arith.maximumf %27, %29 : vector<4x30xf32>
    %c0_22 = arith.constant 0 : index
    %c0_23 = arith.constant 0 : index
    %c0_24 = arith.constant 0 : index
    %31 = vector.load %arg4[%c0_22, %c0_23, %c0_24] : memref<3x8x4xf32, #tpu.memory_space<vmem>>, vector<1x8x4xf32>
    %32 = vector.shape_cast %31 : vector<1x8x4xf32> to vector<8x4xf32>
    %33 = vector.extract_strided_slice %30 {offsets = [0, 0], sizes = [4, 28], strides = [1, 1]} : vector<4x30xf32> to vector<4x28xf32>
    %cst_25 = arith.constant dense<0.000000e+00> : vector<8x28xf32>
    %34 = tpu.matmul %32, %33, %cst_25 {dimension_numbers = #tpu.dot_dimension_numbers<[1], [0], [0], [1], [0, 0, 1, 1], [], []>} : vector<8x4xf32>, vector<4x28xf32>, vector<8x28xf32> -> vector<8x28xf32>
    %c1_26 = arith.constant 1 : index
    %c0_27 = arith.constant 0 : index
    %c0_28 = arith.constant 0 : index
    %35 = vector.load %arg4[%c1_26, %c0_27, %c0_28] : memref<3x8x4xf32, #tpu.memory_space<vmem>>, vector<1x8x4xf32>
    %36 = vector.shape_cast %35 : vector<1x8x4xf32> to vector<8x4xf32>
    %37 = vector.extract_strided_slice %30 {offsets = [0, 1], sizes = [4, 28], strides = [1, 1]} : vector<4x30xf32> to vector<4x28xf32>
    %cst_29 = arith.constant dense<0.000000e+00> : vector<8x28xf32>
    %38 = tpu.matmul %36, %37, %cst_29 {dimension_numbers = #tpu.dot_dimension_numbers<[1], [0], [0], [1], [0, 0, 1, 1], [], []>} : vector<8x4xf32>, vector<4x28xf32>, vector<8x28xf32> -> vector<8x28xf32>
    %39 = arith.addf %34, %38 : vector<8x28xf32>
    %c2_30 = arith.constant 2 : index
    %c0_31 = arith.constant 0 : index
    %c0_32 = arith.constant 0 : index
    %40 = vector.load %arg4[%c2_30, %c0_31, %c0_32] : memref<3x8x4xf32, #tpu.memory_space<vmem>>, vector<1x8x4xf32>
    %41 = vector.shape_cast %40 : vector<1x8x4xf32> to vector<8x4xf32>
    %42 = vector.extract_strided_slice %30 {offsets = [0, 2], sizes = [4, 28], strides = [1, 1]} : vector<4x30xf32> to vector<4x28xf32>
    %cst_33 = arith.constant dense<0.000000e+00> : vector<8x28xf32>
    %43 = tpu.matmul %41, %42, %cst_33 {dimension_numbers = #tpu.dot_dimension_numbers<[1], [0], [0], [1], [0, 0, 1, 1], [], []>} : vector<8x4xf32>, vector<4x28xf32>, vector<8x28xf32> -> vector<8x28xf32>
    %44 = arith.addf %39, %43 : vector<8x28xf32>
    %45 = tpu.iota {dimensions = array<i32: 0>} : vector<28x14xi32>
    %46 = tpu.iota {dimensions = array<i32: 1>} : vector<28x14xi32>
    %c2_i32 = arith.constant 2 : i32
    %47 = vector.broadcast %c2_i32 : i32 to vector<28x14xi32>
    %48 = arith.muli %46, %47 : vector<28x14xi32>
    %49 = arith.cmpi eq, %45, %48 : vector<28x14xi32>
    %50 = arith.extui %49 : vector<28x14xi1> to vector<28x14xi32>
    %51 = arith.sitofp %50 : vector<28x14xi32> to vector<28x14xf32>
    %cst_34 = arith.constant dense<0.000000e+00> : vector<8x14xf32>
    %52 = tpu.matmul %44, %51, %cst_34 {dimension_numbers = #tpu.dot_dimension_numbers<[1], [0], [0], [1], [0, 0, 1, 1], [], []>} : vector<8x28xf32>, vector<28x14xf32>, vector<8x14xf32> -> vector<8x14xf32>
    %c0_35 = arith.constant 0 : index
    %c0_36 = arith.constant 0 : index
    %53 = vector.load %arg5[%c0_35, %c0_36] : memref<8x1xf32, #tpu.memory_space<vmem>>, vector<8x1xf32>
    %54 = vector.broadcast %53 : vector<8x1xf32> to vector<8x14xf32>
    %55 = arith.addf %52, %54 : vector<8x14xf32>
    %cst_37 = arith.constant 2.000000e-01 : f32
    %56 = vector.broadcast %cst_37 : f32 to vector<8x14xf32>
    %57 = arith.mulf %56, %55 : vector<8x14xf32>
    %58 = arith.maximumf %55, %57 : vector<8x14xf32>
    %c0_38 = arith.constant 0 : index
    %c0_39 = arith.constant 0 : index
    %c0_40 = arith.constant 0 : index
    %59 = vector.load %arg6[%c0_38, %c0_39, %c0_40] : memref<3x32x8xf32, #tpu.memory_space<vmem>>, vector<1x32x8xf32>
    %60 = vector.shape_cast %59 : vector<1x32x8xf32> to vector<32x8xf32>
    %61 = vector.extract_strided_slice %58 {offsets = [0, 0], sizes = [8, 12], strides = [1, 1]} : vector<8x14xf32> to vector<8x12xf32>
    %cst_41 = arith.constant dense<0.000000e+00> : vector<32x12xf32>
    %62 = tpu.matmul %60, %61, %cst_41 {dimension_numbers = #tpu.dot_dimension_numbers<[1], [0], [0], [1], [0, 0, 1, 1], [], []>} : vector<32x8xf32>, vector<8x12xf32>, vector<32x12xf32> -> vector<32x12xf32>
    %c1_42 = arith.constant 1 : index
    %c0_43 = arith.constant 0 : index
    %c0_44 = arith.constant 0 : index
    %63 = vector.load %arg6[%c1_42, %c0_43, %c0_44] : memref<3x32x8xf32, #tpu.memory_space<vmem>>, vector<1x32x8xf32>
    %64 = vector.shape_cast %63 : vector<1x32x8xf32> to vector<32x8xf32>
    %65 = vector.extract_strided_slice %58 {offsets = [0, 1], sizes = [8, 12], strides = [1, 1]} : vector<8x14xf32> to vector<8x12xf32>
    %cst_45 = arith.constant dense<0.000000e+00> : vector<32x12xf32>
    %66 = tpu.matmul %64, %65, %cst_45 {dimension_numbers = #tpu.dot_dimension_numbers<[1], [0], [0], [1], [0, 0, 1, 1], [], []>} : vector<32x8xf32>, vector<8x12xf32>, vector<32x12xf32> -> vector<32x12xf32>
    %67 = arith.addf %62, %66 : vector<32x12xf32>
    %c2_46 = arith.constant 2 : index
    %c0_47 = arith.constant 0 : index
    %c0_48 = arith.constant 0 : index
    %68 = vector.load %arg6[%c2_46, %c0_47, %c0_48] : memref<3x32x8xf32, #tpu.memory_space<vmem>>, vector<1x32x8xf32>
    %69 = vector.shape_cast %68 : vector<1x32x8xf32> to vector<32x8xf32>
    %70 = vector.extract_strided_slice %58 {offsets = [0, 2], sizes = [8, 12], strides = [1, 1]} : vector<8x14xf32> to vector<8x12xf32>
    %cst_49 = arith.constant dense<0.000000e+00> : vector<32x12xf32>
    %71 = tpu.matmul %69, %70, %cst_49 {dimension_numbers = #tpu.dot_dimension_numbers<[1], [0], [0], [1], [0, 0, 1, 1], [], []>} : vector<32x8xf32>, vector<8x12xf32>, vector<32x12xf32> -> vector<32x12xf32>
    %72 = arith.addf %67, %71 : vector<32x12xf32>
    %c0_50 = arith.constant 0 : index
    %c0_51 = arith.constant 0 : index
    %73 = vector.load %arg7[%c0_50, %c0_51] : memref<32x1xf32, #tpu.memory_space<vmem>>, vector<32x1xf32>
    %74 = vector.broadcast %73 : vector<32x1xf32> to vector<32x12xf32>
    %75 = arith.addf %72, %74 : vector<32x12xf32>
    %cst_52 = arith.constant 2.000000e-01 : f32
    %76 = vector.broadcast %cst_52 : f32 to vector<32x12xf32>
    %77 = arith.mulf %76, %75 : vector<32x12xf32>
    %78 = arith.maximumf %75, %77 : vector<32x12xf32>
    %79 = vector.extract_strided_slice %8 {offsets = [0, 0], sizes = [32, 1], strides = [1, 1]} : vector<32x2xf32> to vector<32x1xf32>
    %80 = vector.shape_cast %79 : vector<32x1xf32> to vector<32x1xf32>
    %81 = vector.broadcast %80 : vector<32x1xf32> to vector<32x12xf32>
    %82 = tpu.concatenate %78, %81 in 1 : vector<32x12xf32>, vector<32x12xf32> -> vector<32x24xf32>
    %c0_53 = arith.constant 0 : index
    %c0_54 = arith.constant 0 : index
    %c0_55 = arith.constant 0 : index
    %83 = vector.load %arg14[%c0_53, %c0_54, %c0_55] : memref<3x8x32xf32, #tpu.memory_space<vmem>>, vector<1x8x32xf32>
    %84 = vector.shape_cast %83 : vector<1x8x32xf32> to vector<8x32xf32>
    %85 = vector.extract_strided_slice %82 {offsets = [0, 0], sizes = [32, 22], strides = [1, 1]} : vector<32x24xf32> to vector<32x22xf32>
    %cst_56 = arith.constant dense<0.000000e+00> : vector<8x22xf32>
    %86 = tpu.matmul %84, %85, %cst_56 {dimension_numbers = #tpu.dot_dimension_numbers<[1], [0], [0], [1], [0, 0, 1, 1], [], []>} : vector<8x32xf32>, vector<32x22xf32>, vector<8x22xf32> -> vector<8x22xf32>
    %c1_57 = arith.constant 1 : index
    %c0_58 = arith.constant 0 : index
    %c0_59 = arith.constant 0 : index
    %87 = vector.load %arg14[%c1_57, %c0_58, %c0_59] : memref<3x8x32xf32, #tpu.memory_space<vmem>>, vector<1x8x32xf32>
    %88 = vector.shape_cast %87 : vector<1x8x32xf32> to vector<8x32xf32>
    %89 = vector.extract_strided_slice %82 {offsets = [0, 1], sizes = [32, 22], strides = [1, 1]} : vector<32x24xf32> to vector<32x22xf32>
    %cst_60 = arith.constant dense<0.000000e+00> : vector<8x22xf32>
    %90 = tpu.matmul %88, %89, %cst_60 {dimension_numbers = #tpu.dot_dimension_numbers<[1], [0], [0], [1], [0, 0, 1, 1], [], []>} : vector<8x32xf32>, vector<32x22xf32>, vector<8x22xf32> -> vector<8x22xf32>
    %91 = arith.addf %86, %90 : vector<8x22xf32>
    %c2_61 = arith.constant 2 : index
    %c0_62 = arith.constant 0 : index
    %c0_63 = arith.constant 0 : index
    %92 = vector.load %arg14[%c2_61, %c0_62, %c0_63] : memref<3x8x32xf32, #tpu.memory_space<vmem>>, vector<1x8x32xf32>
    %93 = vector.shape_cast %92 : vector<1x8x32xf32> to vector<8x32xf32>
    %94 = vector.extract_strided_slice %82 {offsets = [0, 2], sizes = [32, 22], strides = [1, 1]} : vector<32x24xf32> to vector<32x22xf32>
    %cst_64 = arith.constant dense<0.000000e+00> : vector<8x22xf32>
    %95 = tpu.matmul %93, %94, %cst_64 {dimension_numbers = #tpu.dot_dimension_numbers<[1], [0], [0], [1], [0, 0, 1, 1], [], []>} : vector<8x32xf32>, vector<32x22xf32>, vector<8x22xf32> -> vector<8x22xf32>
    %96 = arith.addf %91, %95 : vector<8x22xf32>
    %c0_65 = arith.constant 0 : index
    %c0_66 = arith.constant 0 : index
    %97 = vector.load %arg15[%c0_65, %c0_66] : memref<8x1xf32, #tpu.memory_space<vmem>>, vector<8x1xf32>
    %98 = vector.broadcast %97 : vector<8x1xf32> to vector<8x22xf32>
    %99 = arith.addf %96, %98 : vector<8x22xf32>
    %cst_67 = arith.constant 2.000000e-01 : f32
    %100 = vector.broadcast %cst_67 : f32 to vector<8x22xf32>
    %101 = arith.mulf %100, %99 : vector<8x22xf32>
    %102 = arith.maximumf %99, %101 : vector<8x22xf32>
    %c0_68 = arith.constant 0 : index
    %c0_69 = arith.constant 0 : index
    %c0_70 = arith.constant 0 : index
    %103 = vector.load %arg16[%c0_68, %c0_69, %c0_70] : memref<3x1x8xf32, #tpu.memory_space<vmem>>, vector<1x1x8xf32>
    %104 = vector.shape_cast %103 : vector<1x1x8xf32> to vector<1x8xf32>
    %105 = vector.extract_strided_slice %102 {offsets = [0, 0], sizes = [8, 20], strides = [1, 1]} : vector<8x22xf32> to vector<8x20xf32>
    %cst_71 = arith.constant dense<0.000000e+00> : vector<1x20xf32>
    %106 = tpu.matmul %104, %105, %cst_71 {dimension_numbers = #tpu.dot_dimension_numbers<[1], [0], [0], [1], [0, 0, 1, 1], [], []>} : vector<1x8xf32>, vector<8x20xf32>, vector<1x20xf32> -> vector<1x20xf32>
    %c1_72 = arith.constant 1 : index
    %c0_73 = arith.constant 0 : index
    %c0_74 = arith.constant 0 : index
    %107 = vector.load %arg16[%c1_72, %c0_73, %c0_74] : memref<3x1x8xf32, #tpu.memory_space<vmem>>, vector<1x1x8xf32>
    %108 = vector.shape_cast %107 : vector<1x1x8xf32> to vector<1x8xf32>
    %109 = vector.extract_strided_slice %102 {offsets = [0, 1], sizes = [8, 20], strides = [1, 1]} : vector<8x22xf32> to vector<8x20xf32>
    %cst_75 = arith.constant dense<0.000000e+00> : vector<1x20xf32>
    %110 = tpu.matmul %108, %109, %cst_75 {dimension_numbers = #tpu.dot_dimension_numbers<[1], [0], [0], [1], [0, 0, 1, 1], [], []>} : vector<1x8xf32>, vector<8x20xf32>, vector<1x20xf32> -> vector<1x20xf32>
    %111 = arith.addf %106, %110 : vector<1x20xf32>
    %c2_76 = arith.constant 2 : index
    %c0_77 = arith.constant 0 : index
    %c0_78 = arith.constant 0 : index
    %112 = vector.load %arg16[%c2_76, %c0_77, %c0_78] : memref<3x1x8xf32, #tpu.memory_space<vmem>>, vector<1x1x8xf32>
    %113 = vector.shape_cast %112 : vector<1x1x8xf32> to vector<1x8xf32>
    %114 = vector.extract_strided_slice %102 {offsets = [0, 2], sizes = [8, 20], strides = [1, 1]} : vector<8x22xf32> to vector<8x20xf32>
    %cst_79 = arith.constant dense<0.000000e+00> : vector<1x20xf32>
    %115 = tpu.matmul %113, %114, %cst_79 {dimension_numbers = #tpu.dot_dimension_numbers<[1], [0], [0], [1], [0, 0, 1, 1], [], []>} : vector<1x8xf32>, vector<8x20xf32>, vector<1x20xf32> -> vector<1x20xf32>
    %116 = arith.addf %111, %115 : vector<1x20xf32>
    %c0_80 = arith.constant 0 : index
    %c0_81 = arith.constant 0 : index
    %117 = vector.load %arg17[%c0_80, %c0_81] : memref<1x1xf32, #tpu.memory_space<vmem>>, vector<1x1xf32>
    %118 = vector.broadcast %117 : vector<1x1xf32> to vector<1x20xf32>
    %119 = arith.addf %116, %118 : vector<1x20xf32>
    %cst_82 = arith.constant 2.000000e-01 : f32
    %120 = vector.broadcast %cst_82 : f32 to vector<1x20xf32>
    %121 = arith.mulf %120, %119 : vector<1x20xf32>
    %122 = arith.maximumf %119, %121 : vector<1x20xf32>
    %c0_83 = arith.constant 0 : index
    %c0_84 = arith.constant 0 : index
    %c0_85 = arith.constant 0 : index
    %123 = vector.load %arg8[%c0_83, %c0_84, %c0_85] : memref<3x8x32xf32, #tpu.memory_space<vmem>>, vector<1x8x32xf32>
    %124 = vector.shape_cast %123 : vector<1x8x32xf32> to vector<8x32xf32>
    %125 = vector.extract_strided_slice %78 {offsets = [0, 0], sizes = [32, 10], strides = [1, 1]} : vector<32x12xf32> to vector<32x10xf32>
    %cst_86 = arith.constant dense<0.000000e+00> : vector<8x10xf32>
    %126 = tpu.matmul %124, %125, %cst_86 {dimension_numbers = #tpu.dot_dimension_numbers<[1], [0], [0], [1], [0, 0, 1, 1], [], []>} : vector<8x32xf32>, vector<32x10xf32>, vector<8x10xf32> -> vector<8x10xf32>
    %c1_87 = arith.constant 1 : index
    %c0_88 = arith.constant 0 : index
    %c0_89 = arith.constant 0 : index
    %127 = vector.load %arg8[%c1_87, %c0_88, %c0_89] : memref<3x8x32xf32, #tpu.memory_space<vmem>>, vector<1x8x32xf32>
    %128 = vector.shape_cast %127 : vector<1x8x32xf32> to vector<8x32xf32>
    %129 = vector.extract_strided_slice %78 {offsets = [0, 1], sizes = [32, 10], strides = [1, 1]} : vector<32x12xf32> to vector<32x10xf32>
    %cst_90 = arith.constant dense<0.000000e+00> : vector<8x10xf32>
    %130 = tpu.matmul %128, %129, %cst_90 {dimension_numbers = #tpu.dot_dimension_numbers<[1], [0], [0], [1], [0, 0, 1, 1], [], []>} : vector<8x32xf32>, vector<32x10xf32>, vector<8x10xf32> -> vector<8x10xf32>
    %131 = arith.addf %126, %130 : vector<8x10xf32>
    %c2_91 = arith.constant 2 : index
    %c0_92 = arith.constant 0 : index
    %c0_93 = arith.constant 0 : index
    %132 = vector.load %arg8[%c2_91, %c0_92, %c0_93] : memref<3x8x32xf32, #tpu.memory_space<vmem>>, vector<1x8x32xf32>
    %133 = vector.shape_cast %132 : vector<1x8x32xf32> to vector<8x32xf32>
    %134 = vector.extract_strided_slice %78 {offsets = [0, 2], sizes = [32, 10], strides = [1, 1]} : vector<32x12xf32> to vector<32x10xf32>
    %cst_94 = arith.constant dense<0.000000e+00> : vector<8x10xf32>
    %135 = tpu.matmul %133, %134, %cst_94 {dimension_numbers = #tpu.dot_dimension_numbers<[1], [0], [0], [1], [0, 0, 1, 1], [], []>} : vector<8x32xf32>, vector<32x10xf32>, vector<8x10xf32> -> vector<8x10xf32>
    %136 = arith.addf %131, %135 : vector<8x10xf32>
    %c0_95 = arith.constant 0 : index
    %c0_96 = arith.constant 0 : index
    %137 = vector.load %arg9[%c0_95, %c0_96] : memref<8x1xf32, #tpu.memory_space<vmem>>, vector<8x1xf32>
    %138 = vector.broadcast %137 : vector<8x1xf32> to vector<8x10xf32>
    %139 = arith.addf %136, %138 : vector<8x10xf32>
    %cst_97 = arith.constant 2.000000e-01 : f32
    %140 = vector.broadcast %cst_97 : f32 to vector<8x10xf32>
    %141 = arith.mulf %140, %139 : vector<8x10xf32>
    %142 = arith.maximumf %139, %141 : vector<8x10xf32>
    %c0_98 = arith.constant 0 : index
    %c0_99 = arith.constant 0 : index
    %c0_100 = arith.constant 0 : index
    %143 = vector.load %arg10[%c0_98, %c0_99, %c0_100] : memref<3x1x8xf32, #tpu.memory_space<vmem>>, vector<1x1x8xf32>
    %144 = vector.shape_cast %143 : vector<1x1x8xf32> to vector<1x8xf32>
    %145 = vector.extract_strided_slice %142 {offsets = [0, 0], sizes = [8, 8], strides = [1, 1]} : vector<8x10xf32> to vector<8x8xf32>
    %cst_101 = arith.constant dense<0.000000e+00> : vector<1x8xf32>
    %146 = tpu.matmul %144, %145, %cst_101 {dimension_numbers = #tpu.dot_dimension_numbers<[1], [0], [0], [1], [0, 0, 1, 1], [], []>} : vector<1x8xf32>, vector<8x8xf32>, vector<1x8xf32> -> vector<1x8xf32>
    %c1_102 = arith.constant 1 : index
    %c0_103 = arith.constant 0 : index
    %c0_104 = arith.constant 0 : index
    %147 = vector.load %arg10[%c1_102, %c0_103, %c0_104] : memref<3x1x8xf32, #tpu.memory_space<vmem>>, vector<1x1x8xf32>
    %148 = vector.shape_cast %147 : vector<1x1x8xf32> to vector<1x8xf32>
    %149 = vector.extract_strided_slice %142 {offsets = [0, 1], sizes = [8, 8], strides = [1, 1]} : vector<8x10xf32> to vector<8x8xf32>
    %cst_105 = arith.constant dense<0.000000e+00> : vector<1x8xf32>
    %150 = tpu.matmul %148, %149, %cst_105 {dimension_numbers = #tpu.dot_dimension_numbers<[1], [0], [0], [1], [0, 0, 1, 1], [], []>} : vector<1x8xf32>, vector<8x8xf32>, vector<1x8xf32> -> vector<1x8xf32>
    %151 = arith.addf %146, %150 : vector<1x8xf32>
    %c2_106 = arith.constant 2 : index
    %c0_107 = arith.constant 0 : index
    %c0_108 = arith.constant 0 : index
    %152 = vector.load %arg10[%c2_106, %c0_107, %c0_108] : memref<3x1x8xf32, #tpu.memory_space<vmem>>, vector<1x1x8xf32>
    %153 = vector.shape_cast %152 : vector<1x1x8xf32> to vector<1x8xf32>
    %154 = vector.extract_strided_slice %142 {offsets = [0, 2], sizes = [8, 8], strides = [1, 1]} : vector<8x10xf32> to vector<8x8xf32>
    %cst_109 = arith.constant dense<0.000000e+00> : vector<1x8xf32>
    %155 = tpu.matmul %153, %154, %cst_109 {dimension_numbers = #tpu.dot_dimension_numbers<[1], [0], [0], [1], [0, 0, 1, 1], [], []>} : vector<1x8xf32>, vector<8x8xf32>, vector<1x8xf32> -> vector<1x8xf32>
    %156 = arith.addf %151, %155 : vector<1x8xf32>
    %c0_110 = arith.constant 0 : index
    %c0_111 = arith.constant 0 : index
    %157 = vector.load %arg11[%c0_110, %c0_111] : memref<1x1xf32, #tpu.memory_space<vmem>>, vector<1x1xf32>
    %158 = vector.broadcast %157 : vector<1x1xf32> to vector<1x8xf32>
    %159 = arith.addf %156, %158 : vector<1x8xf32>
    %cst_112 = arith.constant 2.000000e-01 : f32
    %160 = vector.broadcast %cst_112 : f32 to vector<1x8xf32>
    %161 = arith.mulf %160, %159 : vector<1x8xf32>
    %162 = arith.maximumf %159, %161 : vector<1x8xf32>
    %c0_113 = arith.constant 0 : index
    %c0_114 = arith.constant 0 : index
    %163 = vector.load %arg18[%c0_113, %c0_114] : memref<2x8xf32, #tpu.memory_space<vmem>>, vector<1x8xf32>
    tpu.vector_store %arg18[%c0_113, %c0_114], %162 {strides = array<i32>} : memref<2x8xf32, #tpu.memory_space<vmem>>, vector<1x8xf32>,
    %c0_115 = arith.constant 0 : index
    %c0_116 = arith.constant 0 : index
    %164 = vector.load %arg19[%c0_115, %c0_116] : memref<2x20xf32, #tpu.memory_space<vmem>>, vector<1x20xf32>
    tpu.vector_store %arg19[%c0_115, %c0_116], %122 {strides = array<i32>} : memref<2x20xf32, #tpu.memory_space<vmem>>, vector<1x20xf32>,
    %c0_117 = arith.constant 0 : index
    %c0_118 = arith.constant 0 : index
    %c0_119 = arith.constant 0 : index
    %165 = vector.load %arg20[%c0_117, %c0_118, %c0_119] : memref<2x4x30xf32, #tpu.memory_space<vmem>>, vector<1x4x30xf32>
    %166 = vector.shape_cast %165 : vector<1x4x30xf32> to vector<4x30xf32>
    %167 = vector.shape_cast %30 : vector<4x30xf32> to vector<1x4x30xf32>
    tpu.vector_store %arg20[%c0_117, %c0_118, %c0_119], %167 {strides = array<i32>} : memref<2x4x30xf32, #tpu.memory_space<vmem>>, vector<1x4x30xf32>,
    %c0_120 = arith.constant 0 : index
    %c0_121 = arith.constant 0 : index
    %c0_122 = arith.constant 0 : index
    %168 = vector.load %arg21[%c0_120, %c0_121, %c0_122] : memref<2x8x14xf32, #tpu.memory_space<vmem>>, vector<1x8x14xf32>
    %169 = vector.shape_cast %168 : vector<1x8x14xf32> to vector<8x14xf32>
    %170 = vector.shape_cast %58 : vector<8x14xf32> to vector<1x8x14xf32>
    tpu.vector_store %arg21[%c0_120, %c0_121, %c0_122], %170 {strides = array<i32>} : memref<2x8x14xf32, #tpu.memory_space<vmem>>, vector<1x8x14xf32>,
    %c0_123 = arith.constant 0 : index
    %c0_124 = arith.constant 0 : index
    %c0_125 = arith.constant 0 : index
    %171 = vector.load %arg22[%c0_123, %c0_124, %c0_125] : memref<2x32x12xf32, #tpu.memory_space<vmem>>, vector<1x32x12xf32>
    %172 = vector.shape_cast %171 : vector<1x32x12xf32> to vector<32x12xf32>
    %173 = vector.shape_cast %78 : vector<32x12xf32> to vector<1x32x12xf32>
    tpu.vector_store %arg22[%c0_123, %c0_124, %c0_125], %173 {strides = array<i32>} : memref<2x32x12xf32, #tpu.memory_space<vmem>>, vector<1x32x12xf32>,
    %c0_126 = arith.constant 0 : index
    %c0_127 = arith.constant 0 : index
    %c0_128 = arith.constant 0 : index
    %174 = vector.load %arg23[%c0_126, %c0_127, %c0_128] : memref<2x8x22xf32, #tpu.memory_space<vmem>>, vector<1x8x22xf32>
    %175 = vector.shape_cast %174 : vector<1x8x22xf32> to vector<8x22xf32>
    %176 = vector.shape_cast %102 : vector<8x22xf32> to vector<1x8x22xf32>
    tpu.vector_store %arg23[%c0_126, %c0_127, %c0_128], %176 {strides = array<i32>} : memref<2x8x22xf32, #tpu.memory_space<vmem>>, vector<1x8x22xf32>,
    %c0_129 = arith.constant 0 : index
    %c0_130 = arith.constant 0 : index
    %c0_131 = arith.constant 0 : index
    %177 = vector.load %arg24[%c0_129, %c0_130, %c0_131] : memref<2x1x20xf32, #tpu.memory_space<vmem>>, vector<1x1x20xf32>
    %178 = vector.shape_cast %177 : vector<1x1x20xf32> to vector<1x20xf32>
    %179 = vector.shape_cast %122 : vector<1x20xf32> to vector<1x1x20xf32>
    tpu.vector_store %arg24[%c0_129, %c0_130, %c0_131], %179 {strides = array<i32>} : memref<2x1x20xf32, #tpu.memory_space<vmem>>, vector<1x1x20xf32>,
    %c0_132 = arith.constant 0 : index
    %c0_133 = arith.constant 0 : index
    %c0_134 = arith.constant 0 : index
    %180 = vector.load %arg25[%c0_132, %c0_133, %c0_134] : memref<2x8x10xf32, #tpu.memory_space<vmem>>, vector<1x8x10xf32>
    %181 = vector.shape_cast %180 : vector<1x8x10xf32> to vector<8x10xf32>
    %182 = vector.shape_cast %142 : vector<8x10xf32> to vector<1x8x10xf32>
    tpu.vector_store %arg25[%c0_132, %c0_133, %c0_134], %182 {strides = array<i32>} : memref<2x8x10xf32, #tpu.memory_space<vmem>>, vector<1x8x10xf32>,
    %c0_135 = arith.constant 0 : index
    %c0_136 = arith.constant 0 : index
    %c0_137 = arith.constant 0 : index
    %183 = vector.load %arg26[%c0_135, %c0_136, %c0_137] : memref<2x1x8xf32, #tpu.memory_space<vmem>>, vector<1x1x8xf32>
    %184 = vector.shape_cast %183 : vector<1x1x8xf32> to vector<1x8xf32>
    %185 = vector.shape_cast %162 : vector<1x8xf32> to vector<1x1x8xf32>
    tpu.vector_store %arg26[%c0_135, %c0_136, %c0_137], %185 {strides = array<i32>} : memref<2x1x8xf32, #tpu.memory_space<vmem>>, vector<1x1x8xf32>,
    %c1_138 = arith.constant 1 : index
    %c0_139 = arith.constant 0 : index
    %c0_140 = arith.constant 0 : index
    %186 = vector.load %arg0[%c1_138, %c0_139, %c0_140] : memref<2x8x32xf32, #tpu.memory_space<vmem>>, vector<1x8x32xf32>
    %187 = vector.shape_cast %186 : vector<1x8x32xf32> to vector<8x32xf32>
    %c0_141 = arith.constant 0 : index
    %c0_142 = arith.constant 0 : index
    %c0_143 = arith.constant 0 : index
    %188 = vector.load %arg2[%c0_141, %c0_142, %c0_143] : memref<3x4x8xf32, #tpu.memory_space<vmem>>, vector<1x4x8xf32>
    %189 = vector.shape_cast %188 : vector<1x4x8xf32> to vector<4x8xf32>
    %190 = vector.extract_strided_slice %187 {offsets = [0, 0], sizes = [8, 30], strides = [1, 1]} : vector<8x32xf32> to vector<8x30xf32>
    %cst_144 = arith.constant dense<0.000000e+00> : vector<4x30xf32>
    %191 = tpu.matmul %189, %190, %cst_144 {dimension_numbers = #tpu.dot_dimension_numbers<[1], [0], [0], [1], [0, 0, 1, 1], [], []>} : vector<4x8xf32>, vector<8x30xf32>, vector<4x30xf32> -> vector<4x30xf32>
    %c1_145 = arith.constant 1 : index
    %c0_146 = arith.constant 0 : index
    %c0_147 = arith.constant 0 : index
    %192 = vector.load %arg2[%c1_145, %c0_146, %c0_147] : memref<3x4x8xf32, #tpu.memory_space<vmem>>, vector<1x4x8xf32>
    %193 = vector.shape_cast %192 : vector<1x4x8xf32> to vector<4x8xf32>
    %194 = vector.extract_strided_slice %187 {offsets = [0, 1], sizes = [8, 30], strides = [1, 1]} : vector<8x32xf32> to vector<8x30xf32>
    %cst_148 = arith.constant dense<0.000000e+00> : vector<4x30xf32>
    %195 = tpu.matmul %193, %194, %cst_148 {dimension_numbers = #tpu.dot_dimension_numbers<[1], [0], [0], [1], [0, 0, 1, 1], [], []>} : vector<4x8xf32>, vector<8x30xf32>, vector<4x30xf32> -> vector<4x30xf32>
    %196 = arith.addf %191, %195 : vector<4x30xf32>
    %c2_149 = arith.constant 2 : index
    %c0_150 = arith.constant 0 : index
    %c0_151 = arith.constant 0 : index
    %197 = vector.load %arg2[%c2_149, %c0_150, %c0_151] : memref<3x4x8xf32, #tpu.memory_space<vmem>>, vector<1x4x8xf32>
    %198 = vector.shape_cast %197 : vector<1x4x8xf32> to vector<4x8xf32>
    %199 = vector.extract_strided_slice %187 {offsets = [0, 2], sizes = [8, 30], strides = [1, 1]} : vector<8x32xf32> to vector<8x30xf32>
    %cst_152 = arith.constant dense<0.000000e+00> : vector<4x30xf32>
    %200 = tpu.matmul %198, %199, %cst_152 {dimension_numbers = #tpu.dot_dimension_numbers<[1], [0], [0], [1], [0, 0, 1, 1], [], []>} : vector<4x8xf32>, vector<8x30xf32>, vector<4x30xf32> -> vector<4x30xf32>
    %201 = arith.addf %196, %200 : vector<4x30xf32>
    %c0_153 = arith.constant 0 : index
    %c0_154 = arith.constant 0 : index
    %202 = vector.load %arg3[%c0_153, %c0_154] : memref<4x1xf32, #tpu.memory_space<vmem>>, vector<4x1xf32>
    %203 = vector.broadcast %202 : vector<4x1xf32> to vector<4x30xf32>
    %204 = arith.addf %201, %203 : vector<4x30xf32>
    %cst_155 = arith.constant 2.000000e-01 : f32
    %205 = vector.broadcast %cst_155 : f32 to vector<4x30xf32>
    %206 = arith.mulf %205, %204 : vector<4x30xf32>
    %207 = arith.maximumf %204, %206 : vector<4x30xf32>
    %c0_156 = arith.constant 0 : index
    %c0_157 = arith.constant 0 : index
    %c0_158 = arith.constant 0 : index
    %208 = vector.load %arg4[%c0_156, %c0_157, %c0_158] : memref<3x8x4xf32, #tpu.memory_space<vmem>>, vector<1x8x4xf32>
    %209 = vector.shape_cast %208 : vector<1x8x4xf32> to vector<8x4xf32>
    %210 = vector.extract_strided_slice %207 {offsets = [0, 0], sizes = [4, 28], strides = [1, 1]} : vector<4x30xf32> to vector<4x28xf32>
    %cst_159 = arith.constant dense<0.000000e+00> : vector<8x28xf32>
    %211 = tpu.matmul %209, %210, %cst_159 {dimension_numbers = #tpu.dot_dimension_numbers<[1], [0], [0], [1], [0, 0, 1, 1], [], []>} : vector<8x4xf32>, vector<4x28xf32>, vector<8x28xf32> -> vector<8x28xf32>
    %c1_160 = arith.constant 1 : index
    %c0_161 = arith.constant 0 : index
    %c0_162 = arith.constant 0 : index
    %212 = vector.load %arg4[%c1_160, %c0_161, %c0_162] : memref<3x8x4xf32, #tpu.memory_space<vmem>>, vector<1x8x4xf32>
    %213 = vector.shape_cast %212 : vector<1x8x4xf32> to vector<8x4xf32>
    %214 = vector.extract_strided_slice %207 {offsets = [0, 1], sizes = [4, 28], strides = [1, 1]} : vector<4x30xf32> to vector<4x28xf32>
    %cst_163 = arith.constant dense<0.000000e+00> : vector<8x28xf32>
    %215 = tpu.matmul %213, %214, %cst_163 {dimension_numbers = #tpu.dot_dimension_numbers<[1], [0], [0], [1], [0, 0, 1, 1], [], []>} : vector<8x4xf32>, vector<4x28xf32>, vector<8x28xf32> -> vector<8x28xf32>
    %216 = arith.addf %211, %215 : vector<8x28xf32>
    %c2_164 = arith.constant 2 : index
    %c0_165 = arith.constant 0 : index
    %c0_166 = arith.constant 0 : index
    %217 = vector.load %arg4[%c2_164, %c0_165, %c0_166] : memref<3x8x4xf32, #tpu.memory_space<vmem>>, vector<1x8x4xf32>
    %218 = vector.shape_cast %217 : vector<1x8x4xf32> to vector<8x4xf32>
    %219 = vector.extract_strided_slice %207 {offsets = [0, 2], sizes = [4, 28], strides = [1, 1]} : vector<4x30xf32> to vector<4x28xf32>
    %cst_167 = arith.constant dense<0.000000e+00> : vector<8x28xf32>
    %220 = tpu.matmul %218, %219, %cst_167 {dimension_numbers = #tpu.dot_dimension_numbers<[1], [0], [0], [1], [0, 0, 1, 1], [], []>} : vector<8x4xf32>, vector<4x28xf32>, vector<8x28xf32> -> vector<8x28xf32>
    %221 = arith.addf %216, %220 : vector<8x28xf32>
    %222 = tpu.iota {dimensions = array<i32: 0>} : vector<28x14xi32>
    %223 = tpu.iota {dimensions = array<i32: 1>} : vector<28x14xi32>
    %c2_i32_168 = arith.constant 2 : i32
    %224 = vector.broadcast %c2_i32_168 : i32 to vector<28x14xi32>
    %225 = arith.muli %223, %224 : vector<28x14xi32>
    %226 = arith.cmpi eq, %222, %225 : vector<28x14xi32>
    %227 = arith.extui %226 : vector<28x14xi1> to vector<28x14xi32>
    %228 = arith.sitofp %227 : vector<28x14xi32> to vector<28x14xf32>
    %cst_169 = arith.constant dense<0.000000e+00> : vector<8x14xf32>
    %229 = tpu.matmul %221, %228, %cst_169 {dimension_numbers = #tpu.dot_dimension_numbers<[1], [0], [0], [1], [0, 0, 1, 1], [], []>} : vector<8x28xf32>, vector<28x14xf32>, vector<8x14xf32> -> vector<8x14xf32>
    %c0_170 = arith.constant 0 : index
    %c0_171 = arith.constant 0 : index
    %230 = vector.load %arg5[%c0_170, %c0_171] : memref<8x1xf32, #tpu.memory_space<vmem>>, vector<8x1xf32>
    %231 = vector.broadcast %230 : vector<8x1xf32> to vector<8x14xf32>
    %232 = arith.addf %229, %231 : vector<8x14xf32>
    %cst_172 = arith.constant 2.000000e-01 : f32
    %233 = vector.broadcast %cst_172 : f32 to vector<8x14xf32>
    %234 = arith.mulf %233, %232 : vector<8x14xf32>
    %235 = arith.maximumf %232, %234 : vector<8x14xf32>
    %c0_173 = arith.constant 0 : index
    %c0_174 = arith.constant 0 : index
    %c0_175 = arith.constant 0 : index
    %236 = vector.load %arg6[%c0_173, %c0_174, %c0_175] : memref<3x32x8xf32, #tpu.memory_space<vmem>>, vector<1x32x8xf32>
    %237 = vector.shape_cast %236 : vector<1x32x8xf32> to vector<32x8xf32>
    %238 = vector.extract_strided_slice %235 {offsets = [0, 0], sizes = [8, 12], strides = [1, 1]} : vector<8x14xf32> to vector<8x12xf32>
    %cst_176 = arith.constant dense<0.000000e+00> : vector<32x12xf32>
    %239 = tpu.matmul %237, %238, %cst_176 {dimension_numbers = #tpu.dot_dimension_numbers<[1], [0], [0], [1], [0, 0, 1, 1], [], []>} : vector<32x8xf32>, vector<8x12xf32>, vector<32x12xf32> -> vector<32x12xf32>
    %c1_177 = arith.constant 1 : index
    %c0_178 = arith.constant 0 : index
    %c0_179 = arith.constant 0 : index
    %240 = vector.load %arg6[%c1_177, %c0_178, %c0_179] : memref<3x32x8xf32, #tpu.memory_space<vmem>>, vector<1x32x8xf32>
    %241 = vector.shape_cast %240 : vector<1x32x8xf32> to vector<32x8xf32>
    %242 = vector.extract_strided_slice %235 {offsets = [0, 1], sizes = [8, 12], strides = [1, 1]} : vector<8x14xf32> to vector<8x12xf32>
    %cst_180 = arith.constant dense<0.000000e+00> : vector<32x12xf32>
    %243 = tpu.matmul %241, %242, %cst_180 {dimension_numbers = #tpu.dot_dimension_numbers<[1], [0], [0], [1], [0, 0, 1, 1], [], []>} : vector<32x8xf32>, vector<8x12xf32>, vector<32x12xf32> -> vector<32x12xf32>
    %244 = arith.addf %239, %243 : vector<32x12xf32>
    %c2_181 = arith.constant 2 : index
    %c0_182 = arith.constant 0 : index
    %c0_183 = arith.constant 0 : index
    %245 = vector.load %arg6[%c2_181, %c0_182, %c0_183] : memref<3x32x8xf32, #tpu.memory_space<vmem>>, vector<1x32x8xf32>
    %246 = vector.shape_cast %245 : vector<1x32x8xf32> to vector<32x8xf32>
    %247 = vector.extract_strided_slice %235 {offsets = [0, 2], sizes = [8, 12], strides = [1, 1]} : vector<8x14xf32> to vector<8x12xf32>
    %cst_184 = arith.constant dense<0.000000e+00> : vector<32x12xf32>
    %248 = tpu.matmul %246, %247, %cst_184 {dimension_numbers = #tpu.dot_dimension_numbers<[1], [0], [0], [1], [0, 0, 1, 1], [], []>} : vector<32x8xf32>, vector<8x12xf32>, vector<32x12xf32> -> vector<32x12xf32>
    %249 = arith.addf %244, %248 : vector<32x12xf32>
    %c0_185 = arith.constant 0 : index
    %c0_186 = arith.constant 0 : index
    %250 = vector.load %arg7[%c0_185, %c0_186] : memref<32x1xf32, #tpu.memory_space<vmem>>, vector<32x1xf32>
    %251 = vector.broadcast %250 : vector<32x1xf32> to vector<32x12xf32>
    %252 = arith.addf %249, %251 : vector<32x12xf32>
    %cst_187 = arith.constant 2.000000e-01 : f32
    %253 = vector.broadcast %cst_187 : f32 to vector<32x12xf32>
    %254 = arith.mulf %253, %252 : vector<32x12xf32>
    %255 = arith.maximumf %252, %254 : vector<32x12xf32>
    %256 = vector.extract_strided_slice %8 {offsets = [0, 1], sizes = [32, 1], strides = [1, 1]} : vector<32x2xf32> to vector<32x1xf32>
    %257 = vector.shape_cast %256 : vector<32x1xf32> to vector<32x1xf32>
    %258 = vector.broadcast %257 : vector<32x1xf32> to vector<32x12xf32>
    %259 = tpu.concatenate %255, %258 in 1 : vector<32x12xf32>, vector<32x12xf32> -> vector<32x24xf32>
    %c0_188 = arith.constant 0 : index
    %c0_189 = arith.constant 0 : index
    %c0_190 = arith.constant 0 : index
    %260 = vector.load %arg14[%c0_188, %c0_189, %c0_190] : memref<3x8x32xf32, #tpu.memory_space<vmem>>, vector<1x8x32xf32>
    %261 = vector.shape_cast %260 : vector<1x8x32xf32> to vector<8x32xf32>
    %262 = vector.extract_strided_slice %259 {offsets = [0, 0], sizes = [32, 22], strides = [1, 1]} : vector<32x24xf32> to vector<32x22xf32>
    %cst_191 = arith.constant dense<0.000000e+00> : vector<8x22xf32>
    %263 = tpu.matmul %261, %262, %cst_191 {dimension_numbers = #tpu.dot_dimension_numbers<[1], [0], [0], [1], [0, 0, 1, 1], [], []>} : vector<8x32xf32>, vector<32x22xf32>, vector<8x22xf32> -> vector<8x22xf32>
    %c1_192 = arith.constant 1 : index
    %c0_193 = arith.constant 0 : index
    %c0_194 = arith.constant 0 : index
    %264 = vector.load %arg14[%c1_192, %c0_193, %c0_194] : memref<3x8x32xf32, #tpu.memory_space<vmem>>, vector<1x8x32xf32>
    %265 = vector.shape_cast %264 : vector<1x8x32xf32> to vector<8x32xf32>
    %266 = vector.extract_strided_slice %259 {offsets = [0, 1], sizes = [32, 22], strides = [1, 1]} : vector<32x24xf32> to vector<32x22xf32>
    %cst_195 = arith.constant dense<0.000000e+00> : vector<8x22xf32>
    %267 = tpu.matmul %265, %266, %cst_195 {dimension_numbers = #tpu.dot_dimension_numbers<[1], [0], [0], [1], [0, 0, 1, 1], [], []>} : vector<8x32xf32>, vector<32x22xf32>, vector<8x22xf32> -> vector<8x22xf32>
    %268 = arith.addf %263, %267 : vector<8x22xf32>
    %c2_196 = arith.constant 2 : index
    %c0_197 = arith.constant 0 : index
    %c0_198 = arith.constant 0 : index
    %269 = vector.load %arg14[%c2_196, %c0_197, %c0_198] : memref<3x8x32xf32, #tpu.memory_space<vmem>>, vector<1x8x32xf32>
    %270 = vector.shape_cast %269 : vector<1x8x32xf32> to vector<8x32xf32>
    %271 = vector.extract_strided_slice %259 {offsets = [0, 2], sizes = [32, 22], strides = [1, 1]} : vector<32x24xf32> to vector<32x22xf32>
    %cst_199 = arith.constant dense<0.000000e+00> : vector<8x22xf32>
    %272 = tpu.matmul %270, %271, %cst_199 {dimension_numbers = #tpu.dot_dimension_numbers<[1], [0], [0], [1], [0, 0, 1, 1], [], []>} : vector<8x32xf32>, vector<32x22xf32>, vector<8x22xf32> -> vector<8x22xf32>
    %273 = arith.addf %268, %272 : vector<8x22xf32>
    %c0_200 = arith.constant 0 : index
    %c0_201 = arith.constant 0 : index
    %274 = vector.load %arg15[%c0_200, %c0_201] : memref<8x1xf32, #tpu.memory_space<vmem>>, vector<8x1xf32>
    %275 = vector.broadcast %274 : vector<8x1xf32> to vector<8x22xf32>
    %276 = arith.addf %273, %275 : vector<8x22xf32>
    %cst_202 = arith.constant 2.000000e-01 : f32
    %277 = vector.broadcast %cst_202 : f32 to vector<8x22xf32>
    %278 = arith.mulf %277, %276 : vector<8x22xf32>
    %279 = arith.maximumf %276, %278 : vector<8x22xf32>
    %c0_203 = arith.constant 0 : index
    %c0_204 = arith.constant 0 : index
    %c0_205 = arith.constant 0 : index
    %280 = vector.load %arg16[%c0_203, %c0_204, %c0_205] : memref<3x1x8xf32, #tpu.memory_space<vmem>>, vector<1x1x8xf32>
    %281 = vector.shape_cast %280 : vector<1x1x8xf32> to vector<1x8xf32>
    %282 = vector.extract_strided_slice %279 {offsets = [0, 0], sizes = [8, 20], strides = [1, 1]} : vector<8x22xf32> to vector<8x20xf32>
    %cst_206 = arith.constant dense<0.000000e+00> : vector<1x20xf32>
    %283 = tpu.matmul %281, %282, %cst_206 {dimension_numbers = #tpu.dot_dimension_numbers<[1], [0], [0], [1], [0, 0, 1, 1], [], []>} : vector<1x8xf32>, vector<8x20xf32>, vector<1x20xf32> -> vector<1x20xf32>
    %c1_207 = arith.constant 1 : index
    %c0_208 = arith.constant 0 : index
    %c0_209 = arith.constant 0 : index
    %284 = vector.load %arg16[%c1_207, %c0_208, %c0_209] : memref<3x1x8xf32, #tpu.memory_space<vmem>>, vector<1x1x8xf32>
    %285 = vector.shape_cast %284 : vector<1x1x8xf32> to vector<1x8xf32>
    %286 = vector.extract_strided_slice %279 {offsets = [0, 1], sizes = [8, 20], strides = [1, 1]} : vector<8x22xf32> to vector<8x20xf32>
    %cst_210 = arith.constant dense<0.000000e+00> : vector<1x20xf32>
    %287 = tpu.matmul %285, %286, %cst_210 {dimension_numbers = #tpu.dot_dimension_numbers<[1], [0], [0], [1], [0, 0, 1, 1], [], []>} : vector<1x8xf32>, vector<8x20xf32>, vector<1x20xf32> -> vector<1x20xf32>
    %288 = arith.addf %283, %287 : vector<1x20xf32>
    %c2_211 = arith.constant 2 : index
    %c0_212 = arith.constant 0 : index
    %c0_213 = arith.constant 0 : index
    %289 = vector.load %arg16[%c2_211, %c0_212, %c0_213] : memref<3x1x8xf32, #tpu.memory_space<vmem>>, vector<1x1x8xf32>
    %290 = vector.shape_cast %289 : vector<1x1x8xf32> to vector<1x8xf32>
    %291 = vector.extract_strided_slice %279 {offsets = [0, 2], sizes = [8, 20], strides = [1, 1]} : vector<8x22xf32> to vector<8x20xf32>
    %cst_214 = arith.constant dense<0.000000e+00> : vector<1x20xf32>
    %292 = tpu.matmul %290, %291, %cst_214 {dimension_numbers = #tpu.dot_dimension_numbers<[1], [0], [0], [1], [0, 0, 1, 1], [], []>} : vector<1x8xf32>, vector<8x20xf32>, vector<1x20xf32> -> vector<1x20xf32>
    %293 = arith.addf %288, %292 : vector<1x20xf32>
    %c0_215 = arith.constant 0 : index
    %c0_216 = arith.constant 0 : index
    %294 = vector.load %arg17[%c0_215, %c0_216] : memref<1x1xf32, #tpu.memory_space<vmem>>, vector<1x1xf32>
    %295 = vector.broadcast %294 : vector<1x1xf32> to vector<1x20xf32>
    %296 = arith.addf %293, %295 : vector<1x20xf32>
    %cst_217 = arith.constant 2.000000e-01 : f32
    %297 = vector.broadcast %cst_217 : f32 to vector<1x20xf32>
    %298 = arith.mulf %297, %296 : vector<1x20xf32>
    %299 = arith.maximumf %296, %298 : vector<1x20xf32>
    %c0_218 = arith.constant 0 : index
    %c0_219 = arith.constant 0 : index
    %c0_220 = arith.constant 0 : index
    %300 = vector.load %arg8[%c0_218, %c0_219, %c0_220] : memref<3x8x32xf32, #tpu.memory_space<vmem>>, vector<1x8x32xf32>
    %301 = vector.shape_cast %300 : vector<1x8x32xf32> to vector<8x32xf32>
    %302 = vector.extract_strided_slice %255 {offsets = [0, 0], sizes = [32, 10], strides = [1, 1]} : vector<32x12xf32> to vector<32x10xf32>
    %cst_221 = arith.constant dense<0.000000e+00> : vector<8x10xf32>
    %303 = tpu.matmul %301, %302, %cst_221 {dimension_numbers = #tpu.dot_dimension_numbers<[1], [0], [0], [1], [0, 0, 1, 1], [], []>} : vector<8x32xf32>, vector<32x10xf32>, vector<8x10xf32> -> vector<8x10xf32>
    %c1_222 = arith.constant 1 : index
    %c0_223 = arith.constant 0 : index
    %c0_224 = arith.constant 0 : index
    %304 = vector.load %arg8[%c1_222, %c0_223, %c0_224] : memref<3x8x32xf32, #tpu.memory_space<vmem>>, vector<1x8x32xf32>
    %305 = vector.shape_cast %304 : vector<1x8x32xf32> to vector<8x32xf32>
    %306 = vector.extract_strided_slice %255 {offsets = [0, 1], sizes = [32, 10], strides = [1, 1]} : vector<32x12xf32> to vector<32x10xf32>
    %cst_225 = arith.constant dense<0.000000e+00> : vector<8x10xf32>
    %307 = tpu.matmul %305, %306, %cst_225 {dimension_numbers = #tpu.dot_dimension_numbers<[1], [0], [0], [1], [0, 0, 1, 1], [], []>} : vector<8x32xf32>, vector<32x10xf32>, vector<8x10xf32> -> vector<8x10xf32>
    %308 = arith.addf %303, %307 : vector<8x10xf32>
    %c2_226 = arith.constant 2 : index
    %c0_227 = arith.constant 0 : index
    %c0_228 = arith.constant 0 : index
    %309 = vector.load %arg8[%c2_226, %c0_227, %c0_228] : memref<3x8x32xf32, #tpu.memory_space<vmem>>, vector<1x8x32xf32>
    %310 = vector.shape_cast %309 : vector<1x8x32xf32> to vector<8x32xf32>
    %311 = vector.extract_strided_slice %255 {offsets = [0, 2], sizes = [32, 10], strides = [1, 1]} : vector<32x12xf32> to vector<32x10xf32>
    %cst_229 = arith.constant dense<0.000000e+00> : vector<8x10xf32>
    %312 = tpu.matmul %310, %311, %cst_229 {dimension_numbers = #tpu.dot_dimension_numbers<[1], [0], [0], [1], [0, 0, 1, 1], [], []>} : vector<8x32xf32>, vector<32x10xf32>, vector<8x10xf32> -> vector<8x10xf32>
    %313 = arith.addf %308, %312 : vector<8x10xf32>
    %c0_230 = arith.constant 0 : index
    %c0_231 = arith.constant 0 : index
    %314 = vector.load %arg9[%c0_230, %c0_231] : memref<8x1xf32, #tpu.memory_space<vmem>>, vector<8x1xf32>
    %315 = vector.broadcast %314 : vector<8x1xf32> to vector<8x10xf32>
    %316 = arith.addf %313, %315 : vector<8x10xf32>
    %cst_232 = arith.constant 2.000000e-01 : f32
    %317 = vector.broadcast %cst_232 : f32 to vector<8x10xf32>
    %318 = arith.mulf %317, %316 : vector<8x10xf32>
    %319 = arith.maximumf %316, %318 : vector<8x10xf32>
    %c0_233 = arith.constant 0 : index
    %c0_234 = arith.constant 0 : index
    %c0_235 = arith.constant 0 : index
    %320 = vector.load %arg10[%c0_233, %c0_234, %c0_235] : memref<3x1x8xf32, #tpu.memory_space<vmem>>, vector<1x1x8xf32>
    %321 = vector.shape_cast %320 : vector<1x1x8xf32> to vector<1x8xf32>
    %322 = vector.extract_strided_slice %319 {offsets = [0, 0], sizes = [8, 8], strides = [1, 1]} : vector<8x10xf32> to vector<8x8xf32>
    %cst_236 = arith.constant dense<0.000000e+00> : vector<1x8xf32>
    %323 = tpu.matmul %321, %322, %cst_236 {dimension_numbers = #tpu.dot_dimension_numbers<[1], [0], [0], [1], [0, 0, 1, 1], [], []>} : vector<1x8xf32>, vector<8x8xf32>, vector<1x8xf32> -> vector<1x8xf32>
    %c1_237 = arith.constant 1 : index
    %c0_238 = arith.constant 0 : index
    %c0_239 = arith.constant 0 : index
    %324 = vector.load %arg10[%c1_237, %c0_238, %c0_239] : memref<3x1x8xf32, #tpu.memory_space<vmem>>, vector<1x1x8xf32>
    %325 = vector.shape_cast %324 : vector<1x1x8xf32> to vector<1x8xf32>
    %326 = vector.extract_strided_slice %319 {offsets = [0, 1], sizes = [8, 8], strides = [1, 1]} : vector<8x10xf32> to vector<8x8xf32>
    %cst_240 = arith.constant dense<0.000000e+00> : vector<1x8xf32>
    %327 = tpu.matmul %325, %326, %cst_240 {dimension_numbers = #tpu.dot_dimension_numbers<[1], [0], [0], [1], [0, 0, 1, 1], [], []>} : vector<1x8xf32>, vector<8x8xf32>, vector<1x8xf32> -> vector<1x8xf32>
    %328 = arith.addf %323, %327 : vector<1x8xf32>
    %c2_241 = arith.constant 2 : index
    %c0_242 = arith.constant 0 : index
    %c0_243 = arith.constant 0 : index
    %329 = vector.load %arg10[%c2_241, %c0_242, %c0_243] : memref<3x1x8xf32, #tpu.memory_space<vmem>>, vector<1x1x8xf32>
    %330 = vector.shape_cast %329 : vector<1x1x8xf32> to vector<1x8xf32>
    %331 = vector.extract_strided_slice %319 {offsets = [0, 2], sizes = [8, 8], strides = [1, 1]} : vector<8x10xf32> to vector<8x8xf32>
    %cst_244 = arith.constant dense<0.000000e+00> : vector<1x8xf32>
    %332 = tpu.matmul %330, %331, %cst_244 {dimension_numbers = #tpu.dot_dimension_numbers<[1], [0], [0], [1], [0, 0, 1, 1], [], []>} : vector<1x8xf32>, vector<8x8xf32>, vector<1x8xf32> -> vector<1x8xf32>
    %333 = arith.addf %328, %332 : vector<1x8xf32>
    %c0_245 = arith.constant 0 : index
    %c0_246 = arith.constant 0 : index
    %334 = vector.load %arg11[%c0_245, %c0_246] : memref<1x1xf32, #tpu.memory_space<vmem>>, vector<1x1xf32>
    %335 = vector.broadcast %334 : vector<1x1xf32> to vector<1x8xf32>
    %336 = arith.addf %333, %335 : vector<1x8xf32>
    %cst_247 = arith.constant 2.000000e-01 : f32
    %337 = vector.broadcast %cst_247 : f32 to vector<1x8xf32>
    %338 = arith.mulf %337, %336 : vector<1x8xf32>
    %339 = arith.maximumf %336, %338 : vector<1x8xf32>
    %c1_248 = arith.constant 1 : index
    %c0_249 = arith.constant 0 : index
    %340 = vector.load %arg18[%c1_248, %c0_249] : memref<2x8xf32, #tpu.memory_space<vmem>>, vector<1x8xf32>
    tpu.vector_store %arg18[%c1_248, %c0_249], %339 {strides = array<i32>} : memref<2x8xf32, #tpu.memory_space<vmem>>, vector<1x8xf32>,
    %c1_250 = arith.constant 1 : index
    %c0_251 = arith.constant 0 : index
    %341 = vector.load %arg19[%c1_250, %c0_251] : memref<2x20xf32, #tpu.memory_space<vmem>>, vector<1x20xf32>
    tpu.vector_store %arg19[%c1_250, %c0_251], %299 {strides = array<i32>} : memref<2x20xf32, #tpu.memory_space<vmem>>, vector<1x20xf32>,
    %c1_252 = arith.constant 1 : index
    %c0_253 = arith.constant 0 : index
    %c0_254 = arith.constant 0 : index
    %342 = vector.load %arg20[%c1_252, %c0_253, %c0_254] : memref<2x4x30xf32, #tpu.memory_space<vmem>>, vector<1x4x30xf32>
    %343 = vector.shape_cast %342 : vector<1x4x30xf32> to vector<4x30xf32>
    %344 = vector.shape_cast %207 : vector<4x30xf32> to vector<1x4x30xf32>
    tpu.vector_store %arg20[%c1_252, %c0_253, %c0_254], %344 {strides = array<i32>} : memref<2x4x30xf32, #tpu.memory_space<vmem>>, vector<1x4x30xf32>,
    %c1_255 = arith.constant 1 : index
    %c0_256 = arith.constant 0 : index
    %c0_257 = arith.constant 0 : index
    %345 = vector.load %arg21[%c1_255, %c0_256, %c0_257] : memref<2x8x14xf32, #tpu.memory_space<vmem>>, vector<1x8x14xf32>
    %346 = vector.shape_cast %345 : vector<1x8x14xf32> to vector<8x14xf32>
    %347 = vector.shape_cast %235 : vector<8x14xf32> to vector<1x8x14xf32>
    tpu.vector_store %arg21[%c1_255, %c0_256, %c0_257], %347 {strides = array<i32>} : memref<2x8x14xf32, #tpu.memory_space<vmem>>, vector<1x8x14xf32>,
    %c1_258 = arith.constant 1 : index
    %c0_259 = arith.constant 0 : index
    %c0_260 = arith.constant 0 : index
    %348 = vector.load %arg22[%c1_258, %c0_259, %c0_260] : memref<2x32x12xf32, #tpu.memory_space<vmem>>, vector<1x32x12xf32>
    %349 = vector.shape_cast %348 : vector<1x32x12xf32> to vector<32x12xf32>
    %350 = vector.shape_cast %255 : vector<32x12xf32> to vector<1x32x12xf32>
    tpu.vector_store %arg22[%c1_258, %c0_259, %c0_260], %350 {strides = array<i32>} : memref<2x32x12xf32, #tpu.memory_space<vmem>>, vector<1x32x12xf32>,
    %c1_261 = arith.constant 1 : index
    %c0_262 = arith.constant 0 : index
    %c0_263 = arith.constant 0 : index
    %351 = vector.load %arg23[%c1_261, %c0_262, %c0_263] : memref<2x8x22xf32, #tpu.memory_space<vmem>>, vector<1x8x22xf32>
    %352 = vector.shape_cast %351 : vector<1x8x22xf32> to vector<8x22xf32>
    %353 = vector.shape_cast %279 : vector<8x22xf32> to vector<1x8x22xf32>
    tpu.vector_store %arg23[%c1_261, %c0_262, %c0_263], %353 {strides = array<i32>} : memref<2x8x22xf32, #tpu.memory_space<vmem>>, vector<1x8x22xf32>,
    %c1_264 = arith.constant 1 : index
    %c0_265 = arith.constant 0 : index
    %c0_266 = arith.constant 0 : index
    %354 = vector.load %arg24[%c1_264, %c0_265, %c0_266] : memref<2x1x20xf32, #tpu.memory_space<vmem>>, vector<1x1x20xf32>
    %355 = vector.shape_cast %354 : vector<1x1x20xf32> to vector<1x20xf32>
    %356 = vector.shape_cast %299 : vector<1x20xf32> to vector<1x1x20xf32>
    tpu.vector_store %arg24[%c1_264, %c0_265, %c0_266], %356 {strides = array<i32>} : memref<2x1x20xf32, #tpu.memory_space<vmem>>, vector<1x1x20xf32>,
    %c1_267 = arith.constant 1 : index
    %c0_268 = arith.constant 0 : index
    %c0_269 = arith.constant 0 : index
    %357 = vector.load %arg25[%c1_267, %c0_268, %c0_269] : memref<2x8x10xf32, #tpu.memory_space<vmem>>, vector<1x8x10xf32>
    %358 = vector.shape_cast %357 : vector<1x8x10xf32> to vector<8x10xf32>
    %359 = vector.shape_cast %319 : vector<8x10xf32> to vector<1x8x10xf32>
    tpu.vector_store %arg25[%c1_267, %c0_268, %c0_269], %359 {strides = array<i32>} : memref<2x8x10xf32, #tpu.memory_space<vmem>>, vector<1x8x10xf32>,
    %c1_270 = arith.constant 1 : index
    %c0_271 = arith.constant 0 : index
    %c0_272 = arith.constant 0 : index
    %360 = vector.load %arg26[%c1_270, %c0_271, %c0_272] : memref<2x1x8xf32, #tpu.memory_space<vmem>>, vector<1x1x8xf32>
    %361 = vector.shape_cast %360 : vector<1x1x8xf32> to vector<1x8xf32>
    %362 = vector.shape_cast %339 : vector<1x8xf32> to vector<1x1x8xf32>
    tpu.vector_store %arg26[%c1_270, %c0_271, %c0_272], %362 {strides = array<i32>} : memref<2x1x8xf32, #tpu.memory_space<vmem>>, vector<1x1x8xf32>,
    return
  }
}

</mosaic_0001>

<llo_original>
// kernel: tpu_custom_call.1
$region0: #{tpu_custom_call.1}
  #allocation0 [shape = 'u32[]', space=smem, size = 0x4, offset = 0x4, fixed_abs, tag = 'smem constant byte address 0x4 - core index']
  #allocation1 [shape = 'u32[144,128]{1,0:T(1,128)}', space=vmem, size = 0x12000, scoped, tag = 'internal scratch']
  #allocation2 [shape = 'f32[1,1]{1,0:T(1,128)S(1)}', space=vmem, size = 0x200, scoped, tag = 'scoped memory for tpu_custom_call.1']
  #allocation3 [shape = 'f32[1,1]{1,0:T(1,128)S(1)}', space=vmem, size = 0x200, scoped, tag = 'scoped memory for tpu_custom_call.1']
  %s0 = inlined_call_operand.vmem [shape: f32[2,8,32], index: 0, kind: input, shape index: {}]
  %s1 = inlined_call_operand.vmem [shape: f32[32,2], index: 1, kind: input, shape index: {}]
  %s2 = inlined_call_operand.vmem [shape: f32[3,4,8], index: 2, kind: input, shape index: {}]
  %s3 = inlined_call_operand.vmem [shape: f32[4,1], index: 3, kind: input, shape index: {}]
  %s4 = inlined_call_operand.vmem [shape: f32[3,8,4], index: 4, kind: input, shape index: {}]
  %s5 = inlined_call_operand.vmem [shape: f32[8,1], index: 5, kind: input, shape index: {}]
  %s6 = inlined_call_operand.vmem [shape: f32[3,32,8], index: 6, kind: input, shape index: {}]
  %s7 = inlined_call_operand.vmem [shape: f32[32,1], index: 7, kind: input, shape index: {}]
  %s8 = inlined_call_operand.vmem [shape: f32[3,8,32], index: 8, kind: input, shape index: {}]
  %s9 = inlined_call_operand.vmem [shape: f32[8,1], index: 9, kind: input, shape index: {}]
  %s10 = inlined_call_operand.vmem [shape: f32[3,1,8], index: 10, kind: input, shape index: {}]
  %s11 = inlined_call_operand.<no memory space> [shape: f32[1,1], index: 11, kind: input, shape index: {}]
  %s12 = inlined_call_operand.vmem [shape: f32[32,32], index: 12, kind: input, shape index: {}]
  %s13 = inlined_call_operand.vmem [shape: f32[32,1], index: 13, kind: input, shape index: {}]
  %s14 = inlined_call_operand.vmem [shape: f32[3,8,32], index: 14, kind: input, shape index: {}]
  %s15 = inlined_call_operand.vmem [shape: f32[8,1], index: 15, kind: input, shape index: {}]
  %s16 = inlined_call_operand.vmem [shape: f32[3,1,8], index: 16, kind: input, shape index: {}]
  %s17 = inlined_call_operand.<no memory space> [shape: f32[1,1], index: 17, kind: input, shape index: {}]
  %s18 = inlined_call_operand.hbm [shape: f32[2,8], index: 18, kind: output, shape index: {0}]
  %s19 = inlined_call_operand.hbm [shape: f32[2,20], index: 19, kind: output, shape index: {1}]
  %s20 = inlined_call_operand.hbm [shape: f32[2,4,30], index: 20, kind: output, shape index: {2}]
  %s21 = inlined_call_operand.hbm [shape: f32[2,8,14], index: 21, kind: output, shape index: {3}]
  %s22 = inlined_call_operand.vmem [shape: f32[2,32,12], index: 22, kind: output, shape index: {4}]
  %s23 = inlined_call_operand.hbm [shape: f32[2,8,22], index: 23, kind: output, shape index: {5}]
  %s24 = inlined_call_operand.hbm [shape: f32[2,1,20], index: 24, kind: output, shape index: {6}]
  %s25 = inlined_call_operand.hbm [shape: f32[2,8,10], index: 25, kind: output, shape index: {7}]
  %s26 = inlined_call_operand.hbm [shape: f32[2,1,8], index: 26, kind: output, shape index: {8}]
  %27 = xla_tuple %s18, %s19, %s20, %s21, %s22, %s23, %s24, %s25, %s26
  %s28 = sld [smem:[#allocation0]]
  $region146: #{tpu_custom_call.1} parent=0
    _
  %s30 = ssub.s32 1, %s28
  %s31 = scalar_select 0, %s30, %s28
  %v32 = vstv %s11
  %33 = vst [vmem:[#allocation2] sm:$0x1] %v32
  %v34 = vstv %s17
  %35 = vst [vmem:[#allocation3] sm:$0x1] %v34
  $region1: #{tpu_custom_call.1} parent=0
    #allocation4 [shape = 'u8[1024]{0}', space=vmem, size = 0x400, scoped, tag = 'output window, operand 0, single buffered']
    #allocation5 [shape = 's32[1]{0}', space=sflag, size = 0x4, scoped, tag = 'scoped memory for tpu_custom_call.1']
    #allocation6 [shape = 'u8[1024]{0}', space=vmem, size = 0x400, scoped, tag = 'output window, operand 1, single buffered']
    #allocation7 [shape = 's32[1]{0}', space=sflag, size = 0x4, scoped, tag = 'scoped memory for tpu_custom_call.1']
    #allocation8 [shape = 'u8[4096]{0}', space=vmem, size = 0x1000, scoped, tag = 'output window, operand 2, single buffered']
    #allocation9 [shape = 'u8[8192]{0}', space=vmem, size = 0x2000, scoped, tag = 'output window, operand 3, single buffered']
    #allocation10 [shape = 's32[1]{0}', space=sflag, size = 0x4, scoped, tag = 'scoped memory for tpu_custom_call.1']
    #allocation11 [shape = 'u8[8192]{0}', space=vmem, size = 0x2000, scoped, tag = 'output window, operand 5, single buffered']
    #allocation12 [shape = 'u8[1024]{0}', space=vmem, size = 0x400, scoped, tag = 'output window, operand 6, single buffered']
    #allocation13 [shape = 's32[1]{0}', space=sflag, size = 0x4, scoped, tag = 'scoped memory for tpu_custom_call.1']
    #allocation14 [shape = 'u8[8192]{0}', space=vmem, size = 0x2000, scoped, tag = 'output window, operand 7, single buffered']
    #allocation15 [shape = 'u8[1024]{0}', space=vmem, size = 0x400, scoped, tag = 'output window, operand 8, single buffered']
    #allocation16 [shape = 's32[1]{0}', space=sflag, size = 0x4, scoped, tag = 'scoped memory for tpu_custom_call.1']
    %36 = vsyncpa [#allocation5], 0
    %37 = vsyncpa [#allocation7], 0
    %38 = vsyncpa [#allocation10], 0
    %39 = vsyncpa [#allocation13], 0
    %40 = vsyncpa [#allocation16], 0
    // Predicated region
    $region2: #{tpu_custom_call.1} parent=1 // pred_check
      _
    $region3: #{tpu_custom_call.1} parent=1 // pred_check_branch
      %42 = sbr.rel (0) target = $region5
    $region4: #{tpu_custom_call.1} parent=1 // pred_region
      _
    $region5: #{tpu_custom_call.1} parent=1 // pred_fallthru
      _
    // Predicated region
    $region6: #{tpu_custom_call.1} parent=1 // pred_check
      _
    $region7: #{tpu_custom_call.1} parent=1 // pred_check_branch
      %44 = sbr.rel (0) target = $region9
    $region8: #{tpu_custom_call.1} parent=1 // pred_region
      _
    $region9: #{tpu_custom_call.1} parent=1 // pred_fallthru
      _
    // Predicated region
    $region10: #{tpu_custom_call.1} parent=1 // pred_check
      _
    $region11: #{tpu_custom_call.1} parent=1 // pred_check_branch
      %46 = sbr.rel (0) target = $region13
    $region12: #{tpu_custom_call.1} parent=1 // pred_region
      _
    $region13: #{tpu_custom_call.1} parent=1 // pred_fallthru
      _
    // Predicated region
    $region14: #{tpu_custom_call.1} parent=1 // pred_check
      _
    $region15: #{tpu_custom_call.1} parent=1 // pred_check_branch
      %48 = sbr.rel (0) target = $region17
    $region16: #{tpu_custom_call.1} parent=1 // pred_region
      _
    $region17: #{tpu_custom_call.1} parent=1 // pred_fallthru
      _
    // Predicated region
    $region18: #{tpu_custom_call.1} parent=1 // pred_check
      _
    $region19: #{tpu_custom_call.1} parent=1 // pred_check_branch
      %50 = sbr.rel (0) target = $region21
    $region20: #{tpu_custom_call.1} parent=1 // pred_region
      _
    $region21: #{tpu_custom_call.1} parent=1 // pred_fallthru
      _
    // Predicated region
    $region22: #{tpu_custom_call.1} parent=1 // pred_check
      _
    $region23: #{tpu_custom_call.1} parent=1 // pred_check_branch
      %52 = sbr.rel (0) target = $region25
    $region24: #{tpu_custom_call.1} parent=1 // pred_region
      _
    $region25: #{tpu_custom_call.1} parent=1 // pred_fallthru
      _
    // Predicated region
    $region26: #{tpu_custom_call.1} parent=1 // pred_check
      _
    $region27: #{tpu_custom_call.1} parent=1 // pred_check_branch
      %54 = sbr.rel (0) target = $region29
    $region28: #{tpu_custom_call.1} parent=1 // pred_region
      _
    $region29: #{tpu_custom_call.1} parent=1 // pred_fallthru
      _
    // Predicated region
    $region30: #{tpu_custom_call.1} parent=1 // pred_check
      _
    $region31: #{tpu_custom_call.1} parent=1 // pred_check_branch
      %56 = sbr.rel (0) target = $region33
    $region32: #{tpu_custom_call.1} parent=1 // pred_region
      _
    $region33: #{tpu_custom_call.1} parent=1 // pred_fallthru
      _
    // Predicated region
    $region34: #{tpu_custom_call.1} parent=1 // pred_check
      _
    $region35: #{tpu_custom_call.1} parent=1 // pred_check_branch
      %58 = sbr.rel (0) target = $region37
    $region36: #{tpu_custom_call.1} parent=1 // pred_region
      _
    $region37: #{tpu_custom_call.1} parent=1 // pred_fallthru
      _
    // Predicated region
    $region38: #{tpu_custom_call.1} parent=1 // pred_check
      _
    $region39: #{tpu_custom_call.1} parent=1 // pred_check_branch
      %60 = sbr.rel (0) target = $region41
    $region40: #{tpu_custom_call.1} parent=1 // pred_region
      _
    $region41: #{tpu_custom_call.1} parent=1 // pred_fallthru
      _
    // Predicated region
    $region42: #{tpu_custom_call.1} parent=1 // pred_check
      _
    $region43: #{tpu_custom_call.1} parent=1 // pred_check_branch
      %62 = sbr.rel (0) target = $region45
    $region44: #{tpu_custom_call.1} parent=1 // pred_region
      _
    $region45: #{tpu_custom_call.1} parent=1 // pred_fallthru
      _
    // Predicated region
    $region46: #{tpu_custom_call.1} parent=1 // pred_check
      _
    $region47: #{tpu_custom_call.1} parent=1 // pred_check_branch
      %64 = sbr.rel (0) target = $region49
    $region48: #{tpu_custom_call.1} parent=1 // pred_region
      _
    $region49: #{tpu_custom_call.1} parent=1 // pred_fallthru
      _
    // Predicated region
    $region50: #{tpu_custom_call.1} parent=1 // pred_check
      _
    $region51: #{tpu_custom_call.1} parent=1 // pred_check_branch
      %66 = sbr.rel (0) target = $region53
    $region52: #{tpu_custom_call.1} parent=1 // pred_region
      _
    $region53: #{tpu_custom_call.1} parent=1 // pred_fallthru
      _
    // Predicated region
    $region54: #{tpu_custom_call.1} parent=1 // pred_check
      _
    $region55: #{tpu_custom_call.1} parent=1 // pred_check_branch
      %68 = sbr.rel (0) target = $region57
    $region56: #{tpu_custom_call.1} parent=1 // pred_region
      _
    $region57: #{tpu_custom_call.1} parent=1 // pred_fallthru
      _
    // Predicated region
    $region58: #{tpu_custom_call.1} parent=1 // pred_check
      _
    $region59: #{tpu_custom_call.1} parent=1 // pred_check_branch
      %70 = sbr.rel (0) target = $region61
    $region60: #{tpu_custom_call.1} parent=1 // pred_region
      _
    $region61: #{tpu_custom_call.1} parent=1 // pred_fallthru
      _
    // Predicated region
    $region62: #{tpu_custom_call.1} parent=1 // pred_check
      _
    $region63: #{tpu_custom_call.1} parent=1 // pred_check_branch
      %72 = sbr.rel (0) target = $region65
    $region64: #{tpu_custom_call.1} parent=1 // pred_region
      _
    $region65: #{tpu_custom_call.1} parent=1 // pred_fallthru
      _
    // Predicated region
    $region66: #{tpu_custom_call.1} parent=1 // pred_check
      _
    $region67: #{tpu_custom_call.1} parent=1 // pred_check_branch
      %74 = sbr.rel (0) target = $region69
    $region68: #{tpu_custom_call.1} parent=1 // pred_region
      _
    $region69: #{tpu_custom_call.1} parent=1 // pred_fallthru
      _
    // Predicated region
    $region70: #{tpu_custom_call.1} parent=1 // pred_check
      _
    $region71: #{tpu_custom_call.1} parent=1 // pred_check_branch
      %76 = sbr.rel (0) target = $region73
    $region72: #{tpu_custom_call.1} parent=1 // pred_region
      _
    $region73: #{tpu_custom_call.1} parent=1 // pred_fallthru
      _
    %v77 = vld [vmem:[%s12] sm:$0xff]
    %v78 = vld [vmem:[%s12 + $0x8] sm:$0xff]
    %v79 = vld [vmem:[%s12 + $0x10] sm:$0xff]
    %v80 = vld [vmem:[%s12 + $0x18] sm:$0xff]
    %v81 = vld [vmem:[%s1] sm:$0xff]
    %v82 = vld [vmem:[%s1 + $0x8] sm:$0xff]
    %v83 = vld [vmem:[%s1 + $0x10] sm:$0xff]
    %v84 = vld [vmem:[%s1 + $0x18] sm:$0xff]
    %v85 = vld [vmem:[%s13] sm:$0xff]
    %v86 = vld [vmem:[%s13 + $0x8] sm:$0xff]
    %v87 = vld [vmem:[%s13 + $0x10] sm:$0xff]
    %v88 = vld [vmem:[%s13 + $0x18] sm:$0xff]
    %90 = vset.pattern.permute.xlu0 0
    %91 = vperm.xlu0 %90, %v85
    %v92 = vpop.permute.xlu0 %91
    %95 = vset.pattern.permute.xlu0 0
    %96 = vperm.xlu0 %95, %v86
    %v97 = vpop.permute.xlu0 %96
    %100 = vset.pattern.permute.xlu0 0
    %101 = vperm.xlu0 %100, %v87
    %v102 = vpop.permute.xlu0 %101
    %105 = vset.pattern.permute.xlu0 0
    %106 = vperm.xlu0 %105, %v88
    %v107 = vpop.permute.xlu0 %106
    %vm109 = vcmask 261120
    %v111 = vsel %vm109, %v77, 0
    %v114 = vsel %vm109, %v78, 0
    %v117 = vsel %vm109, %v79, 0
    %v120 = vsel %vm109, %v80, 0
    %122 = vmatprep.subr.mxu0 0.0
    %123 = vmatpush1.msra.mxu0 %v81
    %124 = vmatprep.subr.mxu0 0.0
    %125 = vmatpush1.msra.mxu0 %v82
    %126 = vmatprep.subr.mxu0 0.0
    %127 = vmatpush1.msra.mxu0 %v83
    %128 = vmatprep.subr.mxu0 0.0
    %129 = vmatpush1.msra.mxu0 %v84
    %130 = vmatprep.subr.mxu0 0.0
    %131 = vmatpush1.msra.mxu0 0.0
    %132 = vmatprep.subr.mxu0 0.0
    %133 = vmatpush1.msra.mxu0 0.0
    %134 = vmatprep.subr.mxu0 0.0
    %135 = vmatpush1.msra.mxu0 0.0
    %136 = vmatprep.subr.mxu0 0.0
    %137 = vmatpush1.msra.mxu0 0.0
    %138 = vmatprep.subr.mxu0 0.0
    %139 = vmatpush1.msra.mxu0 0.0
    %140 = vmatprep.subr.mxu0 0.0
    %141 = vmatpush1.msra.mxu0 0.0
    %142 = vmatprep.subr.mxu0 0.0
    %143 = vmatpush1.msra.mxu0 0.0
    %144 = vmatprep.subr.mxu0 0.0
    %145 = vmatpush1.msra.mxu0 0.0
    %146 = vmatprep.subr.mxu0 0.0
    %147 = vmatpush1.msra.mxu0 0.0
    %148 = vmatprep.subr.mxu0 0.0
    %149 = vmatpush1.msra.mxu0 0.0
    %150 = vmatprep.subr.mxu0 0.0
    %151 = vmatpush1.msra.mxu0 0.0
    %152 = vmatprep.subr.mxu0 0.0
    %153 = vmatpush1.msra.mxu0 0.0
    %154 = vmatprep.subr.mxu0 0.0
    %155 = vmatpush1.msra.mxu0 0.0
    %156 = vmatprep.subr.mxu0 0.0
    %157 = vmatpush1.msra.mxu0 0.0
    %158 = vmatprep.subr.mxu0 0.0
    %159 = vmatpush1.msra.mxu0 0.0
    %160 = vmatprep.subr.mxu0 0.0
    %161 = vmatpush1.msra.mxu0 0.0
    %162 = vmatprep.subr.mxu0 0.0
    %163 = vmatpush1.msra.mxu0 0.0
    %164 = vmatprep.subr.mxu0 0.0
    %165 = vmatpush1.msra.mxu0 0.0
    %166 = vmatprep.subr.mxu0 0.0
    %167 = vmatpush1.msra.mxu0 0.0
    %168 = vmatprep.subr.mxu0 0.0
    %169 = vmatpush1.msra.mxu0 0.0
    %170 = vmatprep.subr.mxu0 0.0
    %171 = vmatpush1.msra.mxu0 0.0
    %172 = vmatprep.subr.mxu0 0.0
    %173 = vmatpush1.msra.mxu0 0.0
    %174 = vmatprep.subr.mxu0 0.0
    %175 = vmatpush1.msra.mxu0 0.0
    %176 = vmatprep.subr.mxu0 0.0
    %177 = vmatpush1.msra.mxu0 0.0
    %178 = vmatprep.subr.mxu0 0.0
    %179 = vmatpush1.msra.mxu0 0.0
    %180 = vmatprep.subr.mxu0 0.0
    %181 = vmatpush1.msra.mxu0 0.0
    %182 = vmatprep.subr.mxu0 0.0
    %183 = vmatpush1.msra.mxu0 0.0
    %184 = vmatprep.subr.mxu0 0.0
    %185 = vmatpush1.msra.mxu0 0.0
    %186 = vmatprep.mubr.f32.mxu0 0.0
    %187 = vmatmul.mubr.f32.gmra.mrb[0].mxu0 %v111
    %v188 = vpop.f32.mrb[0].mxu0
    %v189 = vadd.f32 %v92, %v188
    %v190 = vpop.f32.mrb[0].mxu0
    %191 = vmatprep.mubr.f32.mxu0 0.0
    %192 = vmatmul.mubr.f32.gmra.mrb[0].mxu0 %v114
    %v193 = vpop.f32.mrb[0].mxu0
    %v194 = vadd.f32 %v97, %v193
    %v195 = vpop.f32.mrb[0].mxu0
    %196 = vmatprep.mubr.f32.mxu0 0.0
    %197 = vmatmul.mubr.f32.gmra.mrb[0].mxu0 %v117
    %v198 = vpop.f32.mrb[0].mxu0
    %v199 = vadd.f32 %v102, %v198
    %v200 = vpop.f32.mrb[0].mxu0
    %201 = vmatprep.mubr.f32.mxu0 0.0
    %202 = vmatmul.mubr.f32.gmra.mrb[0].mxu0 %v120
    %v203 = vpop.f32.mrb[0].mxu0
    %v204 = vadd.f32 %v107, %v203
    %v205 = vpop.f32.mrb[0].mxu0
    %206 = vdwg.mxu0
    %v207 = vmul.f32 %v189, 0.2
    %v208 = vmul.f32 %v194, 0.2
    %v209 = vmul.f32 %v199, 0.2
    %v210 = vmul.f32 %v204, 0.2
    %v211 = vmax.f32 %v189, %v207
    %v212 = vmax.f32 %v194, %v208
    %v213 = vmax.f32 %v199, %v209
    %v214 = vmax.f32 %v204, %v210
    %v215 = vld [vmem:[%s0] sm:$0xff]
    %v216 = vld [vmem:[%s2] sm:$0xf]
    %s217 = scalar_lea.vmem %s2, 4
    %v218 = vld [vmem:[%s217] sm:$0xf]
    %220 = vrot.lane.b32.xlu0 %v215, 127
    %v221 = vpop.permute.xlu0 %220
    %vm223 = vcmask 64512
    %v225 = vsel %vm223, %v218, 0
    %227 = vmatprep.subr.mxu0 0.0
    %228 = vmatpush1.msra.mxu0 %v221
    %229 = vmatprep.subr.mxu0 0.0
    %230 = vmatpush1.msra.mxu0 0.0
    %231 = vmatprep.subr.mxu0 0.0
    %232 = vmatpush1.msra.mxu0 0.0
    %233 = vmatprep.subr.mxu0 0.0
    %234 = vmatpush1.msra.mxu0 0.0
    %235 = vmatprep.subr.mxu0 0.0
    %236 = vmatpush1.msra.mxu0 0.0
    %237 = vmatprep.subr.mxu0 0.0
    %238 = vmatpush1.msra.mxu0 0.0
    %239 = vmatprep.subr.mxu0 0.0
    %240 = vmatpush1.msra.mxu0 0.0
    %241 = vmatprep.subr.mxu0 0.0
    %242 = vmatpush1.msra.mxu0 0.0
    %243 = vmatprep.subr.mxu0 0.0
    %244 = vmatpush1.msra.mxu0 0.0
    %245 = vmatprep.subr.mxu0 0.0
    %246 = vmatpush1.msra.mxu0 0.0
    %247 = vmatprep.subr.mxu0 0.0
    %248 = vmatpush1.msra.mxu0 0.0
    %249 = vmatprep.subr.mxu0 0.0
    %250 = vmatpush1.msra.mxu0 0.0
    %251 = vmatprep.subr.mxu0 0.0
    %252 = vmatpush1.msra.mxu0 0.0
    %253 = vmatprep.subr.mxu0 0.0
    %254 = vmatpush1.msra.mxu0 0.0
    %255 = vmatprep.subr.mxu0 0.0
    %256 = vmatpush1.msra.mxu0 0.0
    %257 = vmatprep.subr.mxu0 0.0
    %258 = vmatpush1.msra.mxu0 0.0
    %259 = vmatprep.subr.mxu0 0.0
    %260 = vmatpush1.msra.mxu0 0.0
    %261 = vmatprep.subr.mxu0 0.0
    %262 = vmatpush1.msra.mxu0 0.0
    %263 = vmatprep.subr.mxu0 0.0
    %264 = vmatpush1.msra.mxu0 0.0
    %265 = vmatprep.subr.mxu0 0.0
    %266 = vmatpush1.msra.mxu0 0.0
    %267 = vmatprep.subr.mxu0 0.0
    %268 = vmatpush1.msra.mxu0 0.0
    %269 = vmatprep.subr.mxu0 0.0
    %270 = vmatpush1.msra.mxu0 0.0
    %271 = vmatprep.subr.mxu0 0.0
    %272 = vmatpush1.msra.mxu0 0.0
    %273 = vmatprep.subr.mxu0 0.0
    %274 = vmatpush1.msra.mxu0 0.0
    %275 = vmatprep.subr.mxu0 0.0
    %276 = vmatpush1.msra.mxu0 0.0
    %277 = vmatprep.subr.mxu0 0.0
    %278 = vmatpush1.msra.mxu0 0.0
    %279 = vmatprep.subr.mxu0 0.0
    %280 = vmatpush1.msra.mxu0 0.0
    %281 = vmatprep.subr.mxu0 0.0
    %282 = vmatpush1.msra.mxu0 0.0
    %283 = vmatprep.subr.mxu0 0.0
    %284 = vmatpush1.msra.mxu0 0.0
    %285 = vmatprep.subr.mxu0 0.0
    %286 = vmatpush1.msra.mxu0 0.0
    %287 = vmatprep.subr.mxu0 0.0
    %288 = vmatpush1.msra.mxu0 0.0
    %289 = vmatprep.subr.mxu0 0.0
    %290 = vmatpush1.msra.mxu0 0.0
    %291 = vmatprep.mubr.f32.mxu0 0.0
    %292 = vmatmul.mubr.f32.gmra.mrb[0].mxu0 %v225
    %v293 = vpop.f32.mrb[0].mxu0
    %v294 = vadd.f32 0.0, %v293
    %v295 = vpop.f32.mrb[0].mxu0
    %296 = vdwg.mxu0
    %v298 = vsel %vm223, %v216, 0
    %300 = vmatprep.subr.mxu0 0.0
    %301 = vmatpush1.msra.mxu0 %v215
    %302 = vmatprep.subr.mxu0 0.0
    %303 = vmatpush1.msra.mxu0 0.0
    %304 = vmatprep.subr.mxu0 0.0
    %305 = vmatpush1.msra.mxu0 0.0
    %306 = vmatprep.subr.mxu0 0.0
    %307 = vmatpush1.msra.mxu0 0.0
    %308 = vmatprep.subr.mxu0 0.0
    %309 = vmatpush1.msra.mxu0 0.0
    %310 = vmatprep.subr.mxu0 0.0
    %311 = vmatpush1.msra.mxu0 0.0
    %312 = vmatprep.subr.mxu0 0.0
    %313 = vmatpush1.msra.mxu0 0.0
    %314 = vmatprep.subr.mxu0 0.0
    %315 = vmatpush1.msra.mxu0 0.0
    %316 = vmatprep.subr.mxu0 0.0
    %317 = vmatpush1.msra.mxu0 0.0
    %318 = vmatprep.subr.mxu0 0.0
    %319 = vmatpush1.msra.mxu0 0.0
    %320 = vmatprep.subr.mxu0 0.0
    %321 = vmatpush1.msra.mxu0 0.0
    %322 = vmatprep.subr.mxu0 0.0
    %323 = vmatpush1.msra.mxu0 0.0
    %324 = vmatprep.subr.mxu0 0.0
    %325 = vmatpush1.msra.mxu0 0.0
    %326 = vmatprep.subr.mxu0 0.0
    %327 = vmatpush1.msra.mxu0 0.0
    %328 = vmatprep.subr.mxu0 0.0
    %329 = vmatpush1.msra.mxu0 0.0
    %330 = vmatprep.subr.mxu0 0.0
    %331 = vmatpush1.msra.mxu0 0.0
    %332 = vmatprep.subr.mxu0 0.0
    %333 = vmatpush1.msra.mxu0 0.0
    %334 = vmatprep.subr.mxu0 0.0
    %335 = vmatpush1.msra.mxu0 0.0
    %336 = vmatprep.subr.mxu0 0.0
    %337 = vmatpush1.msra.mxu0 0.0
    %338 = vmatprep.subr.mxu0 0.0
    %339 = vmatpush1.msra.mxu0 0.0
    %340 = vmatprep.subr.mxu0 0.0
    %341 = vmatpush1.msra.mxu0 0.0
    %342 = vmatprep.subr.mxu0 0.0
    %343 = vmatpush1.msra.mxu0 0.0
    %344 = vmatprep.subr.mxu0 0.0
    %345 = vmatpush1.msra.mxu0 0.0
    %346 = vmatprep.subr.mxu0 0.0
    %347 = vmatpush1.msra.mxu0 0.0
    %348 = vmatprep.subr.mxu0 0.0
    %349 = vmatpush1.msra.mxu0 0.0
    %350 = vmatprep.subr.mxu0 0.0
    %351 = vmatpush1.msra.mxu0 0.0
    %352 = vmatprep.subr.mxu0 0.0
    %353 = vmatpush1.msra.mxu0 0.0
    %354 = vmatprep.subr.mxu0 0.0
    %355 = vmatpush1.msra.mxu0 0.0
    %356 = vmatprep.subr.mxu0 0.0
    %357 = vmatpush1.msra.mxu0 0.0
    %358 = vmatprep.subr.mxu0 0.0
    %359 = vmatpush1.msra.mxu0 0.0
    %360 = vmatprep.subr.mxu0 0.0
    %361 = vmatpush1.msra.mxu0 0.0
    %362 = vmatprep.subr.mxu0 0.0
    %363 = vmatpush1.msra.mxu0 0.0
    %364 = vmatprep.mubr.f32.mxu0 0.0
    %365 = vmatmul.mubr.f32.gmra.mrb[0].mxu0 %v298
    %v366 = vpop.f32.mrb[0].mxu0
    %v367 = vadd.f32 %v294, %v366
    %v368 = vpop.f32.mrb[0].mxu0
    %369 = vdwg.mxu0
    %s370 = scalar_lea.vmem %s2, 8
    %v371 = vld [vmem:[%s370] sm:$0xf]
    %372 = vrot.lane.b32.xlu0 %v215, 126
    %v373 = vpop.permute.xlu0 %372
    %v376 = vsel %vm223, %v371, 0
    %378 = vmatprep.subr.mxu0 0.0
    %379 = vmatpush1.msra.mxu0 %v373
    %380 = vmatprep.subr.mxu0 0.0
    %381 = vmatpush1.msra.mxu0 0.0
    %382 = vmatprep.subr.mxu0 0.0
    %383 = vmatpush1.msra.mxu0 0.0
    %384 = vmatprep.subr.mxu0 0.0
    %385 = vmatpush1.msra.mxu0 0.0
    %386 = vmatprep.subr.mxu0 0.0
    %387 = vmatpush1.msra.mxu0 0.0
    %388 = vmatprep.subr.mxu0 0.0
    %389 = vmatpush1.msra.mxu0 0.0
    %390 = vmatprep.subr.mxu0 0.0
    %391 = vmatpush1.msra.mxu0 0.0
    %392 = vmatprep.subr.mxu0 0.0
    %393 = vmatpush1.msra.mxu0 0.0
    %394 = vmatprep.subr.mxu0 0.0
    %395 = vmatpush1.msra.mxu0 0.0
    %396 = vmatprep.subr.mxu0 0.0
    %397 = vmatpush1.msra.mxu0 0.0
    %398 = vmatprep.subr.mxu0 0.0
    %399 = vmatpush1.msra.mxu0 0.0
    %400 = vmatprep.subr.mxu0 0.0
    %401 = vmatpush1.msra.mxu0 0.0
    %402 = vmatprep.subr.mxu0 0.0
    %403 = vmatpush1.msra.mxu0 0.0
    %404 = vmatprep.subr.mxu0 0.0
    %405 = vmatpush1.msra.mxu0 0.0
    %406 = vmatprep.subr.mxu0 0.0
    %407 = vmatpush1.msra.mxu0 0.0
    %408 = vmatprep.subr.mxu0 0.0
    %409 = vmatpush1.msra.mxu0 0.0
    %410 = vmatprep.subr.mxu0 0.0
    %411 = vmatpush1.msra.mxu0 0.0
    %412 = vmatprep.subr.mxu0 0.0
    %413 = vmatpush1.msra.mxu0 0.0
    %414 = vmatprep.subr.mxu0 0.0
    %415 = vmatpush1.msra.mxu0 0.0
    %416 = vmatprep.subr.mxu0 0.0
    %417 = vmatpush1.msra.mxu0 0.0
    %418 = vmatprep.subr.mxu0 0.0
    %419 = vmatpush1.msra.mxu0 0.0
    %420 = vmatprep.subr.mxu0 0.0
    %421 = vmatpush1.msra.mxu0 0.0
    %422 = vmatprep.subr.mxu0 0.0
    %423 = vmatpush1.msra.mxu0 0.0
    %424 = vmatprep.subr.mxu0 0.0
    %425 = vmatpush1.msra.mxu0 0.0
    %426 = vmatprep.subr.mxu0 0.0
    %427 = vmatpush1.msra.mxu0 0.0
    %428 = vmatprep.subr.mxu0 0.0
    %429 = vmatpush1.msra.mxu0 0.0
    %430 = vmatprep.subr.mxu0 0.0
    %431 = vmatpush1.msra.mxu0 0.0
    %432 = vmatprep.subr.mxu0 0.0
    %433 = vmatpush1.msra.mxu0 0.0
    %434 = vmatprep.subr.mxu0 0.0
    %435 = vmatpush1.msra.mxu0 0.0
    %436 = vmatprep.subr.mxu0 0.0
    %437 = vmatpush1.msra.mxu0 0.0
    %438 = vmatprep.subr.mxu0 0.0
    %439 = vmatpush1.msra.mxu0 0.0
    %440 = vmatprep.subr.mxu0 0.0
    %441 = vmatpush1.msra.mxu0 0.0
    %442 = vmatprep.mubr.f32.mxu0 0.0
    %443 = vmatmul.mubr.f32.gmra.mrb[0].mxu0 %v376
    %v444 = vpop.f32.mrb[0].mxu0
    %v445 = vadd.f32 0.0, %v444
    %v446 = vpop.f32.mrb[0].mxu0
    %447 = vdwg.mxu0
    %v448 = vadd.f32 %v367, %v445
    %v449 = vld [vmem:[%s3] sm:$0xf]
    %451 = vset.pattern.permute.xlu0 0
    %452 = vperm.xlu0 %451, %v449
    %v453 = vpop.permute.xlu0 %452
    %v455 = vadd.f32 %v448, %v453
    %v456 = vmul.f32 %v455, 0.2
    %v457 = vmax.f32 %v455, %v456
    %v458 = vld [vmem:[%s4] sm:$0xff]
    %s459 = scalar_lea.vmem %s4, 8
    %v460 = vld [vmem:[%s459] sm:$0xff]
    %462 = vrot.lane.b32.xlu0 %v457, 127
    %v463 = vpop.permute.xlu0 %462
    %vm464 = vcmask 31744
    %v466 = vsel %vm464, %v460, 0
    %vm468 = vcmask 1043456
    %v469 = vsel %vm468, %v463, 0
    %471 = vmatprep.subr.mxu0 0.0
    %472 = vmatpush1.msra.mxu0 %v469
    %473 = vmatprep.subr.mxu0 0.0
    %474 = vmatpush1.msra.mxu0 0.0
    %475 = vmatprep.subr.mxu0 0.0
    %476 = vmatpush1.msra.mxu0 0.0
    %477 = vmatprep.subr.mxu0 0.0
    %478 = vmatpush1.msra.mxu0 0.0
    %479 = vmatprep.subr.mxu0 0.0
    %480 = vmatpush1.msra.mxu0 0.0
    %481 = vmatprep.subr.mxu0 0.0
    %482 = vmatpush1.msra.mxu0 0.0
    %483 = vmatprep.subr.mxu0 0.0
    %484 = vmatpush1.msra.mxu0 0.0
    %485 = vmatprep.subr.mxu0 0.0
    %486 = vmatpush1.msra.mxu0 0.0
    %487 = vmatprep.subr.mxu0 0.0
    %488 = vmatpush1.msra.mxu0 0.0
    %489 = vmatprep.subr.mxu0 0.0
    %490 = vmatpush1.msra.mxu0 0.0
    %491 = vmatprep.subr.mxu0 0.0
    %492 = vmatpush1.msra.mxu0 0.0
    %493 = vmatprep.subr.mxu0 0.0
    %494 = vmatpush1.msra.mxu0 0.0
    %495 = vmatprep.subr.mxu0 0.0
    %496 = vmatpush1.msra.mxu0 0.0
    %497 = vmatprep.subr.mxu0 0.0
    %498 = vmatpush1.msra.mxu0 0.0
    %499 = vmatprep.subr.mxu0 0.0
    %500 = vmatpush1.msra.mxu0 0.0
    %501 = vmatprep.subr.mxu0 0.0
    %502 = vmatpush1.msra.mxu0 0.0
    %503 = vmatprep.subr.mxu0 0.0
    %504 = vmatpush1.msra.mxu0 0.0
    %505 = vmatprep.subr.mxu0 0.0
    %506 = vmatpush1.msra.mxu0 0.0
    %507 = vmatprep.subr.mxu0 0.0
    %508 = vmatpush1.msra.mxu0 0.0
    %509 = vmatprep.subr.mxu0 0.0
    %510 = vmatpush1.msra.mxu0 0.0
    %511 = vmatprep.subr.mxu0 0.0
    %512 = vmatpush1.msra.mxu0 0.0
    %513 = vmatprep.subr.mxu0 0.0
    %514 = vmatpush1.msra.mxu0 0.0
    %515 = vmatprep.subr.mxu0 0.0
    %516 = vmatpush1.msra.mxu0 0.0
    %517 = vmatprep.subr.mxu0 0.0
    %518 = vmatpush1.msra.mxu0 0.0
    %519 = vmatprep.subr.mxu0 0.0
    %520 = vmatpush1.msra.mxu0 0.0
    %521 = vmatprep.subr.mxu0 0.0
    %522 = vmatpush1.msra.mxu0 0.0
    %523 = vmatprep.subr.mxu0 0.0
    %524 = vmatpush1.msra.mxu0 0.0
    %525 = vmatprep.subr.mxu0 0.0
    %526 = vmatpush1.msra.mxu0 0.0
    %527 = vmatprep.subr.mxu0 0.0
    %528 = vmatpush1.msra.mxu0 0.0
    %529 = vmatprep.subr.mxu0 0.0
    %530 = vmatpush1.msra.mxu0 0.0
    %531 = vmatprep.subr.mxu0 0.0
    %532 = vmatpush1.msra.mxu0 0.0
    %533 = vmatprep.subr.mxu0 0.0
    %534 = vmatpush1.msra.mxu0 0.0
    %535 = vmatprep.mubr.f32.mxu0 0.0
    %536 = vmatmul.mubr.f32.gmra.mrb[0].mxu0 %v466
    %v537 = vpop.f32.mrb[0].mxu0
    %v538 = vadd.f32 0.0, %v537
    %v539 = vpop.f32.mrb[0].mxu0
    %540 = vdwg.mxu0
    %v542 = vsel %vm464, %v458, 0
    %v544 = vsel %vm468, %v457, 0
    %546 = vmatprep.subr.mxu0 0.0
    %547 = vmatpush1.msra.mxu0 %v544
    %548 = vmatprep.subr.mxu0 0.0
    %549 = vmatpush1.msra.mxu0 0.0
    %550 = vmatprep.subr.mxu0 0.0
    %551 = vmatpush1.msra.mxu0 0.0
    %552 = vmatprep.subr.mxu0 0.0
    %553 = vmatpush1.msra.mxu0 0.0
    %554 = vmatprep.subr.mxu0 0.0
    %555 = vmatpush1.msra.mxu0 0.0
    %556 = vmatprep.subr.mxu0 0.0
    %557 = vmatpush1.msra.mxu0 0.0
    %558 = vmatprep.subr.mxu0 0.0
    %559 = vmatpush1.msra.mxu0 0.0
    %560 = vmatprep.subr.mxu0 0.0
    %561 = vmatpush1.msra.mxu0 0.0
    %562 = vmatprep.subr.mxu0 0.0
    %563 = vmatpush1.msra.mxu0 0.0
    %564 = vmatprep.subr.mxu0 0.0
    %565 = vmatpush1.msra.mxu0 0.0
    %566 = vmatprep.subr.mxu0 0.0
    %567 = vmatpush1.msra.mxu0 0.0
    %568 = vmatprep.subr.mxu0 0.0
    %569 = vmatpush1.msra.mxu0 0.0
    %570 = vmatprep.subr.mxu0 0.0
    %571 = vmatpush1.msra.mxu0 0.0
    %572 = vmatprep.subr.mxu0 0.0
    %573 = vmatpush1.msra.mxu0 0.0
    %574 = vmatprep.subr.mxu0 0.0
    %575 = vmatpush1.msra.mxu0 0.0
    %576 = vmatprep.subr.mxu0 0.0
    %577 = vmatpush1.msra.mxu0 0.0
    %578 = vmatprep.subr.mxu0 0.0
    %579 = vmatpush1.msra.mxu0 0.0
    %580 = vmatprep.subr.mxu0 0.0
    %581 = vmatpush1.msra.mxu0 0.0
    %582 = vmatprep.subr.mxu0 0.0
    %583 = vmatpush1.msra.mxu0 0.0
    %584 = vmatprep.subr.mxu0 0.0
    %585 = vmatpush1.msra.mxu0 0.0
    %586 = vmatprep.subr.mxu0 0.0
    %587 = vmatpush1.msra.mxu0 0.0
    %588 = vmatprep.subr.mxu0 0.0
    %589 = vmatpush1.msra.mxu0 0.0
    %590 = vmatprep.subr.mxu0 0.0
    %591 = vmatpush1.msra.mxu0 0.0
    %592 = vmatprep.subr.mxu0 0.0
    %593 = vmatpush1.msra.mxu0 0.0
    %594 = vmatprep.subr.mxu0 0.0
    %595 = vmatpush1.msra.mxu0 0.0
    %596 = vmatprep.subr.mxu0 0.0
    %597 = vmatpush1.msra.mxu0 0.0
    %598 = vmatprep.subr.mxu0 0.0
    %599 = vmatpush1.msra.mxu0 0.0
    %600 = vmatprep.subr.mxu0 0.0
    %601 = vmatpush1.msra.mxu0 0.0
    %602 = vmatprep.subr.mxu0 0.0
    %603 = vmatpush1.msra.mxu0 0.0
    %604 = vmatprep.subr.mxu0 0.0
    %605 = vmatpush1.msra.mxu0 0.0
    %606 = vmatprep.subr.mxu0 0.0
    %607 = vmatpush1.msra.mxu0 0.0
    %608 = vmatprep.subr.mxu0 0.0
    %609 = vmatpush1.msra.mxu0 0.0
    %610 = vmatprep.mubr.f32.mxu0 0.0
    %611 = vmatmul.mubr.f32.gmra.mrb[0].mxu0 %v542
    %v612 = vpop.f32.mrb[0].mxu0
    %v613 = vadd.f32 %v538, %v612
    %v614 = vpop.f32.mrb[0].mxu0
    %615 = vdwg.mxu0
    %s616 = scalar_lea.vmem %s4, 16
    %v617 = vld [vmem:[%s616] sm:$0xff]
    %618 = vrot.lane.b32.xlu0 %v457, 126
    %v619 = vpop.permute.xlu0 %618
    %v621 = vsel %vm464, %v617, 0
    %v623 = vsel %vm468, %v619, 0
    %625 = vmatprep.subr.mxu0 0.0
    %626 = vmatpush1.msra.mxu0 %v623
    %627 = vmatprep.subr.mxu0 0.0
    %628 = vmatpush1.msra.mxu0 0.0
    %629 = vmatprep.subr.mxu0 0.0
    %630 = vmatpush1.msra.mxu0 0.0
    %631 = vmatprep.subr.mxu0 0.0
    %632 = vmatpush1.msra.mxu0 0.0
    %633 = vmatprep.subr.mxu0 0.0
    %634 = vmatpush1.msra.mxu0 0.0
    %635 = vmatprep.subr.mxu0 0.0
    %636 = vmatpush1.msra.mxu0 0.0
    %637 = vmatprep.subr.mxu0 0.0
    %638 = vmatpush1.msra.mxu0 0.0
    %639 = vmatprep.subr.mxu0 0.0
    %640 = vmatpush1.msra.mxu0 0.0
    %641 = vmatprep.subr.mxu0 0.0
    %642 = vmatpush1.msra.mxu0 0.0
    %643 = vmatprep.subr.mxu0 0.0
    %644 = vmatpush1.msra.mxu0 0.0
    %645 = vmatprep.subr.mxu0 0.0
    %646 = vmatpush1.msra.mxu0 0.0
    %647 = vmatprep.subr.mxu0 0.0
    %648 = vmatpush1.msra.mxu0 0.0
    %649 = vmatprep.subr.mxu0 0.0
    %650 = vmatpush1.msra.mxu0 0.0
    %651 = vmatprep.subr.mxu0 0.0
    %652 = vmatpush1.msra.mxu0 0.0
    %653 = vmatprep.subr.mxu0 0.0
    %654 = vmatpush1.msra.mxu0 0.0
    %655 = vmatprep.subr.mxu0 0.0
    %656 = vmatpush1.msra.mxu0 0.0
    %657 = vmatprep.subr.mxu0 0.0
    %658 = vmatpush1.msra.mxu0 0.0
    %659 = vmatprep.subr.mxu0 0.0
    %660 = vmatpush1.msra.mxu0 0.0
    %661 = vmatprep.subr.mxu0 0.0
    %662 = vmatpush1.msra.mxu0 0.0
    %663 = vmatprep.subr.mxu0 0.0
    %664 = vmatpush1.msra.mxu0 0.0
    %665 = vmatprep.subr.mxu0 0.0
    %666 = vmatpush1.msra.mxu0 0.0
    %667 = vmatprep.subr.mxu0 0.0
    %668 = vmatpush1.msra.mxu0 0.0
    %669 = vmatprep.subr.mxu0 0.0
    %670 = vmatpush1.msra.mxu0 0.0
    %671 = vmatprep.subr.mxu0 0.0
    %672 = vmatpush1.msra.mxu0 0.0
    %673 = vmatprep.subr.mxu0 0.0
    %674 = vmatpush1.msra.mxu0 0.0
    %675 = vmatprep.subr.mxu0 0.0
    %676 = vmatpush1.msra.mxu0 0.0
    %677 = vmatprep.subr.mxu0 0.0
    %678 = vmatpush1.msra.mxu0 0.0
    %679 = vmatprep.subr.mxu0 0.0
    %680 = vmatpush1.msra.mxu0 0.0
    %681 = vmatprep.subr.mxu0 0.0
    %682 = vmatpush1.msra.mxu0 0.0
    %683 = vmatprep.subr.mxu0 0.0
    %684 = vmatpush1.msra.mxu0 0.0
    %685 = vmatprep.subr.mxu0 0.0
    %686 = vmatpush1.msra.mxu0 0.0
    %687 = vmatprep.subr.mxu0 0.0
    %688 = vmatpush1.msra.mxu0 0.0
    %689 = vmatprep.mubr.f32.mxu0 0.0
    %690 = vmatmul.mubr.f32.gmra.mrb[0].mxu0 %v621
    %v691 = vpop.f32.mrb[0].mxu0
    %v692 = vadd.f32 0.0, %v691
    %v693 = vpop.f32.mrb[0].mxu0
    %694 = vdwg.mxu0
    %v695 = vadd.f32 %v613, %v692
    %v696 = vlaneseq
    %v697 = vshrl.u32 %v696, 7
    %v698 = vadd.s32 %v697, 8
    %v699 = vadd.s32 %v697, 16
    %v700 = vadd.s32 %v697, 24
    %v701 = vlaneseq
    %v702 = vand.u32 %v701, 127
    %v703 = vmul.u32 %v702, 2
    %vm704 = vcmp.eq.s32.totalorder %v697, %v703
    %vm705 = vcmp.eq.s32.totalorder %v698, %v703
    %vm706 = vcmp.eq.s32.totalorder %v699, %v703
    %vm707 = vcmp.eq.s32.totalorder %v700, %v703
    %v708 = vsel %vm704, 1, 0
    %v709 = vsel %vm705, 1, 0
    %v710 = vsel %vm706, 1, 0
    %v711 = vsel %vm707, 1, 0
    %v712 = vcvt.s32.f32 %v708
    %v713 = vcvt.s32.f32 %v709
    %v714 = vcvt.s32.f32 %v710
    %v715 = vcvt.s32.f32 %v711
    %v716 = vld [vmem:[%s5] sm:$0xff]
    %718 = vset.pattern.permute.xlu0 0
    %719 = vperm.xlu0 %718, %v716
    %v720 = vpop.permute.xlu0 %719
    %vm722 = vcmask 228352
    %v724 = vsel %vm722, %v695, 0
    %v727 = vsel %vm468, %v715, 0
    %729 = vmatprep.subr.mxu0 0.0
    %730 = vmatpush1.msra.mxu0 %v712
    %731 = vmatprep.subr.mxu0 0.0
    %732 = vmatpush1.msra.mxu0 %v713
    %733 = vmatprep.subr.mxu0 0.0
    %734 = vmatpush1.msra.mxu0 %v714
    %735 = vmatprep.subr.mxu0 0.0
    %736 = vmatpush1.msra.mxu0 %v727
    %737 = vmatprep.subr.mxu0 0.0
    %738 = vmatpush1.msra.mxu0 0.0
    %739 = vmatprep.subr.mxu0 0.0
    %740 = vmatpush1.msra.mxu0 0.0
    %741 = vmatprep.subr.mxu0 0.0
    %742 = vmatpush1.msra.mxu0 0.0
    %743 = vmatprep.subr.mxu0 0.0
    %744 = vmatpush1.msra.mxu0 0.0
    %745 = vmatprep.subr.mxu0 0.0
    %746 = vmatpush1.msra.mxu0 0.0
    %747 = vmatprep.subr.mxu0 0.0
    %748 = vmatpush1.msra.mxu0 0.0
    %749 = vmatprep.subr.mxu0 0.0
    %750 = vmatpush1.msra.mxu0 0.0
    %751 = vmatprep.subr.mxu0 0.0
    %752 = vmatpush1.msra.mxu0 0.0
    %753 = vmatprep.subr.mxu0 0.0
    %754 = vmatpush1.msra.mxu0 0.0
    %755 = vmatprep.subr.mxu0 0.0
    %756 = vmatpush1.msra.mxu0 0.0
    %757 = vmatprep.subr.mxu0 0.0
    %758 = vmatpush1.msra.mxu0 0.0
    %759 = vmatprep.subr.mxu0 0.0
    %760 = vmatpush1.msra.mxu0 0.0
    %761 = vmatprep.subr.mxu0 0.0
    %762 = vmatpush1.msra.mxu0 0.0
    %763 = vmatprep.subr.mxu0 0.0
    %764 = vmatpush1.msra.mxu0 0.0
    %765 = vmatprep.subr.mxu0 0.0
    %766 = vmatpush1.msra.mxu0 0.0
    %767 = vmatprep.subr.mxu0 0.0
    %768 = vmatpush1.msra.mxu0 0.0
    %769 = vmatprep.subr.mxu0 0.0
    %770 = vmatpush1.msra.mxu0 0.0
    %771 = vmatprep.subr.mxu0 0.0
    %772 = vmatpush1.msra.mxu0 0.0
    %773 = vmatprep.subr.mxu0 0.0
    %774 = vmatpush1.msra.mxu0 0.0
    %775 = vmatprep.subr.mxu0 0.0
    %776 = vmatpush1.msra.mxu0 0.0
    %777 = vmatprep.subr.mxu0 0.0
    %778 = vmatpush1.msra.mxu0 0.0
    %779 = vmatprep.subr.mxu0 0.0
    %780 = vmatpush1.msra.mxu0 0.0
    %781 = vmatprep.subr.mxu0 0.0
    %782 = vmatpush1.msra.mxu0 0.0
    %783 = vmatprep.subr.mxu0 0.0
    %784 = vmatpush1.msra.mxu0 0.0
    %785 = vmatprep.subr.mxu0 0.0
    %786 = vmatpush1.msra.mxu0 0.0
    %787 = vmatprep.subr.mxu0 0.0
    %788 = vmatpush1.msra.mxu0 0.0
    %789 = vmatprep.subr.mxu0 0.0
    %790 = vmatpush1.msra.mxu0 0.0
    %791 = vmatprep.subr.mxu0 0.0
    %792 = vmatpush1.msra.mxu0 0.0
    %793 = vmatprep.mubr.f32.mxu0 0.0
    %794 = vmatmul.mubr.f32.gmra.mrb[0].mxu0 %v724
    %v795 = vpop.f32.mrb[0].mxu0
    %v796 = vadd.f32 %v720, %v795
    %v797 = vpop.f32.mrb[0].mxu0
    %798 = vdwg.mxu0
    %v799 = vmul.f32 %v796, 0.2
    %v800 = vmax.f32 %v796, %v799
    %v801 = vld [vmem:[%s6] sm:$0xff]
    %v802 = vld [vmem:[%s6 + $0x8] sm:$0xff]
    %v803 = vld [vmem:[%s6 + $0x10] sm:$0xff]
    %v804 = vld [vmem:[%s6 + $0x18] sm:$0xff]
    %s805 = scalar_lea.vmem %s6, 32
    %v806 = vld [vmem:[%s805] sm:$0xff]
    %v807 = vld [vmem:[%s805 + $0x8] sm:$0xff]
    %v808 = vld [vmem:[%s805 + $0x10] sm:$0xff]
    %v809 = vld [vmem:[%s805 + $0x18] sm:$0xff]
    %811 = vrot.lane.b32.xlu0 %v800, 127
    %v812 = vpop.permute.xlu0 %811
    %v815 = vsel %vm223, %v806, 0
    %v818 = vsel %vm223, %v807, 0
    %v821 = vsel %vm223, %v808, 0
    %v824 = vsel %vm223, %v809, 0
    %826 = vmatprep.subr.mxu0 0.0
    %827 = vmatpush1.msra.mxu0 %v812
    %828 = vmatprep.subr.mxu0 0.0
    %829 = vmatpush1.msra.mxu0 0.0
    %830 = vmatprep.subr.mxu0 0.0
    %831 = vmatpush1.msra.mxu0 0.0
    %832 = vmatprep.subr.mxu0 0.0
    %833 = vmatpush1.msra.mxu0 0.0
    %834 = vmatprep.subr.mxu0 0.0
    %835 = vmatpush1.msra.mxu0 0.0
    %836 = vmatprep.subr.mxu0 0.0
    %837 = vmatpush1.msra.mxu0 0.0
    %838 = vmatprep.subr.mxu0 0.0
    %839 = vmatpush1.msra.mxu0 0.0
    %840 = vmatprep.subr.mxu0 0.0
    %841 = vmatpush1.msra.mxu0 0.0
    %842 = vmatprep.subr.mxu0 0.0
    %843 = vmatpush1.msra.mxu0 0.0
    %844 = vmatprep.subr.mxu0 0.0
    %845 = vmatpush1.msra.mxu0 0.0
    %846 = vmatprep.subr.mxu0 0.0
    %847 = vmatpush1.msra.mxu0 0.0
    %848 = vmatprep.subr.mxu0 0.0
    %849 = vmatpush1.msra.mxu0 0.0
    %850 = vmatprep.subr.mxu0 0.0
    %851 = vmatpush1.msra.mxu0 0.0
    %852 = vmatprep.subr.mxu0 0.0
    %853 = vmatpush1.msra.mxu0 0.0
    %854 = vmatprep.subr.mxu0 0.0
    %855 = vmatpush1.msra.mxu0 0.0
    %856 = vmatprep.subr.mxu0 0.0
    %857 = vmatpush1.msra.mxu0 0.0
    %858 = vmatprep.subr.mxu0 0.0
    %859 = vmatpush1.msra.mxu0 0.0
    %860 = vmatprep.subr.mxu0 0.0
    %861 = vmatpush1.msra.mxu0 0.0
    %862 = vmatprep.subr.mxu0 0.0
    %863 = vmatpush1.msra.mxu0 0.0
    %864 = vmatprep.subr.mxu0 0.0
    %865 = vmatpush1.msra.mxu0 0.0
    %866 = vmatprep.subr.mxu0 0.0
    %867 = vmatpush1.msra.mxu0 0.0
    %868 = vmatprep.subr.mxu0 0.0
    %869 = vmatpush1.msra.mxu0 0.0
    %870 = vmatprep.subr.mxu0 0.0
    %871 = vmatpush1.msra.mxu0 0.0
    %872 = vmatprep.subr.mxu0 0.0
    %873 = vmatpush1.msra.mxu0 0.0
    %874 = vmatprep.subr.mxu0 0.0
    %875 = vmatpush1.msra.mxu0 0.0
    %876 = vmatprep.subr.mxu0 0.0
    %877 = vmatpush1.msra.mxu0 0.0
    %878 = vmatprep.subr.mxu0 0.0
    %879 = vmatpush1.msra.mxu0 0.0
    %880 = vmatprep.subr.mxu0 0.0
    %881 = vmatpush1.msra.mxu0 0.0
    %882 = vmatprep.subr.mxu0 0.0
    %883 = vmatpush1.msra.mxu0 0.0
    %884 = vmatprep.subr.mxu0 0.0
    %885 = vmatpush1.msra.mxu0 0.0
    %886 = vmatprep.subr.mxu0 0.0
    %887 = vmatpush1.msra.mxu0 0.0
    %888 = vmatprep.subr.mxu0 0.0
    %889 = vmatpush1.msra.mxu0 0.0
    %890 = vmatprep.mubr.f32.mxu0 0.0
    %891 = vmatmul.mubr.f32.gmra.mrb[0].mxu0 %v815
    %v892 = vpop.f32.mrb[0].mxu0
    %v893 = vadd.f32 0.0, %v892
    %v894 = vpop.f32.mrb[0].mxu0
    %895 = vmatprep.mubr.f32.mxu0 0.0
    %896 = vmatmul.mubr.f32.gmra.mrb[0].mxu0 %v818
    %v897 = vpop.f32.mrb[0].mxu0
    %v898 = vadd.f32 0.0, %v897
    %v899 = vpop.f32.mrb[0].mxu0
    %900 = vmatprep.mubr.f32.mxu0 0.0
    %901 = vmatmul.mubr.f32.gmra.mrb[0].mxu0 %v821
    %v902 = vpop.f32.mrb[0].mxu0
    %v903 = vadd.f32 0.0, %v902
    %v904 = vpop.f32.mrb[0].mxu0
    %905 = vmatprep.mubr.f32.mxu0 0.0
    %906 = vmatmul.mubr.f32.gmra.mrb[0].mxu0 %v824
    %v907 = vpop.f32.mrb[0].mxu0
    %v908 = vadd.f32 0.0, %v907
    %v909 = vpop.f32.mrb[0].mxu0
    %910 = vdwg.mxu0
    %v912 = vsel %vm223, %v801, 0
    %v915 = vsel %vm223, %v802, 0
    %v918 = vsel %vm223, %v803, 0
    %v921 = vsel %vm223, %v804, 0
    %923 = vmatprep.subr.mxu0 0.0
    %924 = vmatpush1.msra.mxu0 %v800
    %925 = vmatprep.subr.mxu0 0.0
    %926 = vmatpush1.msra.mxu0 0.0
    %927 = vmatprep.subr.mxu0 0.0
    %928 = vmatpush1.msra.mxu0 0.0
    %929 = vmatprep.subr.mxu0 0.0
    %930 = vmatpush1.msra.mxu0 0.0
    %931 = vmatprep.subr.mxu0 0.0
    %932 = vmatpush1.msra.mxu0 0.0
    %933 = vmatprep.subr.mxu0 0.0
    %934 = vmatpush1.msra.mxu0 0.0
    %935 = vmatprep.subr.mxu0 0.0
    %936 = vmatpush1.msra.mxu0 0.0
    %937 = vmatprep.subr.mxu0 0.0
    %938 = vmatpush1.msra.mxu0 0.0
    %939 = vmatprep.subr.mxu0 0.0
    %940 = vmatpush1.msra.mxu0 0.0
    %941 = vmatprep.subr.mxu0 0.0
    %942 = vmatpush1.msra.mxu0 0.0
    %943 = vmatprep.subr.mxu0 0.0
    %944 = vmatpush1.msra.mxu0 0.0
    %945 = vmatprep.subr.mxu0 0.0
    %946 = vmatpush1.msra.mxu0 0.0
    %947 = vmatprep.subr.mxu0 0.0
    %948 = vmatpush1.msra.mxu0 0.0
    %949 = vmatprep.subr.mxu0 0.0
    %950 = vmatpush1.msra.mxu0 0.0
    %951 = vmatprep.subr.mxu0 0.0
    %952 = vmatpush1.msra.mxu0 0.0
    %953 = vmatprep.subr.mxu0 0.0
    %954 = vmatpush1.msra.mxu0 0.0
    %955 = vmatprep.subr.mxu0 0.0
    %956 = vmatpush1.msra.mxu0 0.0
    %957 = vmatprep.subr.mxu0 0.0
    %958 = vmatpush1.msra.mxu0 0.0
    %959 = vmatprep.subr.mxu0 0.0
    %960 = vmatpush1.msra.mxu0 0.0
    %961 = vmatprep.subr.mxu0 0.0
    %962 = vmatpush1.msra.mxu0 0.0
    %963 = vmatprep.subr.mxu0 0.0
    %964 = vmatpush1.msra.mxu0 0.0
    %965 = vmatprep.subr.mxu0 0.0
    %966 = vmatpush1.msra.mxu0 0.0
    %967 = vmatprep.subr.mxu0 0.0
    %968 = vmatpush1.msra.mxu0 0.0
    %969 = vmatprep.subr.mxu0 0.0
    %970 = vmatpush1.msra.mxu0 0.0
    %971 = vmatprep.subr.mxu0 0.0
    %972 = vmatpush1.msra.mxu0 0.0
    %973 = vmatprep.subr.mxu0 0.0
    %974 = vmatpush1.msra.mxu0 0.0
    %975 = vmatprep.subr.mxu0 0.0
    %976 = vmatpush1.msra.mxu0 0.0
    %977 = vmatprep.subr.mxu0 0.0
    %978 = vmatpush1.msra.mxu0 0.0
    %979 = vmatprep.subr.mxu0 0.0
    %980 = vmatpush1.msra.mxu0 0.0
    %981 = vmatprep.subr.mxu0 0.0
    %982 = vmatpush1.msra.mxu0 0.0
    %983 = vmatprep.subr.mxu0 0.0
    %984 = vmatpush1.msra.mxu0 0.0
    %985 = vmatprep.subr.mxu0 0.0
    %986 = vmatpush1.msra.mxu0 0.0
    %987 = vmatprep.mubr.f32.mxu0 0.0
    %988 = vmatmul.mubr.f32.gmra.mrb[0].mxu0 %v912
    %v989 = vpop.f32.mrb[0].mxu0
    %v990 = vadd.f32 %v893, %v989
    %v991 = vpop.f32.mrb[0].mxu0
    %992 = vmatprep.mubr.f32.mxu0 0.0
    %993 = vmatmul.mubr.f32.gmra.mrb[0].mxu0 %v915
    %v994 = vpop.f32.mrb[0].mxu0
    %v995 = vadd.f32 %v898, %v994
    %v996 = vpop.f32.mrb[0].mxu0
    %997 = vmatprep.mubr.f32.mxu0 0.0
    %998 = vmatmul.mubr.f32.gmra.mrb[0].mxu0 %v918
    %v999 = vpop.f32.mrb[0].mxu0
    %v1000 = vadd.f32 %v903, %v999
    %v1001 = vpop.f32.mrb[0].mxu0
    %1002 = vmatprep.mubr.f32.mxu0 0.0
    %1003 = vmatmul.mubr.f32.gmra.mrb[0].mxu0 %v921
    %v1004 = vpop.f32.mrb[0].mxu0
    %v1005 = vadd.f32 %v908, %v1004
    %v1006 = vpop.f32.mrb[0].mxu0
    %1007 = vdwg.mxu0
    %s1008 = scalar_lea.vmem %s6, 64
    %v1009 = vld [vmem:[%s1008] sm:$0xff]
    %v1010 = vld [vmem:[%s1008 + $0x8] sm:$0xff]
    %v1011 = vld [vmem:[%s1008 + $0x10] sm:$0xff]
    %v1012 = vld [vmem:[%s1008 + $0x18] sm:$0xff]
    %1013 = vrot.lane.b32.xlu0 %v800, 126
    %v1014 = vpop.permute.xlu0 %1013
    %v1017 = vsel %vm223, %v1009, 0
    %v1020 = vsel %vm223, %v1010, 0
    %v1023 = vsel %vm223, %v1011, 0
    %v1026 = vsel %vm223, %v1012, 0
    %1028 = vmatprep.subr.mxu0 0.0
    %1029 = vmatpush1.msra.mxu0 %v1014
    %1030 = vmatprep.subr.mxu0 0.0
    %1031 = vmatpush1.msra.mxu0 0.0
    %1032 = vmatprep.subr.mxu0 0.0
    %1033 = vmatpush1.msra.mxu0 0.0
    %1034 = vmatprep.subr.mxu0 0.0
    %1035 = vmatpush1.msra.mxu0 0.0
    %1036 = vmatprep.subr.mxu0 0.0
    %1037 = vmatpush1.msra.mxu0 0.0
    %1038 = vmatprep.subr.mxu0 0.0
    %1039 = vmatpush1.msra.mxu0 0.0
    %1040 = vmatprep.subr.mxu0 0.0
    %1041 = vmatpush1.msra.mxu0 0.0
    %1042 = vmatprep.subr.mxu0 0.0
    %1043 = vmatpush1.msra.mxu0 0.0
    %1044 = vmatprep.subr.mxu0 0.0
    %1045 = vmatpush1.msra.mxu0 0.0
    %1046 = vmatprep.subr.mxu0 0.0
    %1047 = vmatpush1.msra.mxu0 0.0
    %1048 = vmatprep.subr.mxu0 0.0
    %1049 = vmatpush1.msra.mxu0 0.0
    %1050 = vmatprep.subr.mxu0 0.0
    %1051 = vmatpush1.msra.mxu0 0.0
    %1052 = vmatprep.subr.mxu0 0.0
    %1053 = vmatpush1.msra.mxu0 0.0
    %1054 = vmatprep.subr.mxu0 0.0
    %1055 = vmatpush1.msra.mxu0 0.0
    %1056 = vmatprep.subr.mxu0 0.0
    %1057 = vmatpush1.msra.mxu0 0.0
    %1058 = vmatprep.subr.mxu0 0.0
    %1059 = vmatpush1.msra.mxu0 0.0
    %1060 = vmatprep.subr.mxu0 0.0
    %1061 = vmatpush1.msra.mxu0 0.0
    %1062 = vmatprep.subr.mxu0 0.0
    %1063 = vmatpush1.msra.mxu0 0.0
    %1064 = vmatprep.subr.mxu0 0.0
    %1065 = vmatpush1.msra.mxu0 0.0
    %1066 = vmatprep.subr.mxu0 0.0
    %1067 = vmatpush1.msra.mxu0 0.0
    %1068 = vmatprep.subr.mxu0 0.0
    %1069 = vmatpush1.msra.mxu0 0.0
    %1070 = vmatprep.subr.mxu0 0.0
    %1071 = vmatpush1.msra.mxu0 0.0
    %1072 = vmatprep.subr.mxu0 0.0
    %1073 = vmatpush1.msra.mxu0 0.0
    %1074 = vmatprep.subr.mxu0 0.0
    %1075 = vmatpush1.msra.mxu0 0.0
    %1076 = vmatprep.subr.mxu0 0.0
    %1077 = vmatpush1.msra.mxu0 0.0
    %1078 = vmatprep.subr.mxu0 0.0
    %1079 = vmatpush1.msra.mxu0 0.0
    %1080 = vmatprep.subr.mxu0 0.0
    %1081 = vmatpush1.msra.mxu0 0.0
    %1082 = vmatprep.subr.mxu0 0.0
    %1083 = vmatpush1.msra.mxu0 0.0
    %1084 = vmatprep.subr.mxu0 0.0
    %1085 = vmatpush1.msra.mxu0 0.0
    %1086 = vmatprep.subr.mxu0 0.0
    %1087 = vmatpush1.msra.mxu0 0.0
    %1088 = vmatprep.subr.mxu0 0.0
    %1089 = vmatpush1.msra.mxu0 0.0
    %1090 = vmatprep.subr.mxu0 0.0
    %1091 = vmatpush1.msra.mxu0 0.0
    %1092 = vmatprep.mubr.f32.mxu0 0.0
    %1093 = vmatmul.mubr.f32.gmra.mrb[0].mxu0 %v1017
    %v1094 = vpop.f32.mrb[0].mxu0
    %v1095 = vadd.f32 0.0, %v1094
    %v1096 = vpop.f32.mrb[0].mxu0
    %1097 = vmatprep.mubr.f32.mxu0 0.0
    %1098 = vmatmul.mubr.f32.gmra.mrb[0].mxu0 %v1020
    %v1099 = vpop.f32.mrb[0].mxu0
    %v1100 = vadd.f32 0.0, %v1099
    %v1101 = vpop.f32.mrb[0].mxu0
    %1102 = vmatprep.mubr.f32.mxu0 0.0
    %1103 = vmatmul.mubr.f32.gmra.mrb[0].mxu0 %v1023
    %v1104 = vpop.f32.mrb[0].mxu0
    %v1105 = vadd.f32 0.0, %v1104
    %v1106 = vpop.f32.mrb[0].mxu0
    %1107 = vmatprep.mubr.f32.mxu0 0.0
    %1108 = vmatmul.mubr.f32.gmra.mrb[0].mxu0 %v1026
    %v1109 = vpop.f32.mrb[0].mxu0
    %v1110 = vadd.f32 0.0, %v1109
    %v1111 = vpop.f32.mrb[0].mxu0
    %1112 = vdwg.mxu0
    %v1113 = vadd.f32 %v990, %v1095
    %v1114 = vadd.f32 %v995, %v1100
    %v1115 = vadd.f32 %v1000, %v1105
    %v1116 = vadd.f32 %v1005, %v1110
    %v1117 = vld [vmem:[%s7] sm:$0xff]
    %v1118 = vld [vmem:[%s7 + $0x8] sm:$0xff]
    %v1119 = vld [vmem:[%s7 + $0x10] sm:$0xff]
    %v1120 = vld [vmem:[%s7 + $0x18] sm:$0xff]
    %1122 = vset.pattern.permute.xlu0 0
    %1123 = vperm.xlu0 %1122, %v1117
    %v1124 = vpop.permute.xlu0 %1123
    %1127 = vset.pattern.permute.xlu0 0
    %1128 = vperm.xlu0 %1127, %v1118
    %v1129 = vpop.permute.xlu0 %1128
    %1132 = vset.pattern.permute.xlu0 0
    %1133 = vperm.xlu0 %1132, %v1119
    %v1134 = vpop.permute.xlu0 %1133
    %1137 = vset.pattern.permute.xlu0 0
    %1138 = vperm.xlu0 %1137, %v1120
    %v1139 = vpop.permute.xlu0 %1138
    %v1141 = vadd.f32 %v1113, %v1124
    %v1142 = vadd.f32 %v1114, %v1129
    %v1143 = vadd.f32 %v1115, %v1134
    %v1144 = vadd.f32 %v1116, %v1139
    %v1145 = vmul.f32 %v1141, 0.2
    %v1146 = vmul.f32 %v1142, 0.2
    %v1147 = vmul.f32 %v1143, 0.2
    %v1148 = vmul.f32 %v1144, 0.2
    %v1149 = vmax.f32 %v1141, %v1145
    %v1150 = vmax.f32 %v1142, %v1146
    %v1151 = vmax.f32 %v1143, %v1147
    %v1152 = vmax.f32 %v1144, %v1148
    %1154 = vset.pattern.permute.xlu0 0
    %1155 = vperm.xlu0 %1154, %v211
    %v1156 = vpop.permute.xlu0 %1155
    %1159 = vset.pattern.permute.xlu0 0
    %1160 = vperm.xlu0 %1159, %v212
    %v1161 = vpop.permute.xlu0 %1160
    %1164 = vset.pattern.permute.xlu0 0
    %1165 = vperm.xlu0 %1164, %v213
    %v1166 = vpop.permute.xlu0 %1165
    %1169 = vset.pattern.permute.xlu0 0
    %1170 = vperm.xlu0 %1169, %v214
    %v1171 = vpop.permute.xlu0 %1170
    %vm1173 = vcmask 97280
    %v1174 = vsel %vm1173, %v1149, %v1156
    %v1175 = vsel %vm1173, %v1150, %v1161
    %v1176 = vsel %vm1173, %v1151, %v1166
    %v1177 = vsel %vm1173, %v1152, %v1171
    %v1178 = vld [vmem:[%s14] sm:$0xff]
    %s1179 = scalar_lea.vmem %s14, 8
    %v1180 = vld [vmem:[%s1179] sm:$0xff]
    %1185 = vrot.lane.b32.xlu0 %v1174, 127
    %v1186 = vpop.permute.xlu0 %1185
    %1187 = vrot.lane.b32.xlu0 %v1175, 127
    %v1188 = vpop.permute.xlu0 %1187
    %1189 = vrot.lane.b32.xlu0 %v1176, 127
    %v1190 = vpop.permute.xlu0 %1189
    %1191 = vrot.lane.b32.xlu0 %v1177, 127
    %v1192 = vpop.permute.xlu0 %1191
    %v1198 = vsel %vm109, %v1180, 0
    %1200 = vmatprep.subr.mxu0 0.0
    %1201 = vmatpush1.msra.mxu0 %v1186
    %1202 = vmatprep.subr.mxu0 0.0
    %1203 = vmatpush1.msra.mxu0 %v1188
    %1204 = vmatprep.subr.mxu0 0.0
    %1205 = vmatpush1.msra.mxu0 %v1190
    %1206 = vmatprep.subr.mxu0 0.0
    %1207 = vmatpush1.msra.mxu0 %v1192
    %1208 = vmatprep.subr.mxu0 0.0
    %1209 = vmatpush1.msra.mxu0 0.0
    %1210 = vmatprep.subr.mxu0 0.0
    %1211 = vmatpush1.msra.mxu0 0.0
    %1212 = vmatprep.subr.mxu0 0.0
    %1213 = vmatpush1.msra.mxu0 0.0
    %1214 = vmatprep.subr.mxu0 0.0
    %1215 = vmatpush1.msra.mxu0 0.0
    %1216 = vmatprep.subr.mxu0 0.0
    %1217 = vmatpush1.msra.mxu0 0.0
    %1218 = vmatprep.subr.mxu0 0.0
    %1219 = vmatpush1.msra.mxu0 0.0
    %1220 = vmatprep.subr.mxu0 0.0
    %1221 = vmatpush1.msra.mxu0 0.0
    %1222 = vmatprep.subr.mxu0 0.0
    %1223 = vmatpush1.msra.mxu0 0.0
    %1224 = vmatprep.subr.mxu0 0.0
    %1225 = vmatpush1.msra.mxu0 0.0
    %1226 = vmatprep.subr.mxu0 0.0
    %1227 = vmatpush1.msra.mxu0 0.0
    %1228 = vmatprep.subr.mxu0 0.0
    %1229 = vmatpush1.msra.mxu0 0.0
    %1230 = vmatprep.subr.mxu0 0.0
    %1231 = vmatpush1.msra.mxu0 0.0
    %1232 = vmatprep.subr.mxu0 0.0
    %1233 = vmatpush1.msra.mxu0 0.0
    %1234 = vmatprep.subr.mxu0 0.0
    %1235 = vmatpush1.msra.mxu0 0.0
    %1236 = vmatprep.subr.mxu0 0.0
    %1237 = vmatpush1.msra.mxu0 0.0
    %1238 = vmatprep.subr.mxu0 0.0
    %1239 = vmatpush1.msra.mxu0 0.0
    %1240 = vmatprep.subr.mxu0 0.0
    %1241 = vmatpush1.msra.mxu0 0.0
    %1242 = vmatprep.subr.mxu0 0.0
    %1243 = vmatpush1.msra.mxu0 0.0
    %1244 = vmatprep.subr.mxu0 0.0
    %1245 = vmatpush1.msra.mxu0 0.0
    %1246 = vmatprep.subr.mxu0 0.0
    %1247 = vmatpush1.msra.mxu0 0.0
    %1248 = vmatprep.subr.mxu0 0.0
    %1249 = vmatpush1.msra.mxu0 0.0
    %1250 = vmatprep.subr.mxu0 0.0
    %1251 = vmatpush1.msra.mxu0 0.0
    %1252 = vmatprep.subr.mxu0 0.0
    %1253 = vmatpush1.msra.mxu0 0.0
    %1254 = vmatprep.subr.mxu0 0.0
    %1255 = vmatpush1.msra.mxu0 0.0
    %1256 = vmatprep.subr.mxu0 0.0
    %1257 = vmatpush1.msra.mxu0 0.0
    %1258 = vmatprep.subr.mxu0 0.0
    %1259 = vmatpush1.msra.mxu0 0.0
    %1260 = vmatprep.subr.mxu0 0.0
    %1261 = vmatpush1.msra.mxu0 0.0
    %1262 = vmatprep.subr.mxu0 0.0
    %1263 = vmatpush1.msra.mxu0 0.0
    %1264 = vmatprep.mubr.f32.mxu0 0.0
    %1265 = vmatmul.mubr.f32.gmra.mrb[0].mxu0 %v1198
    %v1266 = vpop.f32.mrb[0].mxu0
    %v1267 = vadd.f32 0.0, %v1266
    %v1268 = vpop.f32.mrb[0].mxu0
    %1269 = vdwg.mxu0
    %v1271 = vsel %vm109, %v1178, 0
    %1273 = vmatprep.subr.mxu0 0.0
    %1274 = vmatpush1.msra.mxu0 %v1174
    %1275 = vmatprep.subr.mxu0 0.0
    %1276 = vmatpush1.msra.mxu0 %v1175
    %1277 = vmatprep.subr.mxu0 0.0
    %1278 = vmatpush1.msra.mxu0 %v1176
    %1279 = vmatprep.subr.mxu0 0.0
    %1280 = vmatpush1.msra.mxu0 %v1177
    %1281 = vmatprep.subr.mxu0 0.0
    %1282 = vmatpush1.msra.mxu0 0.0
    %1283 = vmatprep.subr.mxu0 0.0
    %1284 = vmatpush1.msra.mxu0 0.0
    %1285 = vmatprep.subr.mxu0 0.0
    %1286 = vmatpush1.msra.mxu0 0.0
    %1287 = vmatprep.subr.mxu0 0.0
    %1288 = vmatpush1.msra.mxu0 0.0
    %1289 = vmatprep.subr.mxu0 0.0
    %1290 = vmatpush1.msra.mxu0 0.0
    %1291 = vmatprep.subr.mxu0 0.0
    %1292 = vmatpush1.msra.mxu0 0.0
    %1293 = vmatprep.subr.mxu0 0.0
    %1294 = vmatpush1.msra.mxu0 0.0
    %1295 = vmatprep.subr.mxu0 0.0
    %1296 = vmatpush1.msra.mxu0 0.0
    %1297 = vmatprep.subr.mxu0 0.0
    %1298 = vmatpush1.msra.mxu0 0.0
    %1299 = vmatprep.subr.mxu0 0.0
    %1300 = vmatpush1.msra.mxu0 0.0
    %1301 = vmatprep.subr.mxu0 0.0
    %1302 = vmatpush1.msra.mxu0 0.0
    %1303 = vmatprep.subr.mxu0 0.0
    %1304 = vmatpush1.msra.mxu0 0.0
    %1305 = vmatprep.subr.mxu0 0.0
    %1306 = vmatpush1.msra.mxu0 0.0
    %1307 = vmatprep.subr.mxu0 0.0
    %1308 = vmatpush1.msra.mxu0 0.0
    %1309 = vmatprep.subr.mxu0 0.0
    %1310 = vmatpush1.msra.mxu0 0.0
    %1311 = vmatprep.subr.mxu0 0.0
    %1312 = vmatpush1.msra.mxu0 0.0
    %1313 = vmatprep.subr.mxu0 0.0
    %1314 = vmatpush1.msra.mxu0 0.0
    %1315 = vmatprep.subr.mxu0 0.0
    %1316 = vmatpush1.msra.mxu0 0.0
    %1317 = vmatprep.subr.mxu0 0.0
    %1318 = vmatpush1.msra.mxu0 0.0
    %1319 = vmatprep.subr.mxu0 0.0
    %1320 = vmatpush1.msra.mxu0 0.0
    %1321 = vmatprep.subr.mxu0 0.0
    %1322 = vmatpush1.msra.mxu0 0.0
    %1323 = vmatprep.subr.mxu0 0.0
    %1324 = vmatpush1.msra.mxu0 0.0
    %1325 = vmatprep.subr.mxu0 0.0
    %1326 = vmatpush1.msra.mxu0 0.0
    %1327 = vmatprep.subr.mxu0 0.0
    %1328 = vmatpush1.msra.mxu0 0.0
    %1329 = vmatprep.subr.mxu0 0.0
    %1330 = vmatpush1.msra.mxu0 0.0
    %1331 = vmatprep.subr.mxu0 0.0
    %1332 = vmatpush1.msra.mxu0 0.0
    %1333 = vmatprep.subr.mxu0 0.0
    %1334 = vmatpush1.msra.mxu0 0.0
    %1335 = vmatprep.subr.mxu0 0.0
    %1336 = vmatpush1.msra.mxu0 0.0
    %1337 = vmatprep.mubr.f32.mxu0 0.0
    %1338 = vmatmul.mubr.f32.gmra.mrb[0].mxu0 %v1271
    %v1339 = vpop.f32.mrb[0].mxu0
    %v1340 = vadd.f32 %v1267, %v1339
    %v1341 = vpop.f32.mrb[0].mxu0
    %1342 = vdwg.mxu0
    %s1343 = scalar_lea.vmem %s14, 16
    %v1344 = vld [vmem:[%s1343] sm:$0xff]
    %1345 = vrot.lane.b32.xlu0 %v1174, 126
    %v1346 = vpop.permute.xlu0 %1345
    %1347 = vrot.lane.b32.xlu0 %v1175, 126
    %v1348 = vpop.permute.xlu0 %1347
    %1349 = vrot.lane.b32.xlu0 %v1176, 126
    %v1350 = vpop.permute.xlu0 %1349
    %1351 = vrot.lane.b32.xlu0 %v1177, 126
    %v1352 = vpop.permute.xlu0 %1351
    %v1358 = vsel %vm109, %v1344, 0
    %1360 = vmatprep.subr.mxu0 0.0
    %1361 = vmatpush1.msra.mxu0 %v1346
    %1362 = vmatprep.subr.mxu0 0.0
    %1363 = vmatpush1.msra.mxu0 %v1348
    %1364 = vmatprep.subr.mxu0 0.0
    %1365 = vmatpush1.msra.mxu0 %v1350
    %1366 = vmatprep.subr.mxu0 0.0
    %1367 = vmatpush1.msra.mxu0 %v1352
    %1368 = vmatprep.subr.mxu0 0.0
    %1369 = vmatpush1.msra.mxu0 0.0
    %1370 = vmatprep.subr.mxu0 0.0
    %1371 = vmatpush1.msra.mxu0 0.0
    %1372 = vmatprep.subr.mxu0 0.0
    %1373 = vmatpush1.msra.mxu0 0.0
    %1374 = vmatprep.subr.mxu0 0.0
    %1375 = vmatpush1.msra.mxu0 0.0
    %1376 = vmatprep.subr.mxu0 0.0
    %1377 = vmatpush1.msra.mxu0 0.0
    %1378 = vmatprep.subr.mxu0 0.0
    %1379 = vmatpush1.msra.mxu0 0.0
    %1380 = vmatprep.subr.mxu0 0.0
    %1381 = vmatpush1.msra.mxu0 0.0
    %1382 = vmatprep.subr.mxu0 0.0
    %1383 = vmatpush1.msra.mxu0 0.0
    %1384 = vmatprep.subr.mxu0 0.0
    %1385 = vmatpush1.msra.mxu0 0.0
    %1386 = vmatprep.subr.mxu0 0.0
    %1387 = vmatpush1.msra.mxu0 0.0
    %1388 = vmatprep.subr.mxu0 0.0
    %1389 = vmatpush1.msra.mxu0 0.0
    %1390 = vmatprep.subr.mxu0 0.0
    %1391 = vmatpush1.msra.mxu0 0.0
    %1392 = vmatprep.subr.mxu0 0.0
    %1393 = vmatpush1.msra.mxu0 0.0
    %1394 = vmatprep.subr.mxu0 0.0
    %1395 = vmatpush1.msra.mxu0 0.0
    %1396 = vmatprep.subr.mxu0 0.0
    %1397 = vmatpush1.msra.mxu0 0.0
    %1398 = vmatprep.subr.mxu0 0.0
    %1399 = vmatpush1.msra.mxu0 0.0
    %1400 = vmatprep.subr.mxu0 0.0
    %1401 = vmatpush1.msra.mxu0 0.0
    %1402 = vmatprep.subr.mxu0 0.0
    %1403 = vmatpush1.msra.mxu0 0.0
    %1404 = vmatprep.subr.mxu0 0.0
    %1405 = vmatpush1.msra.mxu0 0.0
    %1406 = vmatprep.subr.mxu0 0.0
    %1407 = vmatpush1.msra.mxu0 0.0
    %1408 = vmatprep.subr.mxu0 0.0
    %1409 = vmatpush1.msra.mxu0 0.0
    %1410 = vmatprep.subr.mxu0 0.0
    %1411 = vmatpush1.msra.mxu0 0.0
    %1412 = vmatprep.subr.mxu0 0.0
    %1413 = vmatpush1.msra.mxu0 0.0
    %1414 = vmatprep.subr.mxu0 0.0
    %1415 = vmatpush1.msra.mxu0 0.0
    %1416 = vmatprep.subr.mxu0 0.0
    %1417 = vmatpush1.msra.mxu0 0.0
    %1418 = vmatprep.subr.mxu0 0.0
    %1419 = vmatpush1.msra.mxu0 0.0
    %1420 = vmatprep.subr.mxu0 0.0
    %1421 = vmatpush1.msra.mxu0 0.0
    %1422 = vmatprep.subr.mxu0 0.0
    %1423 = vmatpush1.msra.mxu0 0.0
    %1424 = vmatprep.mubr.f32.mxu0 0.0
    %1425 = vmatmul.mubr.f32.gmra.mrb[0].mxu0 %v1358
    %v1426 = vpop.f32.mrb[0].mxu0
    %v1427 = vadd.f32 0.0, %v1426
    %v1428 = vpop.f32.mrb[0].mxu0
    %1429 = vdwg.mxu0
    %v1430 = vadd.f32 %v1340, %v1427
    %v1431 = vld [vmem:[%s15] sm:$0xff]
    %1433 = vset.pattern.permute.xlu0 0
    %1434 = vperm.xlu0 %1433, %v1431
    %v1435 = vpop.permute.xlu0 %1434
    %v1437 = vadd.f32 %v1430, %v1435
    %v1438 = vmul.f32 %v1437, 0.2
    %v1439 = vmax.f32 %v1437, %v1438
    %v1440 = vld [vmem:[%s16] sm:$0x1]
    %s1441 = scalar_lea.vmem %s16, 1
    %v1442 = vld [vmem:[%s1441] sm:$0x1]
    %1444 = vrot.lane.b32.xlu0 %v1439, 127
    %v1445 = vpop.permute.xlu0 %1444
    %v1448 = vsel %vm223, %v1442, 0
    %1450 = vmatprep.subr.mxu0 0.0
    %1451 = vmatpush1.msra.mxu0 %v1445
    %1452 = vmatprep.subr.mxu0 0.0
    %1453 = vmatpush1.msra.mxu0 0.0
    %1454 = vmatprep.subr.mxu0 0.0
    %1455 = vmatpush1.msra.mxu0 0.0
    %1456 = vmatprep.subr.mxu0 0.0
    %1457 = vmatpush1.msra.mxu0 0.0
    %1458 = vmatprep.subr.mxu0 0.0
    %1459 = vmatpush1.msra.mxu0 0.0
    %1460 = vmatprep.subr.mxu0 0.0
    %1461 = vmatpush1.msra.mxu0 0.0
    %1462 = vmatprep.subr.mxu0 0.0
    %1463 = vmatpush1.msra.mxu0 0.0
    %1464 = vmatprep.subr.mxu0 0.0
    %1465 = vmatpush1.msra.mxu0 0.0
    %1466 = vmatprep.subr.mxu0 0.0
    %1467 = vmatpush1.msra.mxu0 0.0
    %1468 = vmatprep.subr.mxu0 0.0
    %1469 = vmatpush1.msra.mxu0 0.0
    %1470 = vmatprep.subr.mxu0 0.0
    %1471 = vmatpush1.msra.mxu0 0.0
    %1472 = vmatprep.subr.mxu0 0.0
    %1473 = vmatpush1.msra.mxu0 0.0
    %1474 = vmatprep.subr.mxu0 0.0
    %1475 = vmatpush1.msra.mxu0 0.0
    %1476 = vmatprep.subr.mxu0 0.0
    %1477 = vmatpush1.msra.mxu0 0.0
    %1478 = vmatprep.subr.mxu0 0.0
    %1479 = vmatpush1.msra.mxu0 0.0
    %1480 = vmatprep.subr.mxu0 0.0
    %1481 = vmatpush1.msra.mxu0 0.0
    %1482 = vmatprep.subr.mxu0 0.0
    %1483 = vmatpush1.msra.mxu0 0.0
    %1484 = vmatprep.subr.mxu0 0.0
    %1485 = vmatpush1.msra.mxu0 0.0
    %1486 = vmatprep.subr.mxu0 0.0
    %1487 = vmatpush1.msra.mxu0 0.0
    %1488 = vmatprep.subr.mxu0 0.0
    %1489 = vmatpush1.msra.mxu0 0.0
    %1490 = vmatprep.subr.mxu0 0.0
    %1491 = vmatpush1.msra.mxu0 0.0
    %1492 = vmatprep.subr.mxu0 0.0
    %1493 = vmatpush1.msra.mxu0 0.0
    %1494 = vmatprep.subr.mxu0 0.0
    %1495 = vmatpush1.msra.mxu0 0.0
    %1496 = vmatprep.subr.mxu0 0.0
    %1497 = vmatpush1.msra.mxu0 0.0
    %1498 = vmatprep.subr.mxu0 0.0
    %1499 = vmatpush1.msra.mxu0 0.0
    %1500 = vmatprep.subr.mxu0 0.0
    %1501 = vmatpush1.msra.mxu0 0.0
    %1502 = vmatprep.subr.mxu0 0.0
    %1503 = vmatpush1.msra.mxu0 0.0
    %1504 = vmatprep.subr.mxu0 0.0
    %1505 = vmatpush1.msra.mxu0 0.0
    %1506 = vmatprep.subr.mxu0 0.0
    %1507 = vmatpush1.msra.mxu0 0.0
    %1508 = vmatprep.subr.mxu0 0.0
    %1509 = vmatpush1.msra.mxu0 0.0
    %1510 = vmatprep.subr.mxu0 0.0
    %1511 = vmatpush1.msra.mxu0 0.0
    %1512 = vmatprep.subr.mxu0 0.0
    %1513 = vmatpush1.msra.mxu0 0.0
    %1514 = vmatprep.mubr.f32.mxu0 0.0
    %1515 = vmatmul.mubr.f32.gmra.mrb[0].mxu0 %v1448
    %v1516 = vpop.f32.mrb[0].mxu0
    %v1517 = vadd.f32 0.0, %v1516
    %v1518 = vpop.f32.mrb[0].mxu0
    %1519 = vdwg.mxu0
    %v1521 = vsel %vm223, %v1440, 0
    %1523 = vmatprep.subr.mxu0 0.0
    %1524 = vmatpush1.msra.mxu0 %v1439
    %1525 = vmatprep.subr.mxu0 0.0
    %1526 = vmatpush1.msra.mxu0 0.0
    %1527 = vmatprep.subr.mxu0 0.0
    %1528 = vmatpush1.msra.mxu0 0.0
    %1529 = vmatprep.subr.mxu0 0.0
    %1530 = vmatpush1.msra.mxu0 0.0
    %1531 = vmatprep.subr.mxu0 0.0
    %1532 = vmatpush1.msra.mxu0 0.0
    %1533 = vmatprep.subr.mxu0 0.0
    %1534 = vmatpush1.msra.mxu0 0.0
    %1535 = vmatprep.subr.mxu0 0.0
    %1536 = vmatpush1.msra.mxu0 0.0
    %1537 = vmatprep.subr.mxu0 0.0
    %1538 = vmatpush1.msra.mxu0 0.0
    %1539 = vmatprep.subr.mxu0 0.0
    %1540 = vmatpush1.msra.mxu0 0.0
    %1541 = vmatprep.subr.mxu0 0.0
    %1542 = vmatpush1.msra.mxu0 0.0
    %1543 = vmatprep.subr.mxu0 0.0
    %1544 = vmatpush1.msra.mxu0 0.0
    %1545 = vmatprep.subr.mxu0 0.0
    %1546 = vmatpush1.msra.mxu0 0.0
    %1547 = vmatprep.subr.mxu0 0.0
    %1548 = vmatpush1.msra.mxu0 0.0
    %1549 = vmatprep.subr.mxu0 0.0
    %1550 = vmatpush1.msra.mxu0 0.0
    %1551 = vmatprep.subr.mxu0 0.0
    %1552 = vmatpush1.msra.mxu0 0.0
    %1553 = vmatprep.subr.mxu0 0.0
    %1554 = vmatpush1.msra.mxu0 0.0
    %1555 = vmatprep.subr.mxu0 0.0
    %1556 = vmatpush1.msra.mxu0 0.0
    %1557 = vmatprep.subr.mxu0 0.0
    %1558 = vmatpush1.msra.mxu0 0.0
    %1559 = vmatprep.subr.mxu0 0.0
    %1560 = vmatpush1.msra.mxu0 0.0
    %1561 = vmatprep.subr.mxu0 0.0
    %1562 = vmatpush1.msra.mxu0 0.0
    %1563 = vmatprep.subr.mxu0 0.0
    %1564 = vmatpush1.msra.mxu0 0.0
    %1565 = vmatprep.subr.mxu0 0.0
    %1566 = vmatpush1.msra.mxu0 0.0
    %1567 = vmatprep.subr.mxu0 0.0
    %1568 = vmatpush1.msra.mxu0 0.0
    %1569 = vmatprep.subr.mxu0 0.0
    %1570 = vmatpush1.msra.mxu0 0.0
    %1571 = vmatprep.subr.mxu0 0.0
    %1572 = vmatpush1.msra.mxu0 0.0
    %1573 = vmatprep.subr.mxu0 0.0
    %1574 = vmatpush1.msra.mxu0 0.0
    %1575 = vmatprep.subr.mxu0 0.0
    %1576 = vmatpush1.msra.mxu0 0.0
    %1577 = vmatprep.subr.mxu0 0.0
    %1578 = vmatpush1.msra.mxu0 0.0
    %1579 = vmatprep.subr.mxu0 0.0
    %1580 = vmatpush1.msra.mxu0 0.0
    %1581 = vmatprep.subr.mxu0 0.0
    %1582 = vmatpush1.msra.mxu0 0.0
    %1583 = vmatprep.subr.mxu0 0.0
    %1584 = vmatpush1.msra.mxu0 0.0
    %1585 = vmatprep.subr.mxu0 0.0
    %1586 = vmatpush1.msra.mxu0 0.0
    %1587 = vmatprep.mubr.f32.mxu0 0.0
    %1588 = vmatmul.mubr.f32.gmra.mrb[0].mxu0 %v1521
    %v1589 = vpop.f32.mrb[0].mxu0
    %v1590 = vadd.f32 %v1517, %v1589
    %v1591 = vpop.f32.mrb[0].mxu0
    %1592 = vdwg.mxu0
    %s1593 = scalar_lea.vmem %s16, 2
    %v1594 = vld [vmem:[%s1593] sm:$0x1]
    %1595 = vrot.lane.b32.xlu0 %v1439, 126
    %v1596 = vpop.permute.xlu0 %1595
    %v1599 = vsel %vm223, %v1594, 0
    %1601 = vmatprep.subr.mxu0 0.0
    %1602 = vmatpush1.msra.mxu0 %v1596
    %1603 = vmatprep.subr.mxu0 0.0
    %1604 = vmatpush1.msra.mxu0 0.0
    %1605 = vmatprep.subr.mxu0 0.0
    %1606 = vmatpush1.msra.mxu0 0.0
    %1607 = vmatprep.subr.mxu0 0.0
    %1608 = vmatpush1.msra.mxu0 0.0
    %1609 = vmatprep.subr.mxu0 0.0
    %1610 = vmatpush1.msra.mxu0 0.0
    %1611 = vmatprep.subr.mxu0 0.0
    %1612 = vmatpush1.msra.mxu0 0.0
    %1613 = vmatprep.subr.mxu0 0.0
    %1614 = vmatpush1.msra.mxu0 0.0
    %1615 = vmatprep.subr.mxu0 0.0
    %1616 = vmatpush1.msra.mxu0 0.0
    %1617 = vmatprep.subr.mxu0 0.0
    %1618 = vmatpush1.msra.mxu0 0.0
    %1619 = vmatprep.subr.mxu0 0.0
    %1620 = vmatpush1.msra.mxu0 0.0
    %1621 = vmatprep.subr.mxu0 0.0
    %1622 = vmatpush1.msra.mxu0 0.0
    %1623 = vmatprep.subr.mxu0 0.0
    %1624 = vmatpush1.msra.mxu0 0.0
    %1625 = vmatprep.subr.mxu0 0.0
    %1626 = vmatpush1.msra.mxu0 0.0
    %1627 = vmatprep.subr.mxu0 0.0
    %1628 = vmatpush1.msra.mxu0 0.0
    %1629 = vmatprep.subr.mxu0 0.0
    %1630 = vmatpush1.msra.mxu0 0.0
    %1631 = vmatprep.subr.mxu0 0.0
    %1632 = vmatpush1.msra.mxu0 0.0
    %1633 = vmatprep.subr.mxu0 0.0
    %1634 = vmatpush1.msra.mxu0 0.0
    %1635 = vmatprep.subr.mxu0 0.0
    %1636 = vmatpush1.msra.mxu0 0.0
    %1637 = vmatprep.subr.mxu0 0.0
    %1638 = vmatpush1.msra.mxu0 0.0
    %1639 = vmatprep.subr.mxu0 0.0
    %1640 = vmatpush1.msra.mxu0 0.0
    %1641 = vmatprep.subr.mxu0 0.0
    %1642 = vmatpush1.msra.mxu0 0.0
    %1643 = vmatprep.subr.mxu0 0.0
    %1644 = vmatpush1.msra.mxu0 0.0
    %1645 = vmatprep.subr.mxu0 0.0
    %1646 = vmatpush1.msra.mxu0 0.0
    %1647 = vmatprep.subr.mxu0 0.0
    %1648 = vmatpush1.msra.mxu0 0.0
    %1649 = vmatprep.subr.mxu0 0.0
    %1650 = vmatpush1.msra.mxu0 0.0
    %1651 = vmatprep.subr.mxu0 0.0
    %1652 = vmatpush1.msra.mxu0 0.0
    %1653 = vmatprep.subr.mxu0 0.0
    %1654 = vmatpush1.msra.mxu0 0.0
    %1655 = vmatprep.subr.mxu0 0.0
    %1656 = vmatpush1.msra.mxu0 0.0
    %1657 = vmatprep.subr.mxu0 0.0
    %1658 = vmatpush1.msra.mxu0 0.0
    %1659 = vmatprep.subr.mxu0 0.0
    %1660 = vmatpush1.msra.mxu0 0.0
    %1661 = vmatprep.subr.mxu0 0.0
    %1662 = vmatpush1.msra.mxu0 0.0
    %1663 = vmatprep.subr.mxu0 0.0
    %1664 = vmatpush1.msra.mxu0 0.0
    %1665 = vmatprep.mubr.f32.mxu0 0.0
    %1666 = vmatmul.mubr.f32.gmra.mrb[0].mxu0 %v1599
    %v1667 = vpop.f32.mrb[0].mxu0
    %v1668 = vadd.f32 0.0, %v1667
    %v1669 = vpop.f32.mrb[0].mxu0
    %1670 = vdwg.mxu0
    %v1671 = vadd.f32 %v1590, %v1668
    %v1672 = vld [vmem:[#allocation3] sm:$0x1]
    %1674 = vset.pattern.permute.xlu0 0
    %1675 = vperm.xlu0 %1674, %v1672
    %v1676 = vpop.permute.xlu0 %1675
    %v1678 = vlaneseq
    %v1679 = vshrl.u32 %v1678, 7
    %v1680 = vsub.s32 0, %v1679
    %v1681 = vrot.slane %v1676, %v1680
    %v1682 = vadd.f32 %v1671, %v1681
    %v1683 = vmul.f32 %v1682, 0.2
    %v1684 = vmax.f32 %v1682, %v1683
    %v1685 = vld [vmem:[%s8] sm:$0xff]
    %s1686 = scalar_lea.vmem %s8, 8
    %v1687 = vld [vmem:[%s1686] sm:$0xff]
    %1692 = vrot.lane.b32.xlu0 %v1149, 127
    %v1693 = vpop.permute.xlu0 %1692
    %1694 = vrot.lane.b32.xlu0 %v1150, 127
    %v1695 = vpop.permute.xlu0 %1694
    %1696 = vrot.lane.b32.xlu0 %v1151, 127
    %v1697 = vpop.permute.xlu0 %1696
    %1698 = vrot.lane.b32.xlu0 %v1152, 127
    %v1699 = vpop.permute.xlu0 %1698
    %v1705 = vsel %vm109, %v1687, 0
    %1707 = vmatprep.subr.mxu0 0.0
    %1708 = vmatpush1.msra.mxu0 %v1693
    %1709 = vmatprep.subr.mxu0 0.0
    %1710 = vmatpush1.msra.mxu0 %v1695
    %1711 = vmatprep.subr.mxu0 0.0
    %1712 = vmatpush1.msra.mxu0 %v1697
    %1713 = vmatprep.subr.mxu0 0.0
    %1714 = vmatpush1.msra.mxu0 %v1699
    %1715 = vmatprep.subr.mxu0 0.0
    %1716 = vmatpush1.msra.mxu0 0.0
    %1717 = vmatprep.subr.mxu0 0.0
    %1718 = vmatpush1.msra.mxu0 0.0
    %1719 = vmatprep.subr.mxu0 0.0
    %1720 = vmatpush1.msra.mxu0 0.0
    %1721 = vmatprep.subr.mxu0 0.0
    %1722 = vmatpush1.msra.mxu0 0.0
    %1723 = vmatprep.subr.mxu0 0.0
    %1724 = vmatpush1.msra.mxu0 0.0
    %1725 = vmatprep.subr.mxu0 0.0
    %1726 = vmatpush1.msra.mxu0 0.0
    %1727 = vmatprep.subr.mxu0 0.0
    %1728 = vmatpush1.msra.mxu0 0.0
    %1729 = vmatprep.subr.mxu0 0.0
    %1730 = vmatpush1.msra.mxu0 0.0
    %1731 = vmatprep.subr.mxu0 0.0
    %1732 = vmatpush1.msra.mxu0 0.0
    %1733 = vmatprep.subr.mxu0 0.0
    %1734 = vmatpush1.msra.mxu0 0.0
    %1735 = vmatprep.subr.mxu0 0.0
    %1736 = vmatpush1.msra.mxu0 0.0
    %1737 = vmatprep.subr.mxu0 0.0
    %1738 = vmatpush1.msra.mxu0 0.0
    %1739 = vmatprep.subr.mxu0 0.0
    %1740 = vmatpush1.msra.mxu0 0.0
    %1741 = vmatprep.subr.mxu0 0.0
    %1742 = vmatpush1.msra.mxu0 0.0
    %1743 = vmatprep.subr.mxu0 0.0
    %1744 = vmatpush1.msra.mxu0 0.0
    %1745 = vmatprep.subr.mxu0 0.0
    %1746 = vmatpush1.msra.mxu0 0.0
    %1747 = vmatprep.subr.mxu0 0.0
    %1748 = vmatpush1.msra.mxu0 0.0
    %1749 = vmatprep.subr.mxu0 0.0
    %1750 = vmatpush1.msra.mxu0 0.0
    %1751 = vmatprep.subr.mxu0 0.0
    %1752 = vmatpush1.msra.mxu0 0.0
    %1753 = vmatprep.subr.mxu0 0.0
    %1754 = vmatpush1.msra.mxu0 0.0
    %1755 = vmatprep.subr.mxu0 0.0
    %1756 = vmatpush1.msra.mxu0 0.0
    %1757 = vmatprep.subr.mxu0 0.0
    %1758 = vmatpush1.msra.mxu0 0.0
    %1759 = vmatprep.subr.mxu0 0.0
    %1760 = vmatpush1.msra.mxu0 0.0
    %1761 = vmatprep.subr.mxu0 0.0
    %1762 = vmatpush1.msra.mxu0 0.0
    %1763 = vmatprep.subr.mxu0 0.0
    %1764 = vmatpush1.msra.mxu0 0.0
    %1765 = vmatprep.subr.mxu0 0.0
    %1766 = vmatpush1.msra.mxu0 0.0
    %1767 = vmatprep.subr.mxu0 0.0
    %1768 = vmatpush1.msra.mxu0 0.0
    %1769 = vmatprep.subr.mxu0 0.0
    %1770 = vmatpush1.msra.mxu0 0.0
    %1771 = vmatprep.mubr.f32.mxu0 0.0
    %1772 = vmatmul.mubr.f32.gmra.mrb[0].mxu0 %v1705
    %v1773 = vpop.f32.mrb[0].mxu0
    %v1774 = vadd.f32 0.0, %v1773
    %v1775 = vpop.f32.mrb[0].mxu0
    %1776 = vdwg.mxu0
    %v1778 = vsel %vm109, %v1685, 0
    %1780 = vmatprep.subr.mxu0 0.0
    %1781 = vmatpush1.msra.mxu0 %v1149
    %1782 = vmatprep.subr.mxu0 0.0
    %1783 = vmatpush1.msra.mxu0 %v1150
    %1784 = vmatprep.subr.mxu0 0.0
    %1785 = vmatpush1.msra.mxu0 %v1151
    %1786 = vmatprep.subr.mxu0 0.0
    %1787 = vmatpush1.msra.mxu0 %v1152
    %1788 = vmatprep.subr.mxu0 0.0
    %1789 = vmatpush1.msra.mxu0 0.0
    %1790 = vmatprep.subr.mxu0 0.0
    %1791 = vmatpush1.msra.mxu0 0.0
    %1792 = vmatprep.subr.mxu0 0.0
    %1793 = vmatpush1.msra.mxu0 0.0
    %1794 = vmatprep.subr.mxu0 0.0
    %1795 = vmatpush1.msra.mxu0 0.0
    %1796 = vmatprep.subr.mxu0 0.0
    %1797 = vmatpush1.msra.mxu0 0.0
    %1798 = vmatprep.subr.mxu0 0.0
    %1799 = vmatpush1.msra.mxu0 0.0
    %1800 = vmatprep.subr.mxu0 0.0
    %1801 = vmatpush1.msra.mxu0 0.0
    %1802 = vmatprep.subr.mxu0 0.0
    %1803 = vmatpush1.msra.mxu0 0.0
    %1804 = vmatprep.subr.mxu0 0.0
    %1805 = vmatpush1.msra.mxu0 0.0
    %1806 = vmatprep.subr.mxu0 0.0
    %1807 = vmatpush1.msra.mxu0 0.0
    %1808 = vmatprep.subr.mxu0 0.0
    %1809 = vmatpush1.msra.mxu0 0.0
    %1810 = vmatprep.subr.mxu0 0.0
    %1811 = vmatpush1.msra.mxu0 0.0
    %1812 = vmatprep.subr.mxu0 0.0
    %1813 = vmatpush1.msra.mxu0 0.0
    %1814 = vmatprep.subr.mxu0 0.0
    %1815 = vmatpush1.msra.mxu0 0.0
    %1816 = vmatprep.subr.mxu0 0.0
    %1817 = vmatpush1.msra.mxu0 0.0
    %1818 = vmatprep.subr.mxu0 0.0
    %1819 = vmatpush1.msra.mxu0 0.0
    %1820 = vmatprep.subr.mxu0 0.0
    %1821 = vmatpush1.msra.mxu0 0.0
    %1822 = vmatprep.subr.mxu0 0.0
    %1823 = vmatpush1.msra.mxu0 0.0
    %1824 = vmatprep.subr.mxu0 0.0
    %1825 = vmatpush1.msra.mxu0 0.0
    %1826 = vmatprep.subr.mxu0 0.0
    %1827 = vmatpush1.msra.mxu0 0.0
    %1828 = vmatprep.subr.mxu0 0.0
    %1829 = vmatpush1.msra.mxu0 0.0
    %1830 = vmatprep.subr.mxu0 0.0
    %1831 = vmatpush1.msra.mxu0 0.0
    %1832 = vmatprep.subr.mxu0 0.0
    %1833 = vmatpush1.msra.mxu0 0.0
    %1834 = vmatprep.subr.mxu0 0.0
    %1835 = vmatpush1.msra.mxu0 0.0
    %1836 = vmatprep.subr.mxu0 0.0
    %1837 = vmatpush1.msra.mxu0 0.0
    %1838 = vmatprep.subr.mxu0 0.0
    %1839 = vmatpush1.msra.mxu0 0.0
    %1840 = vmatprep.subr.mxu0 0.0
    %1841 = vmatpush1.msra.mxu0 0.0
    %1842 = vmatprep.subr.mxu0 0.0
    %1843 = vmatpush1.msra.mxu0 0.0
    %1844 = vmatprep.mubr.f32.mxu0 0.0
    %1845 = vmatmul.mubr.f32.gmra.mrb[0].mxu0 %v1778
    %v1846 = vpop.f32.mrb[0].mxu0
    %v1847 = vadd.f32 %v1774, %v1846
    %v1848 = vpop.f32.mrb[0].mxu0
    %1849 = vdwg.mxu0
    %s1850 = scalar_lea.vmem %s8, 16
    %v1851 = vld [vmem:[%s1850] sm:$0xff]
    %1852 = vrot.lane.b32.xlu0 %v1149, 126
    %v1853 = vpop.permute.xlu0 %1852
    %1854 = vrot.lane.b32.xlu0 %v1150, 126
    %v1855 = vpop.permute.xlu0 %1854
    %1856 = vrot.lane.b32.xlu0 %v1151, 126
    %v1857 = vpop.permute.xlu0 %1856
    %1858 = vrot.lane.b32.xlu0 %v1152, 126
    %v1859 = vpop.permute.xlu0 %1858
    %v1865 = vsel %vm109, %v1851, 0
    %1867 = vmatprep.subr.mxu0 0.0
    %1868 = vmatpush1.msra.mxu0 %v1853
    %1869 = vmatprep.subr.mxu0 0.0
    %1870 = vmatpush1.msra.mxu0 %v1855
    %1871 = vmatprep.subr.mxu0 0.0
    %1872 = vmatpush1.msra.mxu0 %v1857
    %1873 = vmatprep.subr.mxu0 0.0
    %1874 = vmatpush1.msra.mxu0 %v1859
    %1875 = vmatprep.subr.mxu0 0.0
    %1876 = vmatpush1.msra.mxu0 0.0
    %1877 = vmatprep.subr.mxu0 0.0
    %1878 = vmatpush1.msra.mxu0 0.0
    %1879 = vmatprep.subr.mxu0 0.0
    %1880 = vmatpush1.msra.mxu0 0.0
    %1881 = vmatprep.subr.mxu0 0.0
    %1882 = vmatpush1.msra.mxu0 0.0
    %1883 = vmatprep.subr.mxu0 0.0
    %1884 = vmatpush1.msra.mxu0 0.0
    %1885 = vmatprep.subr.mxu0 0.0
    %1886 = vmatpush1.msra.mxu0 0.0
    %1887 = vmatprep.subr.mxu0 0.0
    %1888 = vmatpush1.msra.mxu0 0.0
    %1889 = vmatprep.subr.mxu0 0.0
    %1890 = vmatpush1.msra.mxu0 0.0
    %1891 = vmatprep.subr.mxu0 0.0
    %1892 = vmatpush1.msra.mxu0 0.0
    %1893 = vmatprep.subr.mxu0 0.0
    %1894 = vmatpush1.msra.mxu0 0.0
    %1895 = vmatprep.subr.mxu0 0.0
    %1896 = vmatpush1.msra.mxu0 0.0
    %1897 = vmatprep.subr.mxu0 0.0
    %1898 = vmatpush1.msra.mxu0 0.0
    %1899 = vmatprep.subr.mxu0 0.0
    %1900 = vmatpush1.msra.mxu0 0.0
    %1901 = vmatprep.subr.mxu0 0.0
    %1902 = vmatpush1.msra.mxu0 0.0
    %1903 = vmatprep.subr.mxu0 0.0
    %1904 = vmatpush1.msra.mxu0 0.0
    %1905 = vmatprep.subr.mxu0 0.0
    %1906 = vmatpush1.msra.mxu0 0.0
    %1907 = vmatprep.subr.mxu0 0.0
    %1908 = vmatpush1.msra.mxu0 0.0
    %1909 = vmatprep.subr.mxu0 0.0
    %1910 = vmatpush1.msra.mxu0 0.0
    %1911 = vmatprep.subr.mxu0 0.0
    %1912 = vmatpush1.msra.mxu0 0.0
    %1913 = vmatprep.subr.mxu0 0.0
    %1914 = vmatpush1.msra.mxu0 0.0
    %1915 = vmatprep.subr.mxu0 0.0
    %1916 = vmatpush1.msra.mxu0 0.0
    %1917 = vmatprep.subr.mxu0 0.0
    %1918 = vmatpush1.msra.mxu0 0.0
    %1919 = vmatprep.subr.mxu0 0.0
    %1920 = vmatpush1.msra.mxu0 0.0
    %1921 = vmatprep.subr.mxu0 0.0
    %1922 = vmatpush1.msra.mxu0 0.0
    %1923 = vmatprep.subr.mxu0 0.0
    %1924 = vmatpush1.msra.mxu0 0.0
    %1925 = vmatprep.subr.mxu0 0.0
    %1926 = vmatpush1.msra.mxu0 0.0
    %1927 = vmatprep.subr.mxu0 0.0
    %1928 = vmatpush1.msra.mxu0 0.0
    %1929 = vmatprep.subr.mxu0 0.0
    %1930 = vmatpush1.msra.mxu0 0.0
    %1931 = vmatprep.mubr.f32.mxu0 0.0
    %1932 = vmatmul.mubr.f32.gmra.mrb[0].mxu0 %v1865
    %v1933 = vpop.f32.mrb[0].mxu0
    %v1934 = vadd.f32 0.0, %v1933
    %v1935 = vpop.f32.mrb[0].mxu0
    %1936 = vdwg.mxu0
    %v1937 = vadd.f32 %v1847, %v1934
    %v1938 = vld [vmem:[%s9] sm:$0xff]
    %1940 = vset.pattern.permute.xlu0 0
    %1941 = vperm.xlu0 %1940, %v1938
    %v1942 = vpop.permute.xlu0 %1941
    %v1944 = vadd.f32 %v1937, %v1942
    %v1945 = vmul.f32 %v1944, 0.2
    %v1946 = vmax.f32 %v1944, %v1945
    %v1947 = vld [vmem:[%s10] sm:$0x1]
    %s1948 = scalar_lea.vmem %s10, 1
    %v1949 = vld [vmem:[%s1948] sm:$0x1]
    %1951 = vrot.lane.b32.xlu0 %v1946, 127
    %v1952 = vpop.permute.xlu0 %1951
    %v1955 = vsel %vm223, %v1949, 0
    %1957 = vmatprep.subr.mxu0 0.0
    %1958 = vmatpush1.msra.mxu0 %v1952
    %1959 = vmatprep.subr.mxu0 0.0
    %1960 = vmatpush1.msra.mxu0 0.0
    %1961 = vmatprep.subr.mxu0 0.0
    %1962 = vmatpush1.msra.mxu0 0.0
    %1963 = vmatprep.subr.mxu0 0.0
    %1964 = vmatpush1.msra.mxu0 0.0
    %1965 = vmatprep.subr.mxu0 0.0
    %1966 = vmatpush1.msra.mxu0 0.0
    %1967 = vmatprep.subr.mxu0 0.0
    %1968 = vmatpush1.msra.mxu0 0.0
    %1969 = vmatprep.subr.mxu0 0.0
    %1970 = vmatpush1.msra.mxu0 0.0
    %1971 = vmatprep.subr.mxu0 0.0
    %1972 = vmatpush1.msra.mxu0 0.0
    %1973 = vmatprep.subr.mxu0 0.0
    %1974 = vmatpush1.msra.mxu0 0.0
    %1975 = vmatprep.subr.mxu0 0.0
    %1976 = vmatpush1.msra.mxu0 0.0
    %1977 = vmatprep.subr.mxu0 0.0
    %1978 = vmatpush1.msra.mxu0 0.0
    %1979 = vmatprep.subr.mxu0 0.0
    %1980 = vmatpush1.msra.mxu0 0.0
    %1981 = vmatprep.subr.mxu0 0.0
    %1982 = vmatpush1.msra.mxu0 0.0
    %1983 = vmatprep.subr.mxu0 0.0
    %1984 = vmatpush1.msra.mxu0 0.0
    %1985 = vmatprep.subr.mxu0 0.0
    %1986 = vmatpush1.msra.mxu0 0.0
    %1987 = vmatprep.subr.mxu0 0.0
    %1988 = vmatpush1.msra.mxu0 0.0
    %1989 = vmatprep.subr.mxu0 0.0
    %1990 = vmatpush1.msra.mxu0 0.0
    %1991 = vmatprep.subr.mxu0 0.0
    %1992 = vmatpush1.msra.mxu0 0.0
    %1993 = vmatprep.subr.mxu0 0.0
    %1994 = vmatpush1.msra.mxu0 0.0
    %1995 = vmatprep.subr.mxu0 0.0
    %1996 = vmatpush1.msra.mxu0 0.0
    %1997 = vmatprep.subr.mxu0 0.0
    %1998 = vmatpush1.msra.mxu0 0.0
    %1999 = vmatprep.subr.mxu0 0.0
    %2000 = vmatpush1.msra.mxu0 0.0
    %2001 = vmatprep.subr.mxu0 0.0
    %2002 = vmatpush1.msra.mxu0 0.0
    %2003 = vmatprep.subr.mxu0 0.0
    %2004 = vmatpush1.msra.mxu0 0.0
    %2005 = vmatprep.subr.mxu0 0.0
    %2006 = vmatpush1.msra.mxu0 0.0
    %2007 = vmatprep.subr.mxu0 0.0
    %2008 = vmatpush1.msra.mxu0 0.0
    %2009 = vmatprep.subr.mxu0 0.0
    %2010 = vmatpush1.msra.mxu0 0.0
    %2011 = vmatprep.subr.mxu0 0.0
    %2012 = vmatpush1.msra.mxu0 0.0
    %2013 = vmatprep.subr.mxu0 0.0
    %2014 = vmatpush1.msra.mxu0 0.0
    %2015 = vmatprep.subr.mxu0 0.0
    %2016 = vmatpush1.msra.mxu0 0.0
    %2017 = vmatprep.subr.mxu0 0.0
    %2018 = vmatpush1.msra.mxu0 0.0
    %2019 = vmatprep.subr.mxu0 0.0
    %2020 = vmatpush1.msra.mxu0 0.0
    %2021 = vmatprep.mubr.f32.mxu0 0.0
    %2022 = vmatmul.mubr.f32.gmra.mrb[0].mxu0 %v1955
    %v2023 = vpop.f32.mrb[0].mxu0
    %v2024 = vadd.f32 0.0, %v2023
    %v2025 = vpop.f32.mrb[0].mxu0
    %2026 = vdwg.mxu0
    %v2028 = vsel %vm223, %v1947, 0
    %2030 = vmatprep.subr.mxu0 0.0
    %2031 = vmatpush1.msra.mxu0 %v1946
    %2032 = vmatprep.subr.mxu0 0.0
    %2033 = vmatpush1.msra.mxu0 0.0
    %2034 = vmatprep.subr.mxu0 0.0
    %2035 = vmatpush1.msra.mxu0 0.0
    %2036 = vmatprep.subr.mxu0 0.0
    %2037 = vmatpush1.msra.mxu0 0.0
    %2038 = vmatprep.subr.mxu0 0.0
    %2039 = vmatpush1.msra.mxu0 0.0
    %2040 = vmatprep.subr.mxu0 0.0
    %2041 = vmatpush1.msra.mxu0 0.0
    %2042 = vmatprep.subr.mxu0 0.0
    %2043 = vmatpush1.msra.mxu0 0.0
    %2044 = vmatprep.subr.mxu0 0.0
    %2045 = vmatpush1.msra.mxu0 0.0
    %2046 = vmatprep.subr.mxu0 0.0
    %2047 = vmatpush1.msra.mxu0 0.0
    %2048 = vmatprep.subr.mxu0 0.0
    %2049 = vmatpush1.msra.mxu0 0.0
    %2050 = vmatprep.subr.mxu0 0.0
    %2051 = vmatpush1.msra.mxu0 0.0
    %2052 = vmatprep.subr.mxu0 0.0
    %2053 = vmatpush1.msra.mxu0 0.0
    %2054 = vmatprep.subr.mxu0 0.0
    %2055 = vmatpush1.msra.mxu0 0.0
    %2056 = vmatprep.subr.mxu0 0.0
    %2057 = vmatpush1.msra.mxu0 0.0
    %2058 = vmatprep.subr.mxu0 0.0
    %2059 = vmatpush1.msra.mxu0 0.0
    %2060 = vmatprep.subr.mxu0 0.0
    %2061 = vmatpush1.msra.mxu0 0.0
    %2062 = vmatprep.subr.mxu0 0.0
    %2063 = vmatpush1.msra.mxu0 0.0
    %2064 = vmatprep.subr.mxu0 0.0
    %2065 = vmatpush1.msra.mxu0 0.0
    %2066 = vmatprep.subr.mxu0 0.0
    %2067 = vmatpush1.msra.mxu0 0.0
    %2068 = vmatprep.subr.mxu0 0.0
    %2069 = vmatpush1.msra.mxu0 0.0
    %2070 = vmatprep.subr.mxu0 0.0
    %2071 = vmatpush1.msra.mxu0 0.0
    %2072 = vmatprep.subr.mxu0 0.0
    %2073 = vmatpush1.msra.mxu0 0.0
    %2074 = vmatprep.subr.mxu0 0.0
    %2075 = vmatpush1.msra.mxu0 0.0
    %2076 = vmatprep.subr.mxu0 0.0
    %2077 = vmatpush1.msra.mxu0 0.0
    %2078 = vmatprep.subr.mxu0 0.0
    %2079 = vmatpush1.msra.mxu0 0.0
    %2080 = vmatprep.subr.mxu0 0.0
    %2081 = vmatpush1.msra.mxu0 0.0
    %2082 = vmatprep.subr.mxu0 0.0
    %2083 = vmatpush1.msra.mxu0 0.0
    %2084 = vmatprep.subr.mxu0 0.0
    %2085 = vmatpush1.msra.mxu0 0.0
    %2086 = vmatprep.subr.mxu0 0.0
    %2087 = vmatpush1.msra.mxu0 0.0
    %2088 = vmatprep.subr.mxu0 0.0
    %2089 = vmatpush1.msra.mxu0 0.0
    %2090 = vmatprep.subr.mxu0 0.0
    %2091 = vmatpush1.msra.mxu0 0.0
    %2092 = vmatprep.subr.mxu0 0.0
    %2093 = vmatpush1.msra.mxu0 0.0
    %2094 = vmatprep.mubr.f32.mxu0 0.0
    %2095 = vmatmul.mubr.f32.gmra.mrb[0].mxu0 %v2028
    %v2096 = vpop.f32.mrb[0].mxu0
    %v2097 = vadd.f32 %v2024, %v2096
    %v2098 = vpop.f32.mrb[0].mxu0
    %2099 = vdwg.mxu0
    %s2100 = scalar_lea.vmem %s10, 2
    %v2101 = vld [vmem:[%s2100] sm:$0x1]
    %2102 = vrot.lane.b32.xlu0 %v1946, 126
    %v2103 = vpop.permute.xlu0 %2102
    %v2106 = vsel %vm223, %v2101, 0
    %2108 = vmatprep.subr.mxu0 0.0
    %2109 = vmatpush1.msra.mxu0 %v2103
    %2110 = vmatprep.subr.mxu0 0.0
    %2111 = vmatpush1.msra.mxu0 0.0
    %2112 = vmatprep.subr.mxu0 0.0
    %2113 = vmatpush1.msra.mxu0 0.0
    %2114 = vmatprep.subr.mxu0 0.0
    %2115 = vmatpush1.msra.mxu0 0.0
    %2116 = vmatprep.subr.mxu0 0.0
    %2117 = vmatpush1.msra.mxu0 0.0
    %2118 = vmatprep.subr.mxu0 0.0
    %2119 = vmatpush1.msra.mxu0 0.0
    %2120 = vmatprep.subr.mxu0 0.0
    %2121 = vmatpush1.msra.mxu0 0.0
    %2122 = vmatprep.subr.mxu0 0.0
    %2123 = vmatpush1.msra.mxu0 0.0
    %2124 = vmatprep.subr.mxu0 0.0
    %2125 = vmatpush1.msra.mxu0 0.0
    %2126 = vmatprep.subr.mxu0 0.0
    %2127 = vmatpush1.msra.mxu0 0.0
    %2128 = vmatprep.subr.mxu0 0.0
    %2129 = vmatpush1.msra.mxu0 0.0
    %2130 = vmatprep.subr.mxu0 0.0
    %2131 = vmatpush1.msra.mxu0 0.0
    %2132 = vmatprep.subr.mxu0 0.0
    %2133 = vmatpush1.msra.mxu0 0.0
    %2134 = vmatprep.subr.mxu0 0.0
    %2135 = vmatpush1.msra.mxu0 0.0
    %2136 = vmatprep.subr.mxu0 0.0
    %2137 = vmatpush1.msra.mxu0 0.0
    %2138 = vmatprep.subr.mxu0 0.0
    %2139 = vmatpush1.msra.mxu0 0.0
    %2140 = vmatprep.subr.mxu0 0.0
    %2141 = vmatpush1.msra.mxu0 0.0
    %2142 = vmatprep.subr.mxu0 0.0
    %2143 = vmatpush1.msra.mxu0 0.0
    %2144 = vmatprep.subr.mxu0 0.0
    %2145 = vmatpush1.msra.mxu0 0.0
    %2146 = vmatprep.subr.mxu0 0.0
    %2147 = vmatpush1.msra.mxu0 0.0
    %2148 = vmatprep.subr.mxu0 0.0
    %2149 = vmatpush1.msra.mxu0 0.0
    %2150 = vmatprep.subr.mxu0 0.0
    %2151 = vmatpush1.msra.mxu0 0.0
    %2152 = vmatprep.subr.mxu0 0.0
    %2153 = vmatpush1.msra.mxu0 0.0
    %2154 = vmatprep.subr.mxu0 0.0
    %2155 = vmatpush1.msra.mxu0 0.0
    %2156 = vmatprep.subr.mxu0 0.0
    %2157 = vmatpush1.msra.mxu0 0.0
    %2158 = vmatprep.subr.mxu0 0.0
    %2159 = vmatpush1.msra.mxu0 0.0
    %2160 = vmatprep.subr.mxu0 0.0
    %2161 = vmatpush1.msra.mxu0 0.0
    %2162 = vmatprep.subr.mxu0 0.0
    %2163 = vmatpush1.msra.mxu0 0.0
    %2164 = vmatprep.subr.mxu0 0.0
    %2165 = vmatpush1.msra.mxu0 0.0
    %2166 = vmatprep.subr.mxu0 0.0
    %2167 = vmatpush1.msra.mxu0 0.0
    %2168 = vmatprep.subr.mxu0 0.0
    %2169 = vmatpush1.msra.mxu0 0.0
    %2170 = vmatprep.subr.mxu0 0.0
    %2171 = vmatpush1.msra.mxu0 0.0
    %2172 = vmatprep.mubr.f32.mxu0 0.0
    %2173 = vmatmul.mubr.f32.gmra.mrb[0].mxu0 %v2106
    %v2174 = vpop.f32.mrb[0].mxu0
    %v2175 = vadd.f32 0.0, %v2174
    %v2176 = vpop.f32.mrb[0].mxu0
    %2177 = vdwg.mxu0
    %v2178 = vadd.f32 %v2097, %v2175
    %v2179 = vld [vmem:[#allocation2] sm:$0x1]
    %2181 = vset.pattern.permute.xlu0 0
    %2182 = vperm.xlu0 %2181, %v2179
    %v2183 = vpop.permute.xlu0 %2182
    %v2185 = vlaneseq
    %v2186 = vshrl.u32 %v2185, 7
    %v2187 = vsub.s32 0, %v2186
    %v2188 = vrot.slane %v2183, %v2187
    %v2189 = vadd.f32 %v2178, %v2188
    %v2190 = vmul.f32 %v2189, 0.2
    %v2191 = vmax.f32 %v2189, %v2190
    %vm2192 = vcmask 57344
    %2193 = vst.msk [vmem:[#allocation4] sm:$0x1] %vm2192, %v2191
    %vm2194 = vcmask 155648
    %2195 = vst.msk [vmem:[#allocation6] sm:$0x1] %vm2194, %v1684
    %vm2196 = vcmask 240640
    %2197 = vst.msk [vmem:[#allocation8] sm:$0xf] %vm2196, %v457
    %vm2198 = vcmask 113664
    %2199 = vst.msk [vmem:[#allocation9] sm:$0xff] %vm2198, %v800
    %2200 = vst.msk [vmem:[%s22] sm:$0xff] %vm1173, %v1149
    %2201 = vst.msk [vmem:[%s22 + $0x8] sm:$0xff] %vm1173, %v1150
    %2202 = vst.msk [vmem:[%s22 + $0x10] sm:$0xff] %vm1173, %v1151
    %2203 = vst.msk [vmem:[%s22 + $0x18] sm:$0xff] %vm1173, %v1152
    %vm2204 = vcmask 179200
    %2205 = vst.msk [vmem:[#allocation11] sm:$0xff] %vm2204, %v1439
    %2206 = vst.msk [vmem:[#allocation12] sm:$0x1] %vm2194, %v1684
    %vm2207 = vcmask 80896
    %2208 = vst.msk [vmem:[#allocation14] sm:$0xff] %vm2207, %v1946
    %2209 = vst.msk [vmem:[#allocation15] sm:$0x1] %vm2192, %v2191
    %s2210 = scalar_lea.vmem %s0, 8
    %v2211 = vld [vmem:[%s2210] sm:$0xff]
    %v2212 = vld [vmem:[%s2] sm:$0xf]
    %v2213 = vld [vmem:[%s217] sm:$0xf]
    %2215 = vrot.lane.b32.xlu0 %v2211, 127
    %v2216 = vpop.permute.xlu0 %2215
    %v2219 = vsel %vm223, %v2213, 0
    %2221 = vmatprep.subr.mxu0 0.0
    %2222 = vmatpush1.msra.mxu0 %v2216
    %2223 = vmatprep.subr.mxu0 0.0
    %2224 = vmatpush1.msra.mxu0 0.0
    %2225 = vmatprep.subr.mxu0 0.0
    %2226 = vmatpush1.msra.mxu0 0.0
    %2227 = vmatprep.subr.mxu0 0.0
    %2228 = vmatpush1.msra.mxu0 0.0
    %2229 = vmatprep.subr.mxu0 0.0
    %2230 = vmatpush1.msra.mxu0 0.0
    %2231 = vmatprep.subr.mxu0 0.0
    %2232 = vmatpush1.msra.mxu0 0.0
    %2233 = vmatprep.subr.mxu0 0.0
    %2234 = vmatpush1.msra.mxu0 0.0
    %2235 = vmatprep.subr.mxu0 0.0
    %2236 = vmatpush1.msra.mxu0 0.0
    %2237 = vmatprep.subr.mxu0 0.0
    %2238 = vmatpush1.msra.mxu0 0.0
    %2239 = vmatprep.subr.mxu0 0.0
    %2240 = vmatpush1.msra.mxu0 0.0
    %2241 = vmatprep.subr.mxu0 0.0
    %2242 = vmatpush1.msra.mxu0 0.0
    %2243 = vmatprep.subr.mxu0 0.0
    %2244 = vmatpush1.msra.mxu0 0.0
    %2245 = vmatprep.subr.mxu0 0.0
    %2246 = vmatpush1.msra.mxu0 0.0
    %2247 = vmatprep.subr.mxu0 0.0
    %2248 = vmatpush1.msra.mxu0 0.0
    %2249 = vmatprep.subr.mxu0 0.0
    %2250 = vmatpush1.msra.mxu0 0.0
    %2251 = vmatprep.subr.mxu0 0.0
    %2252 = vmatpush1.msra.mxu0 0.0
    %2253 = vmatprep.subr.mxu0 0.0
    %2254 = vmatpush1.msra.mxu0 0.0
    %2255 = vmatprep.subr.mxu0 0.0
    %2256 = vmatpush1.msra.mxu0 0.0
    %2257 = vmatprep.subr.mxu0 0.0
    %2258 = vmatpush1.msra.mxu0 0.0
    %2259 = vmatprep.subr.mxu0 0.0
    %2260 = vmatpush1.msra.mxu0 0.0
    %2261 = vmatprep.subr.mxu0 0.0
    %2262 = vmatpush1.msra.mxu0 0.0
    %2263 = vmatprep.subr.mxu0 0.0
    %2264 = vmatpush1.msra.mxu0 0.0
    %2265 = vmatprep.subr.mxu0 0.0
    %2266 = vmatpush1.msra.mxu0 0.0
    %2267 = vmatprep.subr.mxu0 0.0
    %2268 = vmatpush1.msra.mxu0 0.0
    %2269 = vmatprep.subr.mxu0 0.0
    %2270 = vmatpush1.msra.mxu0 0.0
    %2271 = vmatprep.subr.mxu0 0.0
    %2272 = vmatpush1.msra.mxu0 0.0
    %2273 = vmatprep.subr.mxu0 0.0
    %2274 = vmatpush1.msra.mxu0 0.0
    %2275 = vmatprep.subr.mxu0 0.0
    %2276 = vmatpush1.msra.mxu0 0.0
    %2277 = vmatprep.subr.mxu0 0.0
    %2278 = vmatpush1.msra.mxu0 0.0
    %2279 = vmatprep.subr.mxu0 0.0
    %2280 = vmatpush1.msra.mxu0 0.0
    %2281 = vmatprep.subr.mxu0 0.0
    %2282 = vmatpush1.msra.mxu0 0.0
    %2283 = vmatprep.subr.mxu0 0.0
    %2284 = vmatpush1.msra.mxu0 0.0
    %2285 = vmatprep.mubr.f32.mxu0 0.0
    %2286 = vmatmul.mubr.f32.gmra.mrb[0].mxu0 %v2219
    %v2287 = vpop.f32.mrb[0].mxu0
    %v2288 = vadd.f32 0.0, %v2287
    %v2289 = vpop.f32.mrb[0].mxu0
    %2290 = vdwg.mxu0
    %v2292 = vsel %vm223, %v2212, 0
    %2294 = vmatprep.subr.mxu0 0.0
    %2295 = vmatpush1.msra.mxu0 %v2211
    %2296 = vmatprep.subr.mxu0 0.0
    %2297 = vmatpush1.msra.mxu0 0.0
    %2298 = vmatprep.subr.mxu0 0.0
    %2299 = vmatpush1.msra.mxu0 0.0
    %2300 = vmatprep.subr.mxu0 0.0
    %2301 = vmatpush1.msra.mxu0 0.0
    %2302 = vmatprep.subr.mxu0 0.0
    %2303 = vmatpush1.msra.mxu0 0.0
    %2304 = vmatprep.subr.mxu0 0.0
    %2305 = vmatpush1.msra.mxu0 0.0
    %2306 = vmatprep.subr.mxu0 0.0
    %2307 = vmatpush1.msra.mxu0 0.0
    %2308 = vmatprep.subr.mxu0 0.0
    %2309 = vmatpush1.msra.mxu0 0.0
    %2310 = vmatprep.subr.mxu0 0.0
    %2311 = vmatpush1.msra.mxu0 0.0
    %2312 = vmatprep.subr.mxu0 0.0
    %2313 = vmatpush1.msra.mxu0 0.0
    %2314 = vmatprep.subr.mxu0 0.0
    %2315 = vmatpush1.msra.mxu0 0.0
    %2316 = vmatprep.subr.mxu0 0.0
    %2317 = vmatpush1.msra.mxu0 0.0
    %2318 = vmatprep.subr.mxu0 0.0
    %2319 = vmatpush1.msra.mxu0 0.0
    %2320 = vmatprep.subr.mxu0 0.0
    %2321 = vmatpush1.msra.mxu0 0.0
    %2322 = vmatprep.subr.mxu0 0.0
    %2323 = vmatpush1.msra.mxu0 0.0
    %2324 = vmatprep.subr.mxu0 0.0
    %2325 = vmatpush1.msra.mxu0 0.0
    %2326 = vmatprep.subr.mxu0 0.0
    %2327 = vmatpush1.msra.mxu0 0.0
    %2328 = vmatprep.subr.mxu0 0.0
    %2329 = vmatpush1.msra.mxu0 0.0
    %2330 = vmatprep.subr.mxu0 0.0
    %2331 = vmatpush1.msra.mxu0 0.0
    %2332 = vmatprep.subr.mxu0 0.0
    %2333 = vmatpush1.msra.mxu0 0.0
    %2334 = vmatprep.subr.mxu0 0.0
    %2335 = vmatpush1.msra.mxu0 0.0
    %2336 = vmatprep.subr.mxu0 0.0
    %2337 = vmatpush1.msra.mxu0 0.0
    %2338 = vmatprep.subr.mxu0 0.0
    %2339 = vmatpush1.msra.mxu0 0.0
    %2340 = vmatprep.subr.mxu0 0.0
    %2341 = vmatpush1.msra.mxu0 0.0
    %2342 = vmatprep.subr.mxu0 0.0
    %2343 = vmatpush1.msra.mxu0 0.0
    %2344 = vmatprep.subr.mxu0 0.0
    %2345 = vmatpush1.msra.mxu0 0.0
    %2346 = vmatprep.subr.mxu0 0.0
    %2347 = vmatpush1.msra.mxu0 0.0
    %2348 = vmatprep.subr.mxu0 0.0
    %2349 = vmatpush1.msra.mxu0 0.0
    %2350 = vmatprep.subr.mxu0 0.0
    %2351 = vmatpush1.msra.mxu0 0.0
    %2352 = vmatprep.subr.mxu0 0.0
    %2353 = vmatpush1.msra.mxu0 0.0
    %2354 = vmatprep.subr.mxu0 0.0
    %2355 = vmatpush1.msra.mxu0 0.0
    %2356 = vmatprep.subr.mxu0 0.0
    %2357 = vmatpush1.msra.mxu0 0.0
    %2358 = vmatprep.mubr.f32.mxu0 0.0
    %2359 = vmatmul.mubr.f32.gmra.mrb[0].mxu0 %v2292
    %v2360 = vpop.f32.mrb[0].mxu0
    %v2361 = vadd.f32 %v2288, %v2360
    %v2362 = vpop.f32.mrb[0].mxu0
    %2363 = vdwg.mxu0
    %v2364 = vld [vmem:[%s370] sm:$0xf]
    %2365 = vrot.lane.b32.xlu0 %v2211, 126
    %v2366 = vpop.permute.xlu0 %2365
    %v2369 = vsel %vm223, %v2364, 0
    %2371 = vmatprep.subr.mxu0 0.0
    %2372 = vmatpush1.msra.mxu0 %v2366
    %2373 = vmatprep.subr.mxu0 0.0
    %2374 = vmatpush1.msra.mxu0 0.0
    %2375 = vmatprep.subr.mxu0 0.0
    %2376 = vmatpush1.msra.mxu0 0.0
    %2377 = vmatprep.subr.mxu0 0.0
    %2378 = vmatpush1.msra.mxu0 0.0
    %2379 = vmatprep.subr.mxu0 0.0
    %2380 = vmatpush1.msra.mxu0 0.0
    %2381 = vmatprep.subr.mxu0 0.0
    %2382 = vmatpush1.msra.mxu0 0.0
    %2383 = vmatprep.subr.mxu0 0.0
    %2384 = vmatpush1.msra.mxu0 0.0
    %2385 = vmatprep.subr.mxu0 0.0
    %2386 = vmatpush1.msra.mxu0 0.0
    %2387 = vmatprep.subr.mxu0 0.0
    %2388 = vmatpush1.msra.mxu0 0.0
    %2389 = vmatprep.subr.mxu0 0.0
    %2390 = vmatpush1.msra.mxu0 0.0
    %2391 = vmatprep.subr.mxu0 0.0
    %2392 = vmatpush1.msra.mxu0 0.0
    %2393 = vmatprep.subr.mxu0 0.0
    %2394 = vmatpush1.msra.mxu0 0.0
    %2395 = vmatprep.subr.mxu0 0.0
    %2396 = vmatpush1.msra.mxu0 0.0
    %2397 = vmatprep.subr.mxu0 0.0
    %2398 = vmatpush1.msra.mxu0 0.0
    %2399 = vmatprep.subr.mxu0 0.0
    %2400 = vmatpush1.msra.mxu0 0.0
    %2401 = vmatprep.subr.mxu0 0.0
    %2402 = vmatpush1.msra.mxu0 0.0
    %2403 = vmatprep.subr.mxu0 0.0
    %2404 = vmatpush1.msra.mxu0 0.0
    %2405 = vmatprep.subr.mxu0 0.0
    %2406 = vmatpush1.msra.mxu0 0.0
    %2407 = vmatprep.subr.mxu0 0.0
    %2408 = vmatpush1.msra.mxu0 0.0
    %2409 = vmatprep.subr.mxu0 0.0
    %2410 = vmatpush1.msra.mxu0 0.0
    %2411 = vmatprep.subr.mxu0 0.0
    %2412 = vmatpush1.msra.mxu0 0.0
    %2413 = vmatprep.subr.mxu0 0.0
    %2414 = vmatpush1.msra.mxu0 0.0
    %2415 = vmatprep.subr.mxu0 0.0
    %2416 = vmatpush1.msra.mxu0 0.0
    %2417 = vmatprep.subr.mxu0 0.0
    %2418 = vmatpush1.msra.mxu0 0.0
    %2419 = vmatprep.subr.mxu0 0.0
    %2420 = vmatpush1.msra.mxu0 0.0
    %2421 = vmatprep.subr.mxu0 0.0
    %2422 = vmatpush1.msra.mxu0 0.0
    %2423 = vmatprep.subr.mxu0 0.0
    %2424 = vmatpush1.msra.mxu0 0.0
    %2425 = vmatprep.subr.mxu0 0.0
    %2426 = vmatpush1.msra.mxu0 0.0
    %2427 = vmatprep.subr.mxu0 0.0
    %2428 = vmatpush1.msra.mxu0 0.0
    %2429 = vmatprep.subr.mxu0 0.0
    %2430 = vmatpush1.msra.mxu0 0.0
    %2431 = vmatprep.subr.mxu0 0.0
    %2432 = vmatpush1.msra.mxu0 0.0
    %2433 = vmatprep.subr.mxu0 0.0
    %2434 = vmatpush1.msra.mxu0 0.0
    %2435 = vmatprep.mubr.f32.mxu0 0.0
    %2436 = vmatmul.mubr.f32.gmra.mrb[0].mxu0 %v2369
    %v2437 = vpop.f32.mrb[0].mxu0
    %v2438 = vadd.f32 0.0, %v2437
    %v2439 = vpop.f32.mrb[0].mxu0
    %2440 = vdwg.mxu0
    %v2441 = vadd.f32 %v2361, %v2438
    %v2442 = vld [vmem:[%s3] sm:$0xf]
    %2444 = vset.pattern.permute.xlu0 0
    %2445 = vperm.xlu0 %2444, %v2442
    %v2446 = vpop.permute.xlu0 %2445
    %v2448 = vadd.f32 %v2441, %v2446
    %v2449 = vmul.f32 %v2448, 0.2
    %v2450 = vmax.f32 %v2448, %v2449
    %v2451 = vld [vmem:[%s4] sm:$0xff]
    %v2452 = vld [vmem:[%s459] sm:$0xff]
    %2454 = vrot.lane.b32.xlu0 %v2450, 127
    %v2455 = vpop.permute.xlu0 %2454
    %v2457 = vsel %vm464, %v2452, 0
    %v2459 = vsel %vm468, %v2455, 0
    %2461 = vmatprep.subr.mxu0 0.0
    %2462 = vmatpush1.msra.mxu0 %v2459
    %2463 = vmatprep.subr.mxu0 0.0
    %2464 = vmatpush1.msra.mxu0 0.0
    %2465 = vmatprep.subr.mxu0 0.0
    %2466 = vmatpush1.msra.mxu0 0.0
    %2467 = vmatprep.subr.mxu0 0.0
    %2468 = vmatpush1.msra.mxu0 0.0
    %2469 = vmatprep.subr.mxu0 0.0
    %2470 = vmatpush1.msra.mxu0 0.0
    %2471 = vmatprep.subr.mxu0 0.0
    %2472 = vmatpush1.msra.mxu0 0.0
    %2473 = vmatprep.subr.mxu0 0.0
    %2474 = vmatpush1.msra.mxu0 0.0
    %2475 = vmatprep.subr.mxu0 0.0
    %2476 = vmatpush1.msra.mxu0 0.0
    %2477 = vmatprep.subr.mxu0 0.0
    %2478 = vmatpush1.msra.mxu0 0.0
    %2479 = vmatprep.subr.mxu0 0.0
    %2480 = vmatpush1.msra.mxu0 0.0
    %2481 = vmatprep.subr.mxu0 0.0
    %2482 = vmatpush1.msra.mxu0 0.0
    %2483 = vmatprep.subr.mxu0 0.0
    %2484 = vmatpush1.msra.mxu0 0.0
    %2485 = vmatprep.subr.mxu0 0.0
    %2486 = vmatpush1.msra.mxu0 0.0
    %2487 = vmatprep.subr.mxu0 0.0
    %2488 = vmatpush1.msra.mxu0 0.0
    %2489 = vmatprep.subr.mxu0 0.0
    %2490 = vmatpush1.msra.mxu0 0.0
    %2491 = vmatprep.subr.mxu0 0.0
    %2492 = vmatpush1.msra.mxu0 0.0
    %2493 = vmatprep.subr.mxu0 0.0
    %2494 = vmatpush1.msra.mxu0 0.0
    %2495 = vmatprep.subr.mxu0 0.0
    %2496 = vmatpush1.msra.mxu0 0.0
    %2497 = vmatprep.subr.mxu0 0.0
    %2498 = vmatpush1.msra.mxu0 0.0
    %2499 = vmatprep.subr.mxu0 0.0
    %2500 = vmatpush1.msra.mxu0 0.0
    %2501 = vmatprep.subr.mxu0 0.0
    %2502 = vmatpush1.msra.mxu0 0.0
    %2503 = vmatprep.subr.mxu0 0.0
    %2504 = vmatpush1.msra.mxu0 0.0
    %2505 = vmatprep.subr.mxu0 0.0
    %2506 = vmatpush1.msra.mxu0 0.0
    %2507 = vmatprep.subr.mxu0 0.0
    %2508 = vmatpush1.msra.mxu0 0.0
    %2509 = vmatprep.subr.mxu0 0.0
    %2510 = vmatpush1.msra.mxu0 0.0
    %2511 = vmatprep.subr.mxu0 0.0
    %2512 = vmatpush1.msra.mxu0 0.0
    %2513 = vmatprep.subr.mxu0 0.0
    %2514 = vmatpush1.msra.mxu0 0.0
    %2515 = vmatprep.subr.mxu0 0.0
    %2516 = vmatpush1.msra.mxu0 0.0
    %2517 = vmatprep.subr.mxu0 0.0
    %2518 = vmatpush1.msra.mxu0 0.0
    %2519 = vmatprep.subr.mxu0 0.0
    %2520 = vmatpush1.msra.mxu0 0.0
    %2521 = vmatprep.subr.mxu0 0.0
    %2522 = vmatpush1.msra.mxu0 0.0
    %2523 = vmatprep.subr.mxu0 0.0
    %2524 = vmatpush1.msra.mxu0 0.0
    %2525 = vmatprep.mubr.f32.mxu0 0.0
    %2526 = vmatmul.mubr.f32.gmra.mrb[0].mxu0 %v2457
    %v2527 = vpop.f32.mrb[0].mxu0
    %v2528 = vadd.f32 0.0, %v2527
    %v2529 = vpop.f32.mrb[0].mxu0
    %2530 = vdwg.mxu0
    %v2532 = vsel %vm464, %v2451, 0
    %v2534 = vsel %vm468, %v2450, 0
    %2536 = vmatprep.subr.mxu0 0.0
    %2537 = vmatpush1.msra.mxu0 %v2534
    %2538 = vmatprep.subr.mxu0 0.0
    %2539 = vmatpush1.msra.mxu0 0.0
    %2540 = vmatprep.subr.mxu0 0.0
    %2541 = vmatpush1.msra.mxu0 0.0
    %2542 = vmatprep.subr.mxu0 0.0
    %2543 = vmatpush1.msra.mxu0 0.0
    %2544 = vmatprep.subr.mxu0 0.0
    %2545 = vmatpush1.msra.mxu0 0.0
    %2546 = vmatprep.subr.mxu0 0.0
    %2547 = vmatpush1.msra.mxu0 0.0
    %2548 = vmatprep.subr.mxu0 0.0
    %2549 = vmatpush1.msra.mxu0 0.0
    %2550 = vmatprep.subr.mxu0 0.0
    %2551 = vmatpush1.msra.mxu0 0.0
    %2552 = vmatprep.subr.mxu0 0.0
    %2553 = vmatpush1.msra.mxu0 0.0
    %2554 = vmatprep.subr.mxu0 0.0
    %2555 = vmatpush1.msra.mxu0 0.0
    %2556 = vmatprep.subr.mxu0 0.0
    %2557 = vmatpush1.msra.mxu0 0.0
    %2558 = vmatprep.subr.mxu0 0.0
    %2559 = vmatpush1.msra.mxu0 0.0
    %2560 = vmatprep.subr.mxu0 0.0
    %2561 = vmatpush1.msra.mxu0 0.0
    %2562 = vmatprep.subr.mxu0 0.0
    %2563 = vmatpush1.msra.mxu0 0.0
    %2564 = vmatprep.subr.mxu0 0.0
    %2565 = vmatpush1.msra.mxu0 0.0
    %2566 = vmatprep.subr.mxu0 0.0
    %2567 = vmatpush1.msra.mxu0 0.0
    %2568 = vmatprep.subr.mxu0 0.0
    %2569 = vmatpush1.msra.mxu0 0.0
    %2570 = vmatprep.subr.mxu0 0.0
    %2571 = vmatpush1.msra.mxu0 0.0
    %2572 = vmatprep.subr.mxu0 0.0
    %2573 = vmatpush1.msra.mxu0 0.0
    %2574 = vmatprep.subr.mxu0 0.0
    %2575 = vmatpush1.msra.mxu0 0.0
    %2576 = vmatprep.subr.mxu0 0.0
    %2577 = vmatpush1.msra.mxu0 0.0
    %2578 = vmatprep.subr.mxu0 0.0
    %2579 = vmatpush1.msra.mxu0 0.0
    %2580 = vmatprep.subr.mxu0 0.0
    %2581 = vmatpush1.msra.mxu0 0.0
    %2582 = vmatprep.subr.mxu0 0.0
    %2583 = vmatpush1.msra.mxu0 0.0
    %2584 = vmatprep.subr.mxu0 0.0
    %2585 = vmatpush1.msra.mxu0 0.0
    %2586 = vmatprep.subr.mxu0 0.0
    %2587 = vmatpush1.msra.mxu0 0.0
    %2588 = vmatprep.subr.mxu0 0.0
    %2589 = vmatpush1.msra.mxu0 0.0
    %2590 = vmatprep.subr.mxu0 0.0
    %2591 = vmatpush1.msra.mxu0 0.0
    %2592 = vmatprep.subr.mxu0 0.0
    %2593 = vmatpush1.msra.mxu0 0.0
    %2594 = vmatprep.subr.mxu0 0.0
    %2595 = vmatpush1.msra.mxu0 0.0
    %2596 = vmatprep.subr.mxu0 0.0
    %2597 = vmatpush1.msra.mxu0 0.0
    %2598 = vmatprep.subr.mxu0 0.0
    %2599 = vmatpush1.msra.mxu0 0.0
    %2600 = vmatprep.mubr.f32.mxu0 0.0
    %2601 = vmatmul.mubr.f32.gmra.mrb[0].mxu0 %v2532
    %v2602 = vpop.f32.mrb[0].mxu0
    %v2603 = vadd.f32 %v2528, %v2602
    %v2604 = vpop.f32.mrb[0].mxu0
    %2605 = vdwg.mxu0
    %v2606 = vld [vmem:[%s616] sm:$0xff]
    %2607 = vrot.lane.b32.xlu0 %v2450, 126
    %v2608 = vpop.permute.xlu0 %2607
    %v2610 = vsel %vm464, %v2606, 0
    %v2612 = vsel %vm468, %v2608, 0
    %2614 = vmatprep.subr.mxu0 0.0
    %2615 = vmatpush1.msra.mxu0 %v2612
    %2616 = vmatprep.subr.mxu0 0.0
    %2617 = vmatpush1.msra.mxu0 0.0
    %2618 = vmatprep.subr.mxu0 0.0
    %2619 = vmatpush1.msra.mxu0 0.0
    %2620 = vmatprep.subr.mxu0 0.0
    %2621 = vmatpush1.msra.mxu0 0.0
    %2622 = vmatprep.subr.mxu0 0.0
    %2623 = vmatpush1.msra.mxu0 0.0
    %2624 = vmatprep.subr.mxu0 0.0
    %2625 = vmatpush1.msra.mxu0 0.0
    %2626 = vmatprep.subr.mxu0 0.0
    %2627 = vmatpush1.msra.mxu0 0.0
    %2628 = vmatprep.subr.mxu0 0.0
    %2629 = vmatpush1.msra.mxu0 0.0
    %2630 = vmatprep.subr.mxu0 0.0
    %2631 = vmatpush1.msra.mxu0 0.0
    %2632 = vmatprep.subr.mxu0 0.0
    %2633 = vmatpush1.msra.mxu0 0.0
    %2634 = vmatprep.subr.mxu0 0.0
    %2635 = vmatpush1.msra.mxu0 0.0
    %2636 = vmatprep.subr.mxu0 0.0
    %2637 = vmatpush1.msra.mxu0 0.0
    %2638 = vmatprep.subr.mxu0 0.0
    %2639 = vmatpush1.msra.mxu0 0.0
    %2640 = vmatprep.subr.mxu0 0.0
    %2641 = vmatpush1.msra.mxu0 0.0
    %2642 = vmatprep.subr.mxu0 0.0
    %2643 = vmatpush1.msra.mxu0 0.0
    %2644 = vmatprep.subr.mxu0 0.0
    %2645 = vmatpush1.msra.mxu0 0.0
    %2646 = vmatprep.subr.mxu0 0.0
    %2647 = vmatpush1.msra.mxu0 0.0
    %2648 = vmatprep.subr.mxu0 0.0
    %2649 = vmatpush1.msra.mxu0 0.0
    %2650 = vmatprep.subr.mxu0 0.0
    %2651 = vmatpush1.msra.mxu0 0.0
    %2652 = vmatprep.subr.mxu0 0.0
    %2653 = vmatpush1.msra.mxu0 0.0
    %2654 = vmatprep.subr.mxu0 0.0
    %2655 = vmatpush1.msra.mxu0 0.0
    %2656 = vmatprep.subr.mxu0 0.0
    %2657 = vmatpush1.msra.mxu0 0.0
    %2658 = vmatprep.subr.mxu0 0.0
    %2659 = vmatpush1.msra.mxu0 0.0
    %2660 = vmatprep.subr.mxu0 0.0
    %2661 = vmatpush1.msra.mxu0 0.0
    %2662 = vmatprep.subr.mxu0 0.0
    %2663 = vmatpush1.msra.mxu0 0.0
    %2664 = vmatprep.subr.mxu0 0.0
    %2665 = vmatpush1.msra.mxu0 0.0
    %2666 = vmatprep.subr.mxu0 0.0
    %2667 = vmatpush1.msra.mxu0 0.0
    %2668 = vmatprep.subr.mxu0 0.0
    %2669 = vmatpush1.msra.mxu0 0.0
    %2670 = vmatprep.subr.mxu0 0.0
    %2671 = vmatpush1.msra.mxu0 0.0
    %2672 = vmatprep.subr.mxu0 0.0
    %2673 = vmatpush1.msra.mxu0 0.0
    %2674 = vmatprep.subr.mxu0 0.0
    %2675 = vmatpush1.msra.mxu0 0.0
    %2676 = vmatprep.subr.mxu0 0.0
    %2677 = vmatpush1.msra.mxu0 0.0
    %2678 = vmatprep.mubr.f32.mxu0 0.0
    %2679 = vmatmul.mubr.f32.gmra.mrb[0].mxu0 %v2610
    %v2680 = vpop.f32.mrb[0].mxu0
    %v2681 = vadd.f32 0.0, %v2680
    %v2682 = vpop.f32.mrb[0].mxu0
    %2683 = vdwg.mxu0
    %v2684 = vadd.f32 %v2603, %v2681
    %v2685 = vld [vmem:[%s5] sm:$0xff]
    %2687 = vset.pattern.permute.xlu0 0
    %2688 = vperm.xlu0 %2687, %v2685
    %v2689 = vpop.permute.xlu0 %2688
    %v2692 = vsel %vm722, %v2684, 0
    %2694 = vmatprep.subr.mxu0 0.0
    %2695 = vmatpush1.msra.mxu0 %v712
    %2696 = vmatprep.subr.mxu0 0.0
    %2697 = vmatpush1.msra.mxu0 %v713
    %2698 = vmatprep.subr.mxu0 0.0
    %2699 = vmatpush1.msra.mxu0 %v714
    %2700 = vmatprep.subr.mxu0 0.0
    %2701 = vmatpush1.msra.mxu0 %v727
    %2702 = vmatprep.subr.mxu0 0.0
    %2703 = vmatpush1.msra.mxu0 0.0
    %2704 = vmatprep.subr.mxu0 0.0
    %2705 = vmatpush1.msra.mxu0 0.0
    %2706 = vmatprep.subr.mxu0 0.0
    %2707 = vmatpush1.msra.mxu0 0.0
    %2708 = vmatprep.subr.mxu0 0.0
    %2709 = vmatpush1.msra.mxu0 0.0
    %2710 = vmatprep.subr.mxu0 0.0
    %2711 = vmatpush1.msra.mxu0 0.0
    %2712 = vmatprep.subr.mxu0 0.0
    %2713 = vmatpush1.msra.mxu0 0.0
    %2714 = vmatprep.subr.mxu0 0.0
    %2715 = vmatpush1.msra.mxu0 0.0
    %2716 = vmatprep.subr.mxu0 0.0
    %2717 = vmatpush1.msra.mxu0 0.0
    %2718 = vmatprep.subr.mxu0 0.0
    %2719 = vmatpush1.msra.mxu0 0.0
    %2720 = vmatprep.subr.mxu0 0.0
    %2721 = vmatpush1.msra.mxu0 0.0
    %2722 = vmatprep.subr.mxu0 0.0
    %2723 = vmatpush1.msra.mxu0 0.0
    %2724 = vmatprep.subr.mxu0 0.0
    %2725 = vmatpush1.msra.mxu0 0.0
    %2726 = vmatprep.subr.mxu0 0.0
    %2727 = vmatpush1.msra.mxu0 0.0
    %2728 = vmatprep.subr.mxu0 0.0
    %2729 = vmatpush1.msra.mxu0 0.0
    %2730 = vmatprep.subr.mxu0 0.0
    %2731 = vmatpush1.msra.mxu0 0.0
    %2732 = vmatprep.subr.mxu0 0.0
    %2733 = vmatpush1.msra.mxu0 0.0
    %2734 = vmatprep.subr.mxu0 0.0
    %2735 = vmatpush1.msra.mxu0 0.0
    %2736 = vmatprep.subr.mxu0 0.0
    %2737 = vmatpush1.msra.mxu0 0.0
    %2738 = vmatprep.subr.mxu0 0.0
    %2739 = vmatpush1.msra.mxu0 0.0
    %2740 = vmatprep.subr.mxu0 0.0
    %2741 = vmatpush1.msra.mxu0 0.0
    %2742 = vmatprep.subr.mxu0 0.0
    %2743 = vmatpush1.msra.mxu0 0.0
    %2744 = vmatprep.subr.mxu0 0.0
    %2745 = vmatpush1.msra.mxu0 0.0
    %2746 = vmatprep.subr.mxu0 0.0
    %2747 = vmatpush1.msra.mxu0 0.0
    %2748 = vmatprep.subr.mxu0 0.0
    %2749 = vmatpush1.msra.mxu0 0.0
    %2750 = vmatprep.subr.mxu0 0.0
    %2751 = vmatpush1.msra.mxu0 0.0
    %2752 = vmatprep.subr.mxu0 0.0
    %2753 = vmatpush1.msra.mxu0 0.0
    %2754 = vmatprep.subr.mxu0 0.0
    %2755 = vmatpush1.msra.mxu0 0.0
    %2756 = vmatprep.subr.mxu0 0.0
    %2757 = vmatpush1.msra.mxu0 0.0
    %2758 = vmatprep.mubr.f32.mxu0 0.0
    %2759 = vmatmul.mubr.f32.gmra.mrb[0].mxu0 %v2692
    %v2760 = vpop.f32.mrb[0].mxu0
    %v2761 = vadd.f32 %v2689, %v2760
    %v2762 = vpop.f32.mrb[0].mxu0
    %2763 = vdwg.mxu0
    %v2764 = vmul.f32 %v2761, 0.2
    %v2765 = vmax.f32 %v2761, %v2764
    %v2766 = vld [vmem:[%s6] sm:$0xff]
    %v2767 = vld [vmem:[%s6 + $0x8] sm:$0xff]
    %v2768 = vld [vmem:[%s6 + $0x10] sm:$0xff]
    %v2769 = vld [vmem:[%s6 + $0x18] sm:$0xff]
    %v2770 = vld [vmem:[%s805] sm:$0xff]
    %v2771 = vld [vmem:[%s805 + $0x8] sm:$0xff]
    %v2772 = vld [vmem:[%s805 + $0x10] sm:$0xff]
    %v2773 = vld [vmem:[%s805 + $0x18] sm:$0xff]
    %2775 = vrot.lane.b32.xlu0 %v2765, 127
    %v2776 = vpop.permute.xlu0 %2775
    %v2779 = vsel %vm223, %v2770, 0
    %v2782 = vsel %vm223, %v2771, 0
    %v2785 = vsel %vm223, %v2772, 0
    %v2788 = vsel %vm223, %v2773, 0
    %2790 = vmatprep.subr.mxu0 0.0
    %2791 = vmatpush1.msra.mxu0 %v2776
    %2792 = vmatprep.subr.mxu0 0.0
    %2793 = vmatpush1.msra.mxu0 0.0
    %2794 = vmatprep.subr.mxu0 0.0
    %2795 = vmatpush1.msra.mxu0 0.0
    %2796 = vmatprep.subr.mxu0 0.0
    %2797 = vmatpush1.msra.mxu0 0.0
    %2798 = vmatprep.subr.mxu0 0.0
    %2799 = vmatpush1.msra.mxu0 0.0
    %2800 = vmatprep.subr.mxu0 0.0
    %2801 = vmatpush1.msra.mxu0 0.0
    %2802 = vmatprep.subr.mxu0 0.0
    %2803 = vmatpush1.msra.mxu0 0.0
    %2804 = vmatprep.subr.mxu0 0.0
    %2805 = vmatpush1.msra.mxu0 0.0
    %2806 = vmatprep.subr.mxu0 0.0
    %2807 = vmatpush1.msra.mxu0 0.0
    %2808 = vmatprep.subr.mxu0 0.0
    %2809 = vmatpush1.msra.mxu0 0.0
    %2810 = vmatprep.subr.mxu0 0.0
    %2811 = vmatpush1.msra.mxu0 0.0
    %2812 = vmatprep.subr.mxu0 0.0
    %2813 = vmatpush1.msra.mxu0 0.0
    %2814 = vmatprep.subr.mxu0 0.0
    %2815 = vmatpush1.msra.mxu0 0.0
    %2816 = vmatprep.subr.mxu0 0.0
    %2817 = vmatpush1.msra.mxu0 0.0
    %2818 = vmatprep.subr.mxu0 0.0
    %2819 = vmatpush1.msra.mxu0 0.0
    %2820 = vmatprep.subr.mxu0 0.0
    %2821 = vmatpush1.msra.mxu0 0.0
    %2822 = vmatprep.subr.mxu0 0.0
    %2823 = vmatpush1.msra.mxu0 0.0
    %2824 = vmatprep.subr.mxu0 0.0
    %2825 = vmatpush1.msra.mxu0 0.0
    %2826 = vmatprep.subr.mxu0 0.0
    %2827 = vmatpush1.msra.mxu0 0.0
    %2828 = vmatprep.subr.mxu0 0.0
    %2829 = vmatpush1.msra.mxu0 0.0
    %2830 = vmatprep.subr.mxu0 0.0
    %2831 = vmatpush1.msra.mxu0 0.0
    %2832 = vmatprep.subr.mxu0 0.0
    %2833 = vmatpush1.msra.mxu0 0.0
    %2834 = vmatprep.subr.mxu0 0.0
    %2835 = vmatpush1.msra.mxu0 0.0
    %2836 = vmatprep.subr.mxu0 0.0
    %2837 = vmatpush1.msra.mxu0 0.0
    %2838 = vmatprep.subr.mxu0 0.0
    %2839 = vmatpush1.msra.mxu0 0.0
    %2840 = vmatprep.subr.mxu0 0.0
    %2841 = vmatpush1.msra.mxu0 0.0
    %2842 = vmatprep.subr.mxu0 0.0
    %2843 = vmatpush1.msra.mxu0 0.0
    %2844 = vmatprep.subr.mxu0 0.0
    %2845 = vmatpush1.msra.mxu0 0.0
    %2846 = vmatprep.subr.mxu0 0.0
    %2847 = vmatpush1.msra.mxu0 0.0
    %2848 = vmatprep.subr.mxu0 0.0
    %2849 = vmatpush1.msra.mxu0 0.0
    %2850 = vmatprep.subr.mxu0 0.0
    %2851 = vmatpush1.msra.mxu0 0.0
    %2852 = vmatprep.subr.mxu0 0.0
    %2853 = vmatpush1.msra.mxu0 0.0
    %2854 = vmatprep.mubr.f32.mxu0 0.0
    %2855 = vmatmul.mubr.f32.gmra.mrb[0].mxu0 %v2779
    %v2856 = vpop.f32.mrb[0].mxu0
    %v2857 = vadd.f32 0.0, %v2856
    %v2858 = vpop.f32.mrb[0].mxu0
    %2859 = vmatprep.mubr.f32.mxu0 0.0
    %2860 = vmatmul.mubr.f32.gmra.mrb[0].mxu0 %v2782
    %v2861 = vpop.f32.mrb[0].mxu0
    %v2862 = vadd.f32 0.0, %v2861
    %v2863 = vpop.f32.mrb[0].mxu0
    %2864 = vmatprep.mubr.f32.mxu0 0.0
    %2865 = vmatmul.mubr.f32.gmra.mrb[0].mxu0 %v2785
    %v2866 = vpop.f32.mrb[0].mxu0
    %v2867 = vadd.f32 0.0, %v2866
    %v2868 = vpop.f32.mrb[0].mxu0
    %2869 = vmatprep.mubr.f32.mxu0 0.0
    %2870 = vmatmul.mubr.f32.gmra.mrb[0].mxu0 %v2788
    %v2871 = vpop.f32.mrb[0].mxu0
    %v2872 = vadd.f32 0.0, %v2871
    %v2873 = vpop.f32.mrb[0].mxu0
    %2874 = vdwg.mxu0
    %v2876 = vsel %vm223, %v2766, 0
    %v2879 = vsel %vm223, %v2767, 0
    %v2882 = vsel %vm223, %v2768, 0
    %v2885 = vsel %vm223, %v2769, 0
    %2887 = vmatprep.subr.mxu0 0.0
    %2888 = vmatpush1.msra.mxu0 %v2765
    %2889 = vmatprep.subr.mxu0 0.0
    %2890 = vmatpush1.msra.mxu0 0.0
    %2891 = vmatprep.subr.mxu0 0.0
    %2892 = vmatpush1.msra.mxu0 0.0
    %2893 = vmatprep.subr.mxu0 0.0
    %2894 = vmatpush1.msra.mxu0 0.0
    %2895 = vmatprep.subr.mxu0 0.0
    %2896 = vmatpush1.msra.mxu0 0.0
    %2897 = vmatprep.subr.mxu0 0.0
    %2898 = vmatpush1.msra.mxu0 0.0
    %2899 = vmatprep.subr.mxu0 0.0
    %2900 = vmatpush1.msra.mxu0 0.0
    %2901 = vmatprep.subr.mxu0 0.0
    %2902 = vmatpush1.msra.mxu0 0.0
    %2903 = vmatprep.subr.mxu0 0.0
    %2904 = vmatpush1.msra.mxu0 0.0
    %2905 = vmatprep.subr.mxu0 0.0
    %2906 = vmatpush1.msra.mxu0 0.0
    %2907 = vmatprep.subr.mxu0 0.0
    %2908 = vmatpush1.msra.mxu0 0.0
    %2909 = vmatprep.subr.mxu0 0.0
    %2910 = vmatpush1.msra.mxu0 0.0
    %2911 = vmatprep.subr.mxu0 0.0
    %2912 = vmatpush1.msra.mxu0 0.0
    %2913 = vmatprep.subr.mxu0 0.0
    %2914 = vmatpush1.msra.mxu0 0.0
    %2915 = vmatprep.subr.mxu0 0.0
    %2916 = vmatpush1.msra.mxu0 0.0
    %2917 = vmatprep.subr.mxu0 0.0
    %2918 = vmatpush1.msra.mxu0 0.0
    %2919 = vmatprep.subr.mxu0 0.0
    %2920 = vmatpush1.msra.mxu0 0.0
    %2921 = vmatprep.subr.mxu0 0.0
    %2922 = vmatpush1.msra.mxu0 0.0
    %2923 = vmatprep.subr.mxu0 0.0
    %2924 = vmatpush1.msra.mxu0 0.0
    %2925 = vmatprep.subr.mxu0 0.0
    %2926 = vmatpush1.msra.mxu0 0.0
    %2927 = vmatprep.subr.mxu0 0.0
    %2928 = vmatpush1.msra.mxu0 0.0
    %2929 = vmatprep.subr.mxu0 0.0
    %2930 = vmatpush1.msra.mxu0 0.0
    %2931 = vmatprep.subr.mxu0 0.0
    %2932 = vmatpush1.msra.mxu0 0.0
    %2933 = vmatprep.subr.mxu0 0.0
    %2934 = vmatpush1.msra.mxu0 0.0
    %2935 = vmatprep.subr.mxu0 0.0
    %2936 = vmatpush1.msra.mxu0 0.0
    %2937 = vmatprep.subr.mxu0 0.0
    %2938 = vmatpush1.msra.mxu0 0.0
    %2939 = vmatprep.subr.mxu0 0.0
    %2940 = vmatpush1.msra.mxu0 0.0
    %2941 = vmatprep.subr.mxu0 0.0
    %2942 = vmatpush1.msra.mxu0 0.0
    %2943 = vmatprep.subr.mxu0 0.0
    %2944 = vmatpush1.msra.mxu0 0.0
    %2945 = vmatprep.subr.mxu0 0.0
    %2946 = vmatpush1.msra.mxu0 0.0
    %2947 = vmatprep.subr.mxu0 0.0
    %2948 = vmatpush1.msra.mxu0 0.0
    %2949 = vmatprep.subr.mxu0 0.0
    %2950 = vmatpush1.msra.mxu0 0.0
    %2951 = vmatprep.mubr.f32.mxu0 0.0
    %2952 = vmatmul.mubr.f32.gmra.mrb[0].mxu0 %v2876
    %v2953 = vpop.f32.mrb[0].mxu0
    %v2954 = vadd.f32 %v2857, %v2953
    %v2955 = vpop.f32.mrb[0].mxu0
    %2956 = vmatprep.mubr.f32.mxu0 0.0
    %2957 = vmatmul.mubr.f32.gmra.mrb[0].mxu0 %v2879
    %v2958 = vpop.f32.mrb[0].mxu0
    %v2959 = vadd.f32 %v2862, %v2958
    %v2960 = vpop.f32.mrb[0].mxu0
    %2961 = vmatprep.mubr.f32.mxu0 0.0
    %2962 = vmatmul.mubr.f32.gmra.mrb[0].mxu0 %v2882
    %v2963 = vpop.f32.mrb[0].mxu0
    %v2964 = vadd.f32 %v2867, %v2963
    %v2965 = vpop.f32.mrb[0].mxu0
    %2966 = vmatprep.mubr.f32.mxu0 0.0
    %2967 = vmatmul.mubr.f32.gmra.mrb[0].mxu0 %v2885
    %v2968 = vpop.f32.mrb[0].mxu0
    %v2969 = vadd.f32 %v2872, %v2968
    %v2970 = vpop.f32.mrb[0].mxu0
    %2971 = vdwg.mxu0
    %v2972 = vld [vmem:[%s1008] sm:$0xff]
    %v2973 = vld [vmem:[%s1008 + $0x8] sm:$0xff]
    %v2974 = vld [vmem:[%s1008 + $0x10] sm:$0xff]
    %v2975 = vld [vmem:[%s1008 + $0x18] sm:$0xff]
    %2976 = vrot.lane.b32.xlu0 %v2765, 126
    %v2977 = vpop.permute.xlu0 %2976
    %v2980 = vsel %vm223, %v2972, 0
    %v2983 = vsel %vm223, %v2973, 0
    %v2986 = vsel %vm223, %v2974, 0
    %v2989 = vsel %vm223, %v2975, 0
    %2991 = vmatprep.subr.mxu0 0.0
    %2992 = vmatpush1.msra.mxu0 %v2977
    %2993 = vmatprep.subr.mxu0 0.0
    %2994 = vmatpush1.msra.mxu0 0.0
    %2995 = vmatprep.subr.mxu0 0.0
    %2996 = vmatpush1.msra.mxu0 0.0
    %2997 = vmatprep.subr.mxu0 0.0
    %2998 = vmatpush1.msra.mxu0 0.0
    %2999 = vmatprep.subr.mxu0 0.0
    %3000 = vmatpush1.msra.mxu0 0.0
    %3001 = vmatprep.subr.mxu0 0.0
    %3002 = vmatpush1.msra.mxu0 0.0
    %3003 = vmatprep.subr.mxu0 0.0
    %3004 = vmatpush1.msra.mxu0 0.0
    %3005 = vmatprep.subr.mxu0 0.0
    %3006 = vmatpush1.msra.mxu0 0.0
    %3007 = vmatprep.subr.mxu0 0.0
    %3008 = vmatpush1.msra.mxu0 0.0
    %3009 = vmatprep.subr.mxu0 0.0
    %3010 = vmatpush1.msra.mxu0 0.0
    %3011 = vmatprep.subr.mxu0 0.0
    %3012 = vmatpush1.msra.mxu0 0.0
    %3013 = vmatprep.subr.mxu0 0.0
    %3014 = vmatpush1.msra.mxu0 0.0
    %3015 = vmatprep.subr.mxu0 0.0
    %3016 = vmatpush1.msra.mxu0 0.0
    %3017 = vmatprep.subr.mxu0 0.0
    %3018 = vmatpush1.msra.mxu0 0.0
    %3019 = vmatprep.subr.mxu0 0.0
    %3020 = vmatpush1.msra.mxu0 0.0
    %3021 = vmatprep.subr.mxu0 0.0
    %3022 = vmatpush1.msra.mxu0 0.0
    %3023 = vmatprep.subr.mxu0 0.0
    %3024 = vmatpush1.msra.mxu0 0.0
    %3025 = vmatprep.subr.mxu0 0.0
    %3026 = vmatpush1.msra.mxu0 0.0
    %3027 = vmatprep.subr.mxu0 0.0
    %3028 = vmatpush1.msra.mxu0 0.0
    %3029 = vmatprep.subr.mxu0 0.0
    %3030 = vmatpush1.msra.mxu0 0.0
    %3031 = vmatprep.subr.mxu0 0.0
    %3032 = vmatpush1.msra.mxu0 0.0
    %3033 = vmatprep.subr.mxu0 0.0
    %3034 = vmatpush1.msra.mxu0 0.0
    %3035 = vmatprep.subr.mxu0 0.0
    %3036 = vmatpush1.msra.mxu0 0.0
    %3037 = vmatprep.subr.mxu0 0.0
    %3038 = vmatpush1.msra.mxu0 0.0
    %3039 = vmatprep.subr.mxu0 0.0
    %3040 = vmatpush1.msra.mxu0 0.0
    %3041 = vmatprep.subr.mxu0 0.0
    %3042 = vmatpush1.msra.mxu0 0.0
    %3043 = vmatprep.subr.mxu0 0.0
    %3044 = vmatpush1.msra.mxu0 0.0
    %3045 = vmatprep.subr.mxu0 0.0
    %3046 = vmatpush1.msra.mxu0 0.0
    %3047 = vmatprep.subr.mxu0 0.0
    %3048 = vmatpush1.msra.mxu0 0.0
    %3049 = vmatprep.subr.mxu0 0.0
    %3050 = vmatpush1.msra.mxu0 0.0
    %3051 = vmatprep.subr.mxu0 0.0
    %3052 = vmatpush1.msra.mxu0 0.0
    %3053 = vmatprep.subr.mxu0 0.0
    %3054 = vmatpush1.msra.mxu0 0.0
    %3055 = vmatprep.mubr.f32.mxu0 0.0
    %3056 = vmatmul.mubr.f32.gmra.mrb[0].mxu0 %v2980
    %v3057 = vpop.f32.mrb[0].mxu0
    %v3058 = vadd.f32 0.0, %v3057
    %v3059 = vpop.f32.mrb[0].mxu0
    %3060 = vmatprep.mubr.f32.mxu0 0.0
    %3061 = vmatmul.mubr.f32.gmra.mrb[0].mxu0 %v2983
    %v3062 = vpop.f32.mrb[0].mxu0
    %v3063 = vadd.f32 0.0, %v3062
    %v3064 = vpop.f32.mrb[0].mxu0
    %3065 = vmatprep.mubr.f32.mxu0 0.0
    %3066 = vmatmul.mubr.f32.gmra.mrb[0].mxu0 %v2986
    %v3067 = vpop.f32.mrb[0].mxu0
    %v3068 = vadd.f32 0.0, %v3067
    %v3069 = vpop.f32.mrb[0].mxu0
    %3070 = vmatprep.mubr.f32.mxu0 0.0
    %3071 = vmatmul.mubr.f32.gmra.mrb[0].mxu0 %v2989
    %v3072 = vpop.f32.mrb[0].mxu0
    %v3073 = vadd.f32 0.0, %v3072
    %v3074 = vpop.f32.mrb[0].mxu0
    %3075 = vdwg.mxu0
    %v3076 = vadd.f32 %v2954, %v3058
    %v3077 = vadd.f32 %v2959, %v3063
    %v3078 = vadd.f32 %v2964, %v3068
    %v3079 = vadd.f32 %v2969, %v3073
    %v3080 = vld [vmem:[%s7] sm:$0xff]
    %v3081 = vld [vmem:[%s7 + $0x8] sm:$0xff]
    %v3082 = vld [vmem:[%s7 + $0x10] sm:$0xff]
    %v3083 = vld [vmem:[%s7 + $0x18] sm:$0xff]
    %3085 = vset.pattern.permute.xlu0 0
    %3086 = vperm.xlu0 %3085, %v3080
    %v3087 = vpop.permute.xlu0 %3086
    %3090 = vset.pattern.permute.xlu0 0
    %3091 = vperm.xlu0 %3090, %v3081
    %v3092 = vpop.permute.xlu0 %3091
    %3095 = vset.pattern.permute.xlu0 0
    %3096 = vperm.xlu0 %3095, %v3082
    %v3097 = vpop.permute.xlu0 %3096
    %3100 = vset.pattern.permute.xlu0 0
    %3101 = vperm.xlu0 %3100, %v3083
    %v3102 = vpop.permute.xlu0 %3101
    %v3104 = vadd.f32 %v3076, %v3087
    %v3105 = vadd.f32 %v3077, %v3092
    %v3106 = vadd.f32 %v3078, %v3097
    %v3107 = vadd.f32 %v3079, %v3102
    %v3108 = vmul.f32 %v3104, 0.2
    %v3109 = vmul.f32 %v3105, 0.2
    %v3110 = vmul.f32 %v3106, 0.2
    %v3111 = vmul.f32 %v3107, 0.2
    %v3112 = vmax.f32 %v3104, %v3108
    %v3113 = vmax.f32 %v3105, %v3109
    %v3114 = vmax.f32 %v3106, %v3110
    %v3115 = vmax.f32 %v3107, %v3111
    %3116 = vset.pattern.permute.xlu0 1
    %3117 = vperm.xlu0 %3116, %v211
    %v3118 = vpop.permute.xlu0 %3117
    %3120 = vset.pattern.permute.xlu0 1
    %3121 = vperm.xlu0 %3120, %v212
    %v3122 = vpop.permute.xlu0 %3121
    %3124 = vset.pattern.permute.xlu0 1
    %3125 = vperm.xlu0 %3124, %v213
    %v3126 = vpop.permute.xlu0 %3125
    %3128 = vset.pattern.permute.xlu0 1
    %3129 = vperm.xlu0 %3128, %v214
    %v3130 = vpop.permute.xlu0 %3129
    %v3132 = vsel %vm1173, %v3112, %v3118
    %v3133 = vsel %vm1173, %v3113, %v3122
    %v3134 = vsel %vm1173, %v3114, %v3126
    %v3135 = vsel %vm1173, %v3115, %v3130
    %v3136 = vld [vmem:[%s14] sm:$0xff]
    %v3137 = vld [vmem:[%s1179] sm:$0xff]
    %3142 = vrot.lane.b32.xlu0 %v3132, 127
    %v3143 = vpop.permute.xlu0 %3142
    %3144 = vrot.lane.b32.xlu0 %v3133, 127
    %v3145 = vpop.permute.xlu0 %3144
    %3146 = vrot.lane.b32.xlu0 %v3134, 127
    %v3147 = vpop.permute.xlu0 %3146
    %3148 = vrot.lane.b32.xlu0 %v3135, 127
    %v3149 = vpop.permute.xlu0 %3148
    %v3155 = vsel %vm109, %v3137, 0
    %3157 = vmatprep.subr.mxu0 0.0
    %3158 = vmatpush1.msra.mxu0 %v3143
    %3159 = vmatprep.subr.mxu0 0.0
    %3160 = vmatpush1.msra.mxu0 %v3145
    %3161 = vmatprep.subr.mxu0 0.0
    %3162 = vmatpush1.msra.mxu0 %v3147
    %3163 = vmatprep.subr.mxu0 0.0
    %3164 = vmatpush1.msra.mxu0 %v3149
    %3165 = vmatprep.subr.mxu0 0.0
    %3166 = vmatpush1.msra.mxu0 0.0
    %3167 = vmatprep.subr.mxu0 0.0
    %3168 = vmatpush1.msra.mxu0 0.0
    %3169 = vmatprep.subr.mxu0 0.0
    %3170 = vmatpush1.msra.mxu0 0.0
    %3171 = vmatprep.subr.mxu0 0.0
    %3172 = vmatpush1.msra.mxu0 0.0
    %3173 = vmatprep.subr.mxu0 0.0
    %3174 = vmatpush1.msra.mxu0 0.0
    %3175 = vmatprep.subr.mxu0 0.0
    %3176 = vmatpush1.msra.mxu0 0.0
    %3177 = vmatprep.subr.mxu0 0.0
    %3178 = vmatpush1.msra.mxu0 0.0
    %3179 = vmatprep.subr.mxu0 0.0
    %3180 = vmatpush1.msra.mxu0 0.0
    %3181 = vmatprep.subr.mxu0 0.0
    %3182 = vmatpush1.msra.mxu0 0.0
    %3183 = vmatprep.subr.mxu0 0.0
    %3184 = vmatpush1.msra.mxu0 0.0
    %3185 = vmatprep.subr.mxu0 0.0
    %3186 = vmatpush1.msra.mxu0 0.0
    %3187 = vmatprep.subr.mxu0 0.0
    %3188 = vmatpush1.msra.mxu0 0.0
    %3189 = vmatprep.subr.mxu0 0.0
    %3190 = vmatpush1.msra.mxu0 0.0
    %3191 = vmatprep.subr.mxu0 0.0
    %3192 = vmatpush1.msra.mxu0 0.0
    %3193 = vmatprep.subr.mxu0 0.0
    %3194 = vmatpush1.msra.mxu0 0.0
    %3195 = vmatprep.subr.mxu0 0.0
    %3196 = vmatpush1.msra.mxu0 0.0
    %3197 = vmatprep.subr.mxu0 0.0
    %3198 = vmatpush1.msra.mxu0 0.0
    %3199 = vmatprep.subr.mxu0 0.0
    %3200 = vmatpush1.msra.mxu0 0.0
    %3201 = vmatprep.subr.mxu0 0.0
    %3202 = vmatpush1.msra.mxu0 0.0
    %3203 = vmatprep.subr.mxu0 0.0
    %3204 = vmatpush1.msra.mxu0 0.0
    %3205 = vmatprep.subr.mxu0 0.0
    %3206 = vmatpush1.msra.mxu0 0.0
    %3207 = vmatprep.subr.mxu0 0.0
    %3208 = vmatpush1.msra.mxu0 0.0
    %3209 = vmatprep.subr.mxu0 0.0
    %3210 = vmatpush1.msra.mxu0 0.0
    %3211 = vmatprep.subr.mxu0 0.0
    %3212 = vmatpush1.msra.mxu0 0.0
    %3213 = vmatprep.subr.mxu0 0.0
    %3214 = vmatpush1.msra.mxu0 0.0
    %3215 = vmatprep.subr.mxu0 0.0
    %3216 = vmatpush1.msra.mxu0 0.0
    %3217 = vmatprep.subr.mxu0 0.0
    %3218 = vmatpush1.msra.mxu0 0.0
    %3219 = vmatprep.subr.mxu0 0.0
    %3220 = vmatpush1.msra.mxu0 0.0
    %3221 = vmatprep.mubr.f32.mxu0 0.0
    %3222 = vmatmul.mubr.f32.gmra.mrb[0].mxu0 %v3155
    %v3223 = vpop.f32.mrb[0].mxu0
    %v3224 = vadd.f32 0.0, %v3223
    %v3225 = vpop.f32.mrb[0].mxu0
    %3226 = vdwg.mxu0
    %v3228 = vsel %vm109, %v3136, 0
    %3230 = vmatprep.subr.mxu0 0.0
    %3231 = vmatpush1.msra.mxu0 %v3132
    %3232 = vmatprep.subr.mxu0 0.0
    %3233 = vmatpush1.msra.mxu0 %v3133
    %3234 = vmatprep.subr.mxu0 0.0
    %3235 = vmatpush1.msra.mxu0 %v3134
    %3236 = vmatprep.subr.mxu0 0.0
    %3237 = vmatpush1.msra.mxu0 %v3135
    %3238 = vmatprep.subr.mxu0 0.0
    %3239 = vmatpush1.msra.mxu0 0.0
    %3240 = vmatprep.subr.mxu0 0.0
    %3241 = vmatpush1.msra.mxu0 0.0
    %3242 = vmatprep.subr.mxu0 0.0
    %3243 = vmatpush1.msra.mxu0 0.0
    %3244 = vmatprep.subr.mxu0 0.0
    %3245 = vmatpush1.msra.mxu0 0.0
    %3246 = vmatprep.subr.mxu0 0.0
    %3247 = vmatpush1.msra.mxu0 0.0
    %3248 = vmatprep.subr.mxu0 0.0
    %3249 = vmatpush1.msra.mxu0 0.0
    %3250 = vmatprep.subr.mxu0 0.0
    %3251 = vmatpush1.msra.mxu0 0.0
    %3252 = vmatprep.subr.mxu0 0.0
    %3253 = vmatpush1.msra.mxu0 0.0
    %3254 = vmatprep.subr.mxu0 0.0
    %3255 = vmatpush1.msra.mxu0 0.0
    %3256 = vmatprep.subr.mxu0 0.0
    %3257 = vmatpush1.msra.mxu0 0.0
    %3258 = vmatprep.subr.mxu0 0.0
    %3259 = vmatpush1.msra.mxu0 0.0
    %3260 = vmatprep.subr.mxu0 0.0
    %3261 = vmatpush1.msra.mxu0 0.0
    %3262 = vmatprep.subr.mxu0 0.0
    %3263 = vmatpush1.msra.mxu0 0.0
    %3264 = vmatprep.subr.mxu0 0.0
    %3265 = vmatpush1.msra.mxu0 0.0
    %3266 = vmatprep.subr.mxu0 0.0
    %3267 = vmatpush1.msra.mxu0 0.0
    %3268 = vmatprep.subr.mxu0 0.0
    %3269 = vmatpush1.msra.mxu0 0.0
    %3270 = vmatprep.subr.mxu0 0.0
    %3271 = vmatpush1.msra.mxu0 0.0
    %3272 = vmatprep.subr.mxu0 0.0
    %3273 = vmatpush1.msra.mxu0 0.0
    %3274 = vmatprep.subr.mxu0 0.0
    %3275 = vmatpush1.msra.mxu0 0.0
    %3276 = vmatprep.subr.mxu0 0.0
    %3277 = vmatpush1.msra.mxu0 0.0
    %3278 = vmatprep.subr.mxu0 0.0
    %3279 = vmatpush1.msra.mxu0 0.0
    %3280 = vmatprep.subr.mxu0 0.0
    %3281 = vmatpush1.msra.mxu0 0.0
    %3282 = vmatprep.subr.mxu0 0.0
    %3283 = vmatpush1.msra.mxu0 0.0
    %3284 = vmatprep.subr.mxu0 0.0
    %3285 = vmatpush1.msra.mxu0 0.0
    %3286 = vmatprep.subr.mxu0 0.0
    %3287 = vmatpush1.msra.mxu0 0.0
    %3288 = vmatprep.subr.mxu0 0.0
    %3289 = vmatpush1.msra.mxu0 0.0
    %3290 = vmatprep.subr.mxu0 0.0
    %3291 = vmatpush1.msra.mxu0 0.0
    %3292 = vmatprep.subr.mxu0 0.0
    %3293 = vmatpush1.msra.mxu0 0.0
    %3294 = vmatprep.mubr.f32.mxu0 0.0
    %3295 = vmatmul.mubr.f32.gmra.mrb[0].mxu0 %v3228
    %v3296 = vpop.f32.mrb[0].mxu0
    %v3297 = vadd.f32 %v3224, %v3296
    %v3298 = vpop.f32.mrb[0].mxu0
    %3299 = vdwg.mxu0
    %v3300 = vld [vmem:[%s1343] sm:$0xff]
    %3301 = vrot.lane.b32.xlu0 %v3132, 126
    %v3302 = vpop.permute.xlu0 %3301
    %3303 = vrot.lane.b32.xlu0 %v3133, 126
    %v3304 = vpop.permute.xlu0 %3303
    %3305 = vrot.lane.b32.xlu0 %v3134, 126
    %v3306 = vpop.permute.xlu0 %3305
    %3307 = vrot.lane.b32.xlu0 %v3135, 126
    %v3308 = vpop.permute.xlu0 %3307
    %v3314 = vsel %vm109, %v3300, 0
    %3316 = vmatprep.subr.mxu0 0.0
    %3317 = vmatpush1.msra.mxu0 %v3302
    %3318 = vmatprep.subr.mxu0 0.0
    %3319 = vmatpush1.msra.mxu0 %v3304
    %3320 = vmatprep.subr.mxu0 0.0
    %3321 = vmatpush1.msra.mxu0 %v3306
    %3322 = vmatprep.subr.mxu0 0.0
    %3323 = vmatpush1.msra.mxu0 %v3308
    %3324 = vmatprep.subr.mxu0 0.0
    %3325 = vmatpush1.msra.mxu0 0.0
    %3326 = vmatprep.subr.mxu0 0.0
    %3327 = vmatpush1.msra.mxu0 0.0
    %3328 = vmatprep.subr.mxu0 0.0
    %3329 = vmatpush1.msra.mxu0 0.0
    %3330 = vmatprep.subr.mxu0 0.0
    %3331 = vmatpush1.msra.mxu0 0.0
    %3332 = vmatprep.subr.mxu0 0.0
    %3333 = vmatpush1.msra.mxu0 0.0
    %3334 = vmatprep.subr.mxu0 0.0
    %3335 = vmatpush1.msra.mxu0 0.0
    %3336 = vmatprep.subr.mxu0 0.0
    %3337 = vmatpush1.msra.mxu0 0.0
    %3338 = vmatprep.subr.mxu0 0.0
    %3339 = vmatpush1.msra.mxu0 0.0
    %3340 = vmatprep.subr.mxu0 0.0
    %3341 = vmatpush1.msra.mxu0 0.0
    %3342 = vmatprep.subr.mxu0 0.0
    %3343 = vmatpush1.msra.mxu0 0.0
    %3344 = vmatprep.subr.mxu0 0.0
    %3345 = vmatpush1.msra.mxu0 0.0
    %3346 = vmatprep.subr.mxu0 0.0
    %3347 = vmatpush1.msra.mxu0 0.0
    %3348 = vmatprep.subr.mxu0 0.0
    %3349 = vmatpush1.msra.mxu0 0.0
    %3350 = vmatprep.subr.mxu0 0.0
    %3351 = vmatpush1.msra.mxu0 0.0
    %3352 = vmatprep.subr.mxu0 0.0
    %3353 = vmatpush1.msra.mxu0 0.0
    %3354 = vmatprep.subr.mxu0 0.0
    %3355 = vmatpush1.msra.mxu0 0.0
    %3356 = vmatprep.subr.mxu0 0.0
    %3357 = vmatpush1.msra.mxu0 0.0
    %3358 = vmatprep.subr.mxu0 0.0
    %3359 = vmatpush1.msra.mxu0 0.0
    %3360 = vmatprep.subr.mxu0 0.0
    %3361 = vmatpush1.msra.mxu0 0.0
    %3362 = vmatprep.subr.mxu0 0.0
    %3363 = vmatpush1.msra.mxu0 0.0
    %3364 = vmatprep.subr.mxu0 0.0
    %3365 = vmatpush1.msra.mxu0 0.0
    %3366 = vmatprep.subr.mxu0 0.0
    %3367 = vmatpush1.msra.mxu0 0.0
    %3368 = vmatprep.subr.mxu0 0.0
    %3369 = vmatpush1.msra.mxu0 0.0
    %3370 = vmatprep.subr.mxu0 0.0
    %3371 = vmatpush1.msra.mxu0 0.0
    %3372 = vmatprep.subr.mxu0 0.0
    %3373 = vmatpush1.msra.mxu0 0.0
    %3374 = vmatprep.subr.mxu0 0.0
    %3375 = vmatpush1.msra.mxu0 0.0
    %3376 = vmatprep.subr.mxu0 0.0
    %3377 = vmatpush1.msra.mxu0 0.0
    %3378 = vmatprep.subr.mxu0 0.0
    %3379 = vmatpush1.msra.mxu0 0.0
    %3380 = vmatprep.mubr.f32.mxu0 0.0
    %3381 = vmatmul.mubr.f32.gmra.mrb[0].mxu0 %v3314
    %v3382 = vpop.f32.mrb[0].mxu0
    %v3383 = vadd.f32 0.0, %v3382
    %v3384 = vpop.f32.mrb[0].mxu0
    %3385 = vdwg.mxu0
    %v3386 = vadd.f32 %v3297, %v3383
    %v3387 = vld [vmem:[%s15] sm:$0xff]
    %3389 = vset.pattern.permute.xlu0 0
    %3390 = vperm.xlu0 %3389, %v3387
    %v3391 = vpop.permute.xlu0 %3390
    %v3393 = vadd.f32 %v3386, %v3391
    %v3394 = vmul.f32 %v3393, 0.2
    %v3395 = vmax.f32 %v3393, %v3394
    %v3396 = vld [vmem:[%s16] sm:$0x1]
    %v3397 = vld [vmem:[%s1441] sm:$0x1]
    %3399 = vrot.lane.b32.xlu0 %v3395, 127
    %v3400 = vpop.permute.xlu0 %3399
    %v3403 = vsel %vm223, %v3397, 0
    %3405 = vmatprep.subr.mxu0 0.0
    %3406 = vmatpush1.msra.mxu0 %v3400
    %3407 = vmatprep.subr.mxu0 0.0
    %3408 = vmatpush1.msra.mxu0 0.0
    %3409 = vmatprep.subr.mxu0 0.0
    %3410 = vmatpush1.msra.mxu0 0.0
    %3411 = vmatprep.subr.mxu0 0.0
    %3412 = vmatpush1.msra.mxu0 0.0
    %3413 = vmatprep.subr.mxu0 0.0
    %3414 = vmatpush1.msra.mxu0 0.0
    %3415 = vmatprep.subr.mxu0 0.0
    %3416 = vmatpush1.msra.mxu0 0.0
    %3417 = vmatprep.subr.mxu0 0.0
    %3418 = vmatpush1.msra.mxu0 0.0
    %3419 = vmatprep.subr.mxu0 0.0
    %3420 = vmatpush1.msra.mxu0 0.0
    %3421 = vmatprep.subr.mxu0 0.0
    %3422 = vmatpush1.msra.mxu0 0.0
    %3423 = vmatprep.subr.mxu0 0.0
    %3424 = vmatpush1.msra.mxu0 0.0
    %3425 = vmatprep.subr.mxu0 0.0
    %3426 = vmatpush1.msra.mxu0 0.0
    %3427 = vmatprep.subr.mxu0 0.0
    %3428 = vmatpush1.msra.mxu0 0.0
    %3429 = vmatprep.subr.mxu0 0.0
    %3430 = vmatpush1.msra.mxu0 0.0
    %3431 = vmatprep.subr.mxu0 0.0
    %3432 = vmatpush1.msra.mxu0 0.0
    %3433 = vmatprep.subr.mxu0 0.0
    %3434 = vmatpush1.msra.mxu0 0.0
    %3435 = vmatprep.subr.mxu0 0.0
    %3436 = vmatpush1.msra.mxu0 0.0
    %3437 = vmatprep.subr.mxu0 0.0
    %3438 = vmatpush1.msra.mxu0 0.0
    %3439 = vmatprep.subr.mxu0 0.0
    %3440 = vmatpush1.msra.mxu0 0.0
    %3441 = vmatprep.subr.mxu0 0.0
    %3442 = vmatpush1.msra.mxu0 0.0
    %3443 = vmatprep.subr.mxu0 0.0
    %3444 = vmatpush1.msra.mxu0 0.0
    %3445 = vmatprep.subr.mxu0 0.0
    %3446 = vmatpush1.msra.mxu0 0.0
    %3447 = vmatprep.subr.mxu0 0.0
    %3448 = vmatpush1.msra.mxu0 0.0
    %3449 = vmatprep.subr.mxu0 0.0
    %3450 = vmatpush1.msra.mxu0 0.0
    %3451 = vmatprep.subr.mxu0 0.0
    %3452 = vmatpush1.msra.mxu0 0.0
    %3453 = vmatprep.subr.mxu0 0.0
    %3454 = vmatpush1.msra.mxu0 0.0
    %3455 = vmatprep.subr.mxu0 0.0
    %3456 = vmatpush1.msra.mxu0 0.0
    %3457 = vmatprep.subr.mxu0 0.0
    %3458 = vmatpush1.msra.mxu0 0.0
    %3459 = vmatprep.subr.mxu0 0.0
    %3460 = vmatpush1.msra.mxu0 0.0
    %3461 = vmatprep.subr.mxu0 0.0
    %3462 = vmatpush1.msra.mxu0 0.0
    %3463 = vmatprep.subr.mxu0 0.0
    %3464 = vmatpush1.msra.mxu0 0.0
    %3465 = vmatprep.subr.mxu0 0.0
    %3466 = vmatpush1.msra.mxu0 0.0
    %3467 = vmatprep.subr.mxu0 0.0
    %3468 = vmatpush1.msra.mxu0 0.0
    %3469 = vmatprep.mubr.f32.mxu0 0.0
    %3470 = vmatmul.mubr.f32.gmra.mrb[0].mxu0 %v3403
    %v3471 = vpop.f32.mrb[0].mxu0
    %v3472 = vadd.f32 0.0, %v3471
    %v3473 = vpop.f32.mrb[0].mxu0
    %3474 = vdwg.mxu0
    %v3476 = vsel %vm223, %v3396, 0
    %3478 = vmatprep.subr.mxu0 0.0
    %3479 = vmatpush1.msra.mxu0 %v3395
    %3480 = vmatprep.subr.mxu0 0.0
    %3481 = vmatpush1.msra.mxu0 0.0
    %3482 = vmatprep.subr.mxu0 0.0
    %3483 = vmatpush1.msra.mxu0 0.0
    %3484 = vmatprep.subr.mxu0 0.0
    %3485 = vmatpush1.msra.mxu0 0.0
    %3486 = vmatprep.subr.mxu0 0.0
    %3487 = vmatpush1.msra.mxu0 0.0
    %3488 = vmatprep.subr.mxu0 0.0
    %3489 = vmatpush1.msra.mxu0 0.0
    %3490 = vmatprep.subr.mxu0 0.0
    %3491 = vmatpush1.msra.mxu0 0.0
    %3492 = vmatprep.subr.mxu0 0.0
    %3493 = vmatpush1.msra.mxu0 0.0
    %3494 = vmatprep.subr.mxu0 0.0
    %3495 = vmatpush1.msra.mxu0 0.0
    %3496 = vmatprep.subr.mxu0 0.0
    %3497 = vmatpush1.msra.mxu0 0.0
    %3498 = vmatprep.subr.mxu0 0.0
    %3499 = vmatpush1.msra.mxu0 0.0
    %3500 = vmatprep.subr.mxu0 0.0
    %3501 = vmatpush1.msra.mxu0 0.0
    %3502 = vmatprep.subr.mxu0 0.0
    %3503 = vmatpush1.msra.mxu0 0.0
    %3504 = vmatprep.subr.mxu0 0.0
    %3505 = vmatpush1.msra.mxu0 0.0
    %3506 = vmatprep.subr.mxu0 0.0
    %3507 = vmatpush1.msra.mxu0 0.0
    %3508 = vmatprep.subr.mxu0 0.0
    %3509 = vmatpush1.msra.mxu0 0.0
    %3510 = vmatprep.subr.mxu0 0.0
    %3511 = vmatpush1.msra.mxu0 0.0
    %3512 = vmatprep.subr.mxu0 0.0
    %3513 = vmatpush1.msra.mxu0 0.0
    %3514 = vmatprep.subr.mxu0 0.0
    %3515 = vmatpush1.msra.mxu0 0.0
    %3516 = vmatprep.subr.mxu0 0.0
    %3517 = vmatpush1.msra.mxu0 0.0
    %3518 = vmatprep.subr.mxu0 0.0
    %3519 = vmatpush1.msra.mxu0 0.0
    %3520 = vmatprep.subr.mxu0 0.0
    %3521 = vmatpush1.msra.mxu0 0.0
    %3522 = vmatprep.subr.mxu0 0.0
    %3523 = vmatpush1.msra.mxu0 0.0
    %3524 = vmatprep.subr.mxu0 0.0
    %3525 = vmatpush1.msra.mxu0 0.0
    %3526 = vmatprep.subr.mxu0 0.0
    %3527 = vmatpush1.msra.mxu0 0.0
    %3528 = vmatprep.subr.mxu0 0.0
    %3529 = vmatpush1.msra.mxu0 0.0
    %3530 = vmatprep.subr.mxu0 0.0
    %3531 = vmatpush1.msra.mxu0 0.0
    %3532 = vmatprep.subr.mxu0 0.0
    %3533 = vmatpush1.msra.mxu0 0.0
    %3534 = vmatprep.subr.mxu0 0.0
    %3535 = vmatpush1.msra.mxu0 0.0
    %3536 = vmatprep.subr.mxu0 0.0
    %3537 = vmatpush1.msra.mxu0 0.0
    %3538 = vmatprep.subr.mxu0 0.0
    %3539 = vmatpush1.msra.mxu0 0.0
    %3540 = vmatprep.subr.mxu0 0.0
    %3541 = vmatpush1.msra.mxu0 0.0
    %3542 = vmatprep.mubr.f32.mxu0 0.0
    %3543 = vmatmul.mubr.f32.gmra.mrb[0].mxu0 %v3476
    %v3544 = vpop.f32.mrb[0].mxu0
    %v3545 = vadd.f32 %v3472, %v3544
    %v3546 = vpop.f32.mrb[0].mxu0
    %3547 = vdwg.mxu0
    %v3548 = vld [vmem:[%s1593] sm:$0x1]
    %3549 = vrot.lane.b32.xlu0 %v3395, 126
    %v3550 = vpop.permute.xlu0 %3549
    %v3553 = vsel %vm223, %v3548, 0
    %3555 = vmatprep.subr.mxu0 0.0
    %3556 = vmatpush1.msra.mxu0 %v3550
    %3557 = vmatprep.subr.mxu0 0.0
    %3558 = vmatpush1.msra.mxu0 0.0
    %3559 = vmatprep.subr.mxu0 0.0
    %3560 = vmatpush1.msra.mxu0 0.0
    %3561 = vmatprep.subr.mxu0 0.0
    %3562 = vmatpush1.msra.mxu0 0.0
    %3563 = vmatprep.subr.mxu0 0.0
    %3564 = vmatpush1.msra.mxu0 0.0
    %3565 = vmatprep.subr.mxu0 0.0
    %3566 = vmatpush1.msra.mxu0 0.0
    %3567 = vmatprep.subr.mxu0 0.0
    %3568 = vmatpush1.msra.mxu0 0.0
    %3569 = vmatprep.subr.mxu0 0.0
    %3570 = vmatpush1.msra.mxu0 0.0
    %3571 = vmatprep.subr.mxu0 0.0
    %3572 = vmatpush1.msra.mxu0 0.0
    %3573 = vmatprep.subr.mxu0 0.0
    %3574 = vmatpush1.msra.mxu0 0.0
    %3575 = vmatprep.subr.mxu0 0.0
    %3576 = vmatpush1.msra.mxu0 0.0
    %3577 = vmatprep.subr.mxu0 0.0
    %3578 = vmatpush1.msra.mxu0 0.0
    %3579 = vmatprep.subr.mxu0 0.0
    %3580 = vmatpush1.msra.mxu0 0.0
    %3581 = vmatprep.subr.mxu0 0.0
    %3582 = vmatpush1.msra.mxu0 0.0
    %3583 = vmatprep.subr.mxu0 0.0
    %3584 = vmatpush1.msra.mxu0 0.0
    %3585 = vmatprep.subr.mxu0 0.0
    %3586 = vmatpush1.msra.mxu0 0.0
    %3587 = vmatprep.subr.mxu0 0.0
    %3588 = vmatpush1.msra.mxu0 0.0
    %3589 = vmatprep.subr.mxu0 0.0
    %3590 = vmatpush1.msra.mxu0 0.0
    %3591 = vmatprep.subr.mxu0 0.0
    %3592 = vmatpush1.msra.mxu0 0.0
    %3593 = vmatprep.subr.mxu0 0.0
    %3594 = vmatpush1.msra.mxu0 0.0
    %3595 = vmatprep.subr.mxu0 0.0
    %3596 = vmatpush1.msra.mxu0 0.0
    %3597 = vmatprep.subr.mxu0 0.0
    %3598 = vmatpush1.msra.mxu0 0.0
    %3599 = vmatprep.subr.mxu0 0.0
    %3600 = vmatpush1.msra.mxu0 0.0
    %3601 = vmatprep.subr.mxu0 0.0
    %3602 = vmatpush1.msra.mxu0 0.0
    %3603 = vmatprep.subr.mxu0 0.0
    %3604 = vmatpush1.msra.mxu0 0.0
    %3605 = vmatprep.subr.mxu0 0.0
    %3606 = vmatpush1.msra.mxu0 0.0
    %3607 = vmatprep.subr.mxu0 0.0
    %3608 = vmatpush1.msra.mxu0 0.0
    %3609 = vmatprep.subr.mxu0 0.0
    %3610 = vmatpush1.msra.mxu0 0.0
    %3611 = vmatprep.subr.mxu0 0.0
    %3612 = vmatpush1.msra.mxu0 0.0
    %3613 = vmatprep.subr.mxu0 0.0
    %3614 = vmatpush1.msra.mxu0 0.0
    %3615 = vmatprep.subr.mxu0 0.0
    %3616 = vmatpush1.msra.mxu0 0.0
    %3617 = vmatprep.subr.mxu0 0.0
    %3618 = vmatpush1.msra.mxu0 0.0
    %3619 = vmatprep.mubr.f32.mxu0 0.0
    %3620 = vmatmul.mubr.f32.gmra.mrb[0].mxu0 %v3553
    %v3621 = vpop.f32.mrb[0].mxu0
    %v3622 = vadd.f32 0.0, %v3621
    %v3623 = vpop.f32.mrb[0].mxu0
    %3624 = vdwg.mxu0
    %v3625 = vadd.f32 %v3545, %v3622
    %v3626 = vld [vmem:[#allocation3] sm:$0x1]
    %3628 = vset.pattern.permute.xlu0 0
    %3629 = vperm.xlu0 %3628, %v3626
    %v3630 = vpop.permute.xlu0 %3629
    %v3632 = vlaneseq
    %v3633 = vshrl.u32 %v3632, 7
    %v3634 = vsub.s32 0, %v3633
    %v3635 = vrot.slane %v3630, %v3634
    %v3636 = vadd.f32 %v3625, %v3635
    %v3637 = vmul.f32 %v3636, 0.2
    %v3638 = vmax.f32 %v3636, %v3637
    %v3639 = vld [vmem:[%s8] sm:$0xff]
    %v3640 = vld [vmem:[%s1686] sm:$0xff]
    %3645 = vrot.lane.b32.xlu0 %v3112, 127
    %v3646 = vpop.permute.xlu0 %3645
    %3647 = vrot.lane.b32.xlu0 %v3113, 127
    %v3648 = vpop.permute.xlu0 %3647
    %3649 = vrot.lane.b32.xlu0 %v3114, 127
    %v3650 = vpop.permute.xlu0 %3649
    %3651 = vrot.lane.b32.xlu0 %v3115, 127
    %v3652 = vpop.permute.xlu0 %3651
    %v3658 = vsel %vm109, %v3640, 0
    %3660 = vmatprep.subr.mxu0 0.0
    %3661 = vmatpush1.msra.mxu0 %v3646
    %3662 = vmatprep.subr.mxu0 0.0
    %3663 = vmatpush1.msra.mxu0 %v3648
    %3664 = vmatprep.subr.mxu0 0.0
    %3665 = vmatpush1.msra.mxu0 %v3650
    %3666 = vmatprep.subr.mxu0 0.0
    %3667 = vmatpush1.msra.mxu0 %v3652
    %3668 = vmatprep.subr.mxu0 0.0
    %3669 = vmatpush1.msra.mxu0 0.0
    %3670 = vmatprep.subr.mxu0 0.0
    %3671 = vmatpush1.msra.mxu0 0.0
    %3672 = vmatprep.subr.mxu0 0.0
    %3673 = vmatpush1.msra.mxu0 0.0
    %3674 = vmatprep.subr.mxu0 0.0
    %3675 = vmatpush1.msra.mxu0 0.0
    %3676 = vmatprep.subr.mxu0 0.0
    %3677 = vmatpush1.msra.mxu0 0.0
    %3678 = vmatprep.subr.mxu0 0.0
    %3679 = vmatpush1.msra.mxu0 0.0
    %3680 = vmatprep.subr.mxu0 0.0
    %3681 = vmatpush1.msra.mxu0 0.0
    %3682 = vmatprep.subr.mxu0 0.0
    %3683 = vmatpush1.msra.mxu0 0.0
    %3684 = vmatprep.subr.mxu0 0.0
    %3685 = vmatpush1.msra.mxu0 0.0
    %3686 = vmatprep.subr.mxu0 0.0
    %3687 = vmatpush1.msra.mxu0 0.0
    %3688 = vmatprep.subr.mxu0 0.0
    %3689 = vmatpush1.msra.mxu0 0.0
    %3690 = vmatprep.subr.mxu0 0.0
    %3691 = vmatpush1.msra.mxu0 0.0
    %3692 = vmatprep.subr.mxu0 0.0
    %3693 = vmatpush1.msra.mxu0 0.0
    %3694 = vmatprep.subr.mxu0 0.0
    %3695 = vmatpush1.msra.mxu0 0.0
    %3696 = vmatprep.subr.mxu0 0.0
    %3697 = vmatpush1.msra.mxu0 0.0
    %3698 = vmatprep.subr.mxu0 0.0
    %3699 = vmatpush1.msra.mxu0 0.0
    %3700 = vmatprep.subr.mxu0 0.0
    %3701 = vmatpush1.msra.mxu0 0.0
    %3702 = vmatprep.subr.mxu0 0.0
    %3703 = vmatpush1.msra.mxu0 0.0
    %3704 = vmatprep.subr.mxu0 0.0
    %3705 = vmatpush1.msra.mxu0 0.0
    %3706 = vmatprep.subr.mxu0 0.0
    %3707 = vmatpush1.msra.mxu0 0.0
    %3708 = vmatprep.subr.mxu0 0.0
    %3709 = vmatpush1.msra.mxu0 0.0
    %3710 = vmatprep.subr.mxu0 0.0
    %3711 = vmatpush1.msra.mxu0 0.0
    %3712 = vmatprep.subr.mxu0 0.0
    %3713 = vmatpush1.msra.mxu0 0.0
    %3714 = vmatprep.subr.mxu0 0.0
    %3715 = vmatpush1.msra.mxu0 0.0
    %3716 = vmatprep.subr.mxu0 0.0
    %3717 = vmatpush1.msra.mxu0 0.0
    %3718 = vmatprep.subr.mxu0 0.0
    %3719 = vmatpush1.msra.mxu0 0.0
    %3720 = vmatprep.subr.mxu0 0.0
    %3721 = vmatpush1.msra.mxu0 0.0
    %3722 = vmatprep.subr.mxu0 0.0
    %3723 = vmatpush1.msra.mxu0 0.0
    %3724 = vmatprep.mubr.f32.mxu0 0.0
    %3725 = vmatmul.mubr.f32.gmra.mrb[0].mxu0 %v3658
    %v3726 = vpop.f32.mrb[0].mxu0
    %v3727 = vadd.f32 0.0, %v3726
    %v3728 = vpop.f32.mrb[0].mxu0
    %3729 = vdwg.mxu0
    %v3731 = vsel %vm109, %v3639, 0
    %3733 = vmatprep.subr.mxu0 0.0
    %3734 = vmatpush1.msra.mxu0 %v3112
    %3735 = vmatprep.subr.mxu0 0.0
    %3736 = vmatpush1.msra.mxu0 %v3113
    %3737 = vmatprep.subr.mxu0 0.0
    %3738 = vmatpush1.msra.mxu0 %v3114
    %3739 = vmatprep.subr.mxu0 0.0
    %3740 = vmatpush1.msra.mxu0 %v3115
    %3741 = vmatprep.subr.mxu0 0.0
    %3742 = vmatpush1.msra.mxu0 0.0
    %3743 = vmatprep.subr.mxu0 0.0
    %3744 = vmatpush1.msra.mxu0 0.0
    %3745 = vmatprep.subr.mxu0 0.0
    %3746 = vmatpush1.msra.mxu0 0.0
    %3747 = vmatprep.subr.mxu0 0.0
    %3748 = vmatpush1.msra.mxu0 0.0
    %3749 = vmatprep.subr.mxu0 0.0
    %3750 = vmatpush1.msra.mxu0 0.0
    %3751 = vmatprep.subr.mxu0 0.0
    %3752 = vmatpush1.msra.mxu0 0.0
    %3753 = vmatprep.subr.mxu0 0.0
    %3754 = vmatpush1.msra.mxu0 0.0
    %3755 = vmatprep.subr.mxu0 0.0
    %3756 = vmatpush1.msra.mxu0 0.0
    %3757 = vmatprep.subr.mxu0 0.0
    %3758 = vmatpush1.msra.mxu0 0.0
    %3759 = vmatprep.subr.mxu0 0.0
    %3760 = vmatpush1.msra.mxu0 0.0
    %3761 = vmatprep.subr.mxu0 0.0
    %3762 = vmatpush1.msra.mxu0 0.0
    %3763 = vmatprep.subr.mxu0 0.0
    %3764 = vmatpush1.msra.mxu0 0.0
    %3765 = vmatprep.subr.mxu0 0.0
    %3766 = vmatpush1.msra.mxu0 0.0
    %3767 = vmatprep.subr.mxu0 0.0
    %3768 = vmatpush1.msra.mxu0 0.0
    %3769 = vmatprep.subr.mxu0 0.0
    %3770 = vmatpush1.msra.mxu0 0.0
    %3771 = vmatprep.subr.mxu0 0.0
    %3772 = vmatpush1.msra.mxu0 0.0
    %3773 = vmatprep.subr.mxu0 0.0
    %3774 = vmatpush1.msra.mxu0 0.0
    %3775 = vmatprep.subr.mxu0 0.0
    %3776 = vmatpush1.msra.mxu0 0.0
    %3777 = vmatprep.subr.mxu0 0.0
    %3778 = vmatpush1.msra.mxu0 0.0
    %3779 = vmatprep.subr.mxu0 0.0
    %3780 = vmatpush1.msra.mxu0 0.0
    %3781 = vmatprep.subr.mxu0 0.0
    %3782 = vmatpush1.msra.mxu0 0.0
    %3783 = vmatprep.subr.mxu0 0.0
    %3784 = vmatpush1.msra.mxu0 0.0
    %3785 = vmatprep.subr.mxu0 0.0
    %3786 = vmatpush1.msra.mxu0 0.0
    %3787 = vmatprep.subr.mxu0 0.0
    %3788 = vmatpush1.msra.mxu0 0.0
    %3789 = vmatprep.subr.mxu0 0.0
    %3790 = vmatpush1.msra.mxu0 0.0
    %3791 = vmatprep.subr.mxu0 0.0
    %3792 = vmatpush1.msra.mxu0 0.0
    %3793 = vmatprep.subr.mxu0 0.0
    %3794 = vmatpush1.msra.mxu0 0.0
    %3795 = vmatprep.subr.mxu0 0.0
    %3796 = vmatpush1.msra.mxu0 0.0
    %3797 = vmatprep.mubr.f32.mxu0 0.0
    %3798 = vmatmul.mubr.f32.gmra.mrb[0].mxu0 %v3731
    %v3799 = vpop.f32.mrb[0].mxu0
    %v3800 = vadd.f32 %v3727, %v3799
    %v3801 = vpop.f32.mrb[0].mxu0
    %3802 = vdwg.mxu0
    %v3803 = vld [vmem:[%s1850] sm:$0xff]
    %3804 = vrot.lane.b32.xlu0 %v3112, 126
    %v3805 = vpop.permute.xlu0 %3804
    %3806 = vrot.lane.b32.xlu0 %v3113, 126
    %v3807 = vpop.permute.xlu0 %3806
    %3808 = vrot.lane.b32.xlu0 %v3114, 126
    %v3809 = vpop.permute.xlu0 %3808
    %3810 = vrot.lane.b32.xlu0 %v3115, 126
    %v3811 = vpop.permute.xlu0 %3810
    %v3817 = vsel %vm109, %v3803, 0
    %3819 = vmatprep.subr.mxu0 0.0
    %3820 = vmatpush1.msra.mxu0 %v3805
    %3821 = vmatprep.subr.mxu0 0.0
    %3822 = vmatpush1.msra.mxu0 %v3807
    %3823 = vmatprep.subr.mxu0 0.0
    %3824 = vmatpush1.msra.mxu0 %v3809
    %3825 = vmatprep.subr.mxu0 0.0
    %3826 = vmatpush1.msra.mxu0 %v3811
    %3827 = vmatprep.subr.mxu0 0.0
    %3828 = vmatpush1.msra.mxu0 0.0
    %3829 = vmatprep.subr.mxu0 0.0
    %3830 = vmatpush1.msra.mxu0 0.0
    %3831 = vmatprep.subr.mxu0 0.0
    %3832 = vmatpush1.msra.mxu0 0.0
    %3833 = vmatprep.subr.mxu0 0.0
    %3834 = vmatpush1.msra.mxu0 0.0
    %3835 = vmatprep.subr.mxu0 0.0
    %3836 = vmatpush1.msra.mxu0 0.0
    %3837 = vmatprep.subr.mxu0 0.0
    %3838 = vmatpush1.msra.mxu0 0.0
    %3839 = vmatprep.subr.mxu0 0.0
    %3840 = vmatpush1.msra.mxu0 0.0
    %3841 = vmatprep.subr.mxu0 0.0
    %3842 = vmatpush1.msra.mxu0 0.0
    %3843 = vmatprep.subr.mxu0 0.0
    %3844 = vmatpush1.msra.mxu0 0.0
    %3845 = vmatprep.subr.mxu0 0.0
    %3846 = vmatpush1.msra.mxu0 0.0
    %3847 = vmatprep.subr.mxu0 0.0
    %3848 = vmatpush1.msra.mxu0 0.0
    %3849 = vmatprep.subr.mxu0 0.0
    %3850 = vmatpush1.msra.mxu0 0.0
    %3851 = vmatprep.subr.mxu0 0.0
    %3852 = vmatpush1.msra.mxu0 0.0
    %3853 = vmatprep.subr.mxu0 0.0
    %3854 = vmatpush1.msra.mxu0 0.0
    %3855 = vmatprep.subr.mxu0 0.0
    %3856 = vmatpush1.msra.mxu0 0.0
    %3857 = vmatprep.subr.mxu0 0.0
    %3858 = vmatpush1.msra.mxu0 0.0
    %3859 = vmatprep.subr.mxu0 0.0
    %3860 = vmatpush1.msra.mxu0 0.0
    %3861 = vmatprep.subr.mxu0 0.0
    %3862 = vmatpush1.msra.mxu0 0.0
    %3863 = vmatprep.subr.mxu0 0.0
    %3864 = vmatpush1.msra.mxu0 0.0
    %3865 = vmatprep.subr.mxu0 0.0
    %3866 = vmatpush1.msra.mxu0 0.0
    %3867 = vmatprep.subr.mxu0 0.0
    %3868 = vmatpush1.msra.mxu0 0.0
    %3869 = vmatprep.subr.mxu0 0.0
    %3870 = vmatpush1.msra.mxu0 0.0
    %3871 = vmatprep.subr.mxu0 0.0
    %3872 = vmatpush1.msra.mxu0 0.0
    %3873 = vmatprep.subr.mxu0 0.0
    %3874 = vmatpush1.msra.mxu0 0.0
    %3875 = vmatprep.subr.mxu0 0.0
    %3876 = vmatpush1.msra.mxu0 0.0
    %3877 = vmatprep.subr.mxu0 0.0
    %3878 = vmatpush1.msra.mxu0 0.0
    %3879 = vmatprep.subr.mxu0 0.0
    %3880 = vmatpush1.msra.mxu0 0.0
    %3881 = vmatprep.subr.mxu0 0.0
    %3882 = vmatpush1.msra.mxu0 0.0
    %3883 = vmatprep.mubr.f32.mxu0 0.0
    %3884 = vmatmul.mubr.f32.gmra.mrb[0].mxu0 %v3817
    %v3885 = vpop.f32.mrb[0].mxu0
    %v3886 = vadd.f32 0.0, %v3885
    %v3887 = vpop.f32.mrb[0].mxu0
    %3888 = vdwg.mxu0
    %v3889 = vadd.f32 %v3800, %v3886
    %v3890 = vld [vmem:[%s9] sm:$0xff]
    %3892 = vset.pattern.permute.xlu0 0
    %3893 = vperm.xlu0 %3892, %v3890
    %v3894 = vpop.permute.xlu0 %3893
    %v3896 = vadd.f32 %v3889, %v3894
    %v3897 = vmul.f32 %v3896, 0.2
    %v3898 = vmax.f32 %v3896, %v3897
    %v3899 = vld [vmem:[%s10] sm:$0x1]
    %v3900 = vld [vmem:[%s1948] sm:$0x1]
    %3902 = vrot.lane.b32.xlu0 %v3898, 127
    %v3903 = vpop.permute.xlu0 %3902
    %v3906 = vsel %vm223, %v3900, 0
    %3908 = vmatprep.subr.mxu0 0.0
    %3909 = vmatpush1.msra.mxu0 %v3903
    %3910 = vmatprep.subr.mxu0 0.0
    %3911 = vmatpush1.msra.mxu0 0.0
    %3912 = vmatprep.subr.mxu0 0.0
    %3913 = vmatpush1.msra.mxu0 0.0
    %3914 = vmatprep.subr.mxu0 0.0
    %3915 = vmatpush1.msra.mxu0 0.0
    %3916 = vmatprep.subr.mxu0 0.0
    %3917 = vmatpush1.msra.mxu0 0.0
    %3918 = vmatprep.subr.mxu0 0.0
    %3919 = vmatpush1.msra.mxu0 0.0
    %3920 = vmatprep.subr.mxu0 0.0
    %3921 = vmatpush1.msra.mxu0 0.0
    %3922 = vmatprep.subr.mxu0 0.0
    %3923 = vmatpush1.msra.mxu0 0.0
    %3924 = vmatprep.subr.mxu0 0.0
    %3925 = vmatpush1.msra.mxu0 0.0
    %3926 = vmatprep.subr.mxu0 0.0
    %3927 = vmatpush1.msra.mxu0 0.0
    %3928 = vmatprep.subr.mxu0 0.0
    %3929 = vmatpush1.msra.mxu0 0.0
    %3930 = vmatprep.subr.mxu0 0.0
    %3931 = vmatpush1.msra.mxu0 0.0
    %3932 = vmatprep.subr.mxu0 0.0
    %3933 = vmatpush1.msra.mxu0 0.0
    %3934 = vmatprep.subr.mxu0 0.0
    %3935 = vmatpush1.msra.mxu0 0.0
    %3936 = vmatprep.subr.mxu0 0.0
    %3937 = vmatpush1.msra.mxu0 0.0
    %3938 = vmatprep.subr.mxu0 0.0
    %3939 = vmatpush1.msra.mxu0 0.0
    %3940 = vmatprep.subr.mxu0 0.0
    %3941 = vmatpush1.msra.mxu0 0.0
    %3942 = vmatprep.subr.mxu0 0.0
    %3943 = vmatpush1.msra.mxu0 0.0
    %3944 = vmatprep.subr.mxu0 0.0
    %3945 = vmatpush1.msra.mxu0 0.0
    %3946 = vmatprep.subr.mxu0 0.0
    %3947 = vmatpush1.msra.mxu0 0.0
    %3948 = vmatprep.subr.mxu0 0.0
    %3949 = vmatpush1.msra.mxu0 0.0
    %3950 = vmatprep.subr.mxu0 0.0
    %3951 = vmatpush1.msra.mxu0 0.0
    %3952 = vmatprep.subr.mxu0 0.0
    %3953 = vmatpush1.msra.mxu0 0.0
    %3954 = vmatprep.subr.mxu0 0.0
    %3955 = vmatpush1.msra.mxu0 0.0
    %3956 = vmatprep.subr.mxu0 0.0
    %3957 = vmatpush1.msra.mxu0 0.0
    %3958 = vmatprep.subr.mxu0 0.0
    %3959 = vmatpush1.msra.mxu0 0.0
    %3960 = vmatprep.subr.mxu0 0.0
    %3961 = vmatpush1.msra.mxu0 0.0
    %3962 = vmatprep.subr.mxu0 0.0
    %3963 = vmatpush1.msra.mxu0 0.0
    %3964 = vmatprep.subr.mxu0 0.0
    %3965 = vmatpush1.msra.mxu0 0.0
    %3966 = vmatprep.subr.mxu0 0.0
    %3967 = vmatpush1.msra.mxu0 0.0
    %3968 = vmatprep.subr.mxu0 0.0
    %3969 = vmatpush1.msra.mxu0 0.0
    %3970 = vmatprep.subr.mxu0 0.0
    %3971 = vmatpush1.msra.mxu0 0.0
    %3972 = vmatprep.mubr.f32.mxu0 0.0
    %3973 = vmatmul.mubr.f32.gmra.mrb[0].mxu0 %v3906
    %v3974 = vpop.f32.mrb[0].mxu0
    %v3975 = vadd.f32 0.0, %v3974
    %v3976 = vpop.f32.mrb[0].mxu0
    %3977 = vdwg.mxu0
    %v3979 = vsel %vm223, %v3899, 0
    %3981 = vmatprep.subr.mxu0 0.0
    %3982 = vmatpush1.msra.mxu0 %v3898
    %3983 = vmatprep.subr.mxu0 0.0
    %3984 = vmatpush1.msra.mxu0 0.0
    %3985 = vmatprep.subr.mxu0 0.0
    %3986 = vmatpush1.msra.mxu0 0.0
    %3987 = vmatprep.subr.mxu0 0.0
    %3988 = vmatpush1.msra.mxu0 0.0
    %3989 = vmatprep.subr.mxu0 0.0
    %3990 = vmatpush1.msra.mxu0 0.0
    %3991 = vmatprep.subr.mxu0 0.0
    %3992 = vmatpush1.msra.mxu0 0.0
    %3993 = vmatprep.subr.mxu0 0.0
    %3994 = vmatpush1.msra.mxu0 0.0
    %3995 = vmatprep.subr.mxu0 0.0
    %3996 = vmatpush1.msra.mxu0 0.0
    %3997 = vmatprep.subr.mxu0 0.0
    %3998 = vmatpush1.msra.mxu0 0.0
    %3999 = vmatprep.subr.mxu0 0.0
    %4000 = vmatpush1.msra.mxu0 0.0
    %4001 = vmatprep.subr.mxu0 0.0
    %4002 = vmatpush1.msra.mxu0 0.0
    %4003 = vmatprep.subr.mxu0 0.0
    %4004 = vmatpush1.msra.mxu0 0.0
    %4005 = vmatprep.subr.mxu0 0.0
    %4006 = vmatpush1.msra.mxu0 0.0
    %4007 = vmatprep.subr.mxu0 0.0
    %4008 = vmatpush1.msra.mxu0 0.0
    %4009 = vmatprep.subr.mxu0 0.0
    %4010 = vmatpush1.msra.mxu0 0.0
    %4011 = vmatprep.subr.mxu0 0.0
    %4012 = vmatpush1.msra.mxu0 0.0
    %4013 = vmatprep.subr.mxu0 0.0
    %4014 = vmatpush1.msra.mxu0 0.0
    %4015 = vmatprep.subr.mxu0 0.0
    %4016 = vmatpush1.msra.mxu0 0.0
    %4017 = vmatprep.subr.mxu0 0.0
    %4018 = vmatpush1.msra.mxu0 0.0
    %4019 = vmatprep.subr.mxu0 0.0
    %4020 = vmatpush1.msra.mxu0 0.0
    %4021 = vmatprep.subr.mxu0 0.0
    %4022 = vmatpush1.msra.mxu0 0.0
    %4023 = vmatprep.subr.mxu0 0.0
    %4024 = vmatpush1.msra.mxu0 0.0
    %4025 = vmatprep.subr.mxu0 0.0
    %4026 = vmatpush1.msra.mxu0 0.0
    %4027 = vmatprep.subr.mxu0 0.0
    %4028 = vmatpush1.msra.mxu0 0.0
    %4029 = vmatprep.subr.mxu0 0.0
    %4030 = vmatpush1.msra.mxu0 0.0
    %4031 = vmatprep.subr.mxu0 0.0
    %4032 = vmatpush1.msra.mxu0 0.0
    %4033 = vmatprep.subr.mxu0 0.0
    %4034 = vmatpush1.msra.mxu0 0.0
    %4035 = vmatprep.subr.mxu0 0.0
    %4036 = vmatpush1.msra.mxu0 0.0
    %4037 = vmatprep.subr.mxu0 0.0
    %4038 = vmatpush1.msra.mxu0 0.0
    %4039 = vmatprep.subr.mxu0 0.0
    %4040 = vmatpush1.msra.mxu0 0.0
    %4041 = vmatprep.subr.mxu0 0.0
    %4042 = vmatpush1.msra.mxu0 0.0
    %4043 = vmatprep.subr.mxu0 0.0
    %4044 = vmatpush1.msra.mxu0 0.0
    %4045 = vmatprep.mubr.f32.mxu0 0.0
    %4046 = vmatmul.mubr.f32.gmra.mrb[0].mxu0 %v3979
    %v4047 = vpop.f32.mrb[0].mxu0
    %v4048 = vadd.f32 %v3975, %v4047
    %v4049 = vpop.f32.mrb[0].mxu0
    %4050 = vdwg.mxu0
    %v4051 = vld [vmem:[%s2100] sm:$0x1]
    %4052 = vrot.lane.b32.xlu0 %v3898, 126
    %v4053 = vpop.permute.xlu0 %4052
    %v4056 = vsel %vm223, %v4051, 0
    %4058 = vmatprep.subr.mxu0 0.0
    %4059 = vmatpush1.msra.mxu0 %v4053
    %4060 = vmatprep.subr.mxu0 0.0
    %4061 = vmatpush1.msra.mxu0 0.0
    %4062 = vmatprep.subr.mxu0 0.0
    %4063 = vmatpush1.msra.mxu0 0.0
    %4064 = vmatprep.subr.mxu0 0.0
    %4065 = vmatpush1.msra.mxu0 0.0
    %4066 = vmatprep.subr.mxu0 0.0
    %4067 = vmatpush1.msra.mxu0 0.0
    %4068 = vmatprep.subr.mxu0 0.0
    %4069 = vmatpush1.msra.mxu0 0.0
    %4070 = vmatprep.subr.mxu0 0.0
    %4071 = vmatpush1.msra.mxu0 0.0
    %4072 = vmatprep.subr.mxu0 0.0
    %4073 = vmatpush1.msra.mxu0 0.0
    %4074 = vmatprep.subr.mxu0 0.0
    %4075 = vmatpush1.msra.mxu0 0.0
    %4076 = vmatprep.subr.mxu0 0.0
    %4077 = vmatpush1.msra.mxu0 0.0
    %4078 = vmatprep.subr.mxu0 0.0
    %4079 = vmatpush1.msra.mxu0 0.0
    %4080 = vmatprep.subr.mxu0 0.0
    %4081 = vmatpush1.msra.mxu0 0.0
    %4082 = vmatprep.subr.mxu0 0.0
    %4083 = vmatpush1.msra.mxu0 0.0
    %4084 = vmatprep.subr.mxu0 0.0
    %4085 = vmatpush1.msra.mxu0 0.0
    %4086 = vmatprep.subr.mxu0 0.0
    %4087 = vmatpush1.msra.mxu0 0.0
    %4088 = vmatprep.subr.mxu0 0.0
    %4089 = vmatpush1.msra.mxu0 0.0
    %4090 = vmatprep.subr.mxu0 0.0
    %4091 = vmatpush1.msra.mxu0 0.0
    %4092 = vmatprep.subr.mxu0 0.0
    %4093 = vmatpush1.msra.mxu0 0.0
    %4094 = vmatprep.subr.mxu0 0.0
    %4095 = vmatpush1.msra.mxu0 0.0
    %4096 = vmatprep.subr.mxu0 0.0
    %4097 = vmatpush1.msra.mxu0 0.0
    %4098 = vmatprep.subr.mxu0 0.0
    %4099 = vmatpush1.msra.mxu0 0.0
    %4100 = vmatprep.subr.mxu0 0.0
    %4101 = vmatpush1.msra.mxu0 0.0
    %4102 = vmatprep.subr.mxu0 0.0
    %4103 = vmatpush1.msra.mxu0 0.0
    %4104 = vmatprep.subr.mxu0 0.0
    %4105 = vmatpush1.msra.mxu0 0.0
    %4106 = vmatprep.subr.mxu0 0.0
    %4107 = vmatpush1.msra.mxu0 0.0
    %4108 = vmatprep.subr.mxu0 0.0
    %4109 = vmatpush1.msra.mxu0 0.0
    %4110 = vmatprep.subr.mxu0 0.0
    %4111 = vmatpush1.msra.mxu0 0.0
    %4112 = vmatprep.subr.mxu0 0.0
    %4113 = vmatpush1.msra.mxu0 0.0
    %4114 = vmatprep.subr.mxu0 0.0
    %4115 = vmatpush1.msra.mxu0 0.0
    %4116 = vmatprep.subr.mxu0 0.0
    %4117 = vmatpush1.msra.mxu0 0.0
    %4118 = vmatprep.subr.mxu0 0.0
    %4119 = vmatpush1.msra.mxu0 0.0
    %4120 = vmatprep.subr.mxu0 0.0
    %4121 = vmatpush1.msra.mxu0 0.0
    %4122 = vmatprep.mubr.f32.mxu0 0.0
    %4123 = vmatmul.mubr.f32.gmra.mrb[0].mxu0 %v4056
    %v4124 = vpop.f32.mrb[0].mxu0
    %v4125 = vadd.f32 0.0, %v4124
    %v4126 = vpop.f32.mrb[0].mxu0
    %4127 = vdwg.mxu0
    %v4128 = vadd.f32 %v4048, %v4125
    %v4129 = vld [vmem:[#allocation2] sm:$0x1]
    %4131 = vset.pattern.permute.xlu0 0
    %4132 = vperm.xlu0 %4131, %v4129
    %v4133 = vpop.permute.xlu0 %4132
    %v4135 = vlaneseq
    %v4136 = vshrl.u32 %v4135, 7
    %v4137 = vsub.s32 0, %v4136
    %v4138 = vrot.slane %v4133, %v4137
    %v4139 = vadd.f32 %v4128, %v4138
    %v4140 = vmul.f32 %v4139, 0.2
    %v4141 = vmax.f32 %v4139, %v4140
    %4142 = vst.msk [vmem:[#allocation4 + $0x1] sm:$0x1] %vm2192, %v4141
    %4143 = vst.msk [vmem:[#allocation6 + $0x1] sm:$0x1] %vm2194, %v3638
    %s4144 = scalar_lea.vmem [#allocation8], 4
    %4145 = vst.msk [vmem:[%s4144] sm:$0xf] %vm2196, %v2450
    %s4146 = scalar_lea.vmem [#allocation9], 8
    %4147 = vst.msk [vmem:[%s4146] sm:$0xff] %vm2198, %v2765
    %s4148 = scalar_lea.vmem %s22, 32
    %4149 = vst.msk [vmem:[%s4148] sm:$0xff] %vm1173, %v3112
    %4150 = vst.msk [vmem:[%s4148 + $0x8] sm:$0xff] %vm1173, %v3113
    %4151 = vst.msk [vmem:[%s4148 + $0x10] sm:$0xff] %vm1173, %v3114
    %4152 = vst.msk [vmem:[%s4148 + $0x18] sm:$0xff] %vm1173, %v3115
    %s4153 = scalar_lea.vmem [#allocation11], 8
    %4154 = vst.msk [vmem:[%s4153] sm:$0xff] %vm2204, %v3395
    %s4155 = scalar_lea.vmem [#allocation12], 1
    %4156 = vst.msk [vmem:[%s4155] sm:$0x1] %vm2194, %v3638
    %s4157 = scalar_lea.vmem [#allocation14], 8
    %4158 = vst.msk [vmem:[%s4157] sm:$0xff] %vm2207, %v3898
    %s4159 = scalar_lea.vmem [#allocation15], 1
    %4160 = vst.msk [vmem:[%s4159] sm:$0x1] %vm2192, %v4141
    // Predicated region
    $region74: #{tpu_custom_call.1} parent=1 // pred_check
      _
    $region75: #{tpu_custom_call.1} parent=1 // pred_check_branch
      %4162 = sbr.rel (0) target = $region77
    $region76: #{tpu_custom_call.1} parent=1 // pred_region
      %s4164 = ssub.s32 32, 32
      %4165 = vsyncadd [#allocation5], %s4164
      %s4167 = sshll.u32 [#allocation4], 4
      %s4168 = int_to_ptr.vmem [resolvable:$true] %s4167
      %4170 = dma.vmem_to_hbm [thread:$0]  %s4168, 32, %s18, [#allocation5]
    $region77: #{tpu_custom_call.1} parent=1 // pred_fallthru
      _
    // Predicated region
    $region78: #{tpu_custom_call.1} parent=1 // pred_check
      _
    $region79: #{tpu_custom_call.1} parent=1 // pred_check_branch
      %4172 = sbr.rel (0) target = $region81
    $region80: #{tpu_custom_call.1} parent=1 // pred_region
      %s4174 = ssub.s32 32, 32
      %4175 = vsyncadd [#allocation7], %s4174
      %s4177 = sshll.u32 [#allocation6], 4
      %s4178 = int_to_ptr.vmem [resolvable:$true] %s4177
      %4180 = dma.vmem_to_hbm [thread:$0]  %s4178, 32, %s19, [#allocation7]
    $region81: #{tpu_custom_call.1} parent=1 // pred_fallthru
      _
    // Predicated region
    $region82: #{tpu_custom_call.1} parent=1 // pred_check
      _
    $region83: #{tpu_custom_call.1} parent=1 // pred_check_branch
      %4182 = sbr.rel (0) target = $region85
    $region84: #{tpu_custom_call.1} parent=1 // pred_region
      %s4184 = ssub.s32 128, 128
      %4185 = vsyncadd [#allocation7], %s4184
      %s4186 = sshll.u32 [#allocation8], 4
      %s4187 = int_to_ptr.vmem [resolvable:$true] %s4186
      %4192 = dma.vmem_to_hbm [thread:$0]  %s4187, 128, %s20, [#allocation7], 64, 64, 4
    $region85: #{tpu_custom_call.1} parent=1 // pred_fallthru
      _
    // Predicated region
    $region86: #{tpu_custom_call.1} parent=1 // pred_check
      _
    $region87: #{tpu_custom_call.1} parent=1 // pred_check_branch
      %4194 = sbr.rel (0) target = $region89
    $region88: #{tpu_custom_call.1} parent=1 // pred_region
      %s4196 = ssub.s32 256, 256
      %4197 = vsyncadd [#allocation10], %s4196
      %s4198 = sshll.u32 [#allocation9], 4
      %s4199 = int_to_ptr.vmem [resolvable:$true] %s4198
      %4204 = dma.vmem_to_hbm [thread:$0]  %s4199, 256, %s21, [#allocation10], 128, 128, 8
    $region89: #{tpu_custom_call.1} parent=1 // pred_fallthru
      _
    // Predicated region
    $region90: #{tpu_custom_call.1} parent=1 // pred_check
      _
    $region91: #{tpu_custom_call.1} parent=1 // pred_check_branch
      %4206 = sbr.rel (0) target = $region93
    $region92: #{tpu_custom_call.1} parent=1 // pred_region
      _
    $region93: #{tpu_custom_call.1} parent=1 // pred_fallthru
      _
    // Predicated region
    $region94: #{tpu_custom_call.1} parent=1 // pred_check
      _
    $region95: #{tpu_custom_call.1} parent=1 // pred_check_branch
      %4208 = sbr.rel (0) target = $region97
    $region96: #{tpu_custom_call.1} parent=1 // pred_region
      %s4210 = ssub.s32 256, 256
      %4211 = vsyncadd [#allocation10], %s4210
      %s4212 = sshll.u32 [#allocation11], 4
      %s4213 = int_to_ptr.vmem [resolvable:$true] %s4212
      %4218 = dma.vmem_to_hbm [thread:$0]  %s4213, 256, %s23, [#allocation10], 128, 128, 8
    $region97: #{tpu_custom_call.1} parent=1 // pred_fallthru
      _
    // Predicated region
    $region98: #{tpu_custom_call.1} parent=1 // pred_check
      _
    $region99: #{tpu_custom_call.1} parent=1 // pred_check_branch
      %4220 = sbr.rel (0) target = $region101
    $region100: #{tpu_custom_call.1} parent=1 // pred_region
      %s4222 = ssub.s32 32, 32
      %4223 = vsyncadd [#allocation13], %s4222
      %s4224 = sshll.u32 [#allocation12], 4
      %s4225 = int_to_ptr.vmem [resolvable:$true] %s4224
      %4230 = dma.vmem_to_hbm [thread:$0]  %s4225, 32, %s24, [#allocation13], 16, 16, 1
    $region101: #{tpu_custom_call.1} parent=1 // pred_fallthru
      _
    // Predicated region
    $region102: #{tpu_custom_call.1} parent=1 // pred_check
      _
    $region103: #{tpu_custom_call.1} parent=1 // pred_check_branch
      %4232 = sbr.rel (0) target = $region105
    $region104: #{tpu_custom_call.1} parent=1 // pred_region
      %s4234 = ssub.s32 256, 256
      %4235 = vsyncadd [#allocation13], %s4234
      %s4236 = sshll.u32 [#allocation14], 4
      %s4237 = int_to_ptr.vmem [resolvable:$true] %s4236
      %4242 = dma.vmem_to_hbm [thread:$0]  %s4237, 256, %s25, [#allocation13], 128, 128, 8
    $region105: #{tpu_custom_call.1} parent=1 // pred_fallthru
      _
    // Predicated region
    $region106: #{tpu_custom_call.1} parent=1 // pred_check
      _
    $region107: #{tpu_custom_call.1} parent=1 // pred_check_branch
      %4244 = sbr.rel (0) target = $region109
    $region108: #{tpu_custom_call.1} parent=1 // pred_region
      %s4246 = ssub.s32 32, 32
      %4247 = vsyncadd [#allocation16], %s4246
      %s4248 = sshll.u32 [#allocation15], 4
      %s4249 = int_to_ptr.vmem [resolvable:$true] %s4248
      %4254 = dma.vmem_to_hbm [thread:$0]  %s4249, 32, %s26, [#allocation16], 16, 16, 1
    $region109: #{tpu_custom_call.1} parent=1 // pred_fallthru
      _
    // Predicated region
    $region110: #{tpu_custom_call.1} parent=1 // pred_check
      _
    $region111: #{tpu_custom_call.1} parent=1 // pred_check_branch
      %4256 = sbr.rel (0) target = $region113
    $region112: #{tpu_custom_call.1} parent=1 // pred_region
      %4257 = dma.done [#allocation5], 32
    $region113: #{tpu_custom_call.1} parent=1 // pred_fallthru
      _
    // Predicated region
    $region114: #{tpu_custom_call.1} parent=1 // pred_check
      _
    $region115: #{tpu_custom_call.1} parent=1 // pred_check_branch
      %4259 = sbr.rel (0) target = $region117
    $region116: #{tpu_custom_call.1} parent=1 // pred_region
      %4260 = dma.done [#allocation7], 32
    $region117: #{tpu_custom_call.1} parent=1 // pred_fallthru
      _
    // Predicated region
    $region118: #{tpu_custom_call.1} parent=1 // pred_check
      _
    $region119: #{tpu_custom_call.1} parent=1 // pred_check_branch
      %4262 = sbr.rel (0) target = $region121
    $region120: #{tpu_custom_call.1} parent=1 // pred_region
      %4263 = dma.done [#allocation7], 128
    $region121: #{tpu_custom_call.1} parent=1 // pred_fallthru
      _
    // Predicated region
    $region122: #{tpu_custom_call.1} parent=1 // pred_check
      _
    $region123: #{tpu_custom_call.1} parent=1 // pred_check_branch
      %4265 = sbr.rel (0) target = $region125
    $region124: #{tpu_custom_call.1} parent=1 // pred_region
      %4266 = dma.done [#allocation10], 256
    $region125: #{tpu_custom_call.1} parent=1 // pred_fallthru
      _
    // Predicated region
    $region126: #{tpu_custom_call.1} parent=1 // pred_check
      _
    $region127: #{tpu_custom_call.1} parent=1 // pred_check_branch
      %4268 = sbr.rel (0) target = $region129
    $region128: #{tpu_custom_call.1} parent=1 // pred_region
      _
    $region129: #{tpu_custom_call.1} parent=1 // pred_fallthru
      _
    // Predicated region
    $region130: #{tpu_custom_call.1} parent=1 // pred_check
      _
    $region131: #{tpu_custom_call.1} parent=1 // pred_check_branch
      %4270 = sbr.rel (0) target = $region133
    $region132: #{tpu_custom_call.1} parent=1 // pred_region
      %4271 = dma.done [#allocation10], 256
    $region133: #{tpu_custom_call.1} parent=1 // pred_fallthru
      _
    // Predicated region
    $region134: #{tpu_custom_call.1} parent=1 // pred_check
      _
    $region135: #{tpu_custom_call.1} parent=1 // pred_check_branch
      %4273 = sbr.rel (0) target = $region137
    $region136: #{tpu_custom_call.1} parent=1 // pred_region
      %4274 = dma.done [#allocation13], 32
    $region137: #{tpu_custom_call.1} parent=1 // pred_fallthru
      _
    // Predicated region
    $region138: #{tpu_custom_call.1} parent=1 // pred_check
      _
    $region139: #{tpu_custom_call.1} parent=1 // pred_check_branch
      %4276 = sbr.rel (0) target = $region141
    $region140: #{tpu_custom_call.1} parent=1 // pred_region
      %4277 = dma.done [#allocation13], 256
    $region141: #{tpu_custom_call.1} parent=1 // pred_fallthru
      _
    // Predicated region
    $region142: #{tpu_custom_call.1} parent=1 // pred_check
      _
    $region143: #{tpu_custom_call.1} parent=1 // pred_check_branch
      %4279 = sbr.rel (0) target = $region145
    $region144: #{tpu_custom_call.1} parent=1 // pred_region
      %4280 = dma.done [#allocation16], 32
    $region145: #{tpu_custom_call.1} parent=1 // pred_fallthru
      _
    %4281 = vsyncpa [#allocation5], 1
    %4282 = vsyncpa [#allocation7], 1
    %4283 = vsyncpa [#allocation10], 1
    %4284 = vsyncpa [#allocation13], 1
    %4285 = vsyncpa [#allocation16], 1

</llo_original>
